<compile_context>
chip_gen: v6e
topology: v6e:2x2x1
jax: 0.10.0
libtpu: 0.0.40
codegen_flags: <defaults>
</compile_context>

<pallas_src>
import functools

import jax
import jax.numpy as jnp
from jax import lax
from jax.experimental import pallas as pl
from jax.experimental.pallas import tpu as pltpu

LN_EPS = 1e-5  # torch.nn.LayerNorm default eps


# ----------------------------- hardware-aware knobs ------------------------- #

def _vmem_limit_bytes():
    """Generation-aware scoped-VMEM budget (leave headroom for Mosaic scratch)."""
    try:
        cap = getattr(pltpu.get_tpu_info(), "vmem_capacity_bytes", 64 * 1024 * 1024)
    except Exception:
        cap = 64 * 1024 * 1024
    return min(int(cap * 0.625), 96 * 1024 * 1024)


def _row_tile(n, vmem_limit):
    """Token-dimension tile. Full array when small (keeps (8,128) rule trivially)."""
    if n <= 256:
        return n
    if vmem_limit >= (64 << 20) and n % 512 == 0:
        return 512
    for cand in (256, 128):
        if n % cand == 0:
            return cand
    return n


def _head_group(num_heads, head_dim):
    """Heads per attention grid step so the output store is >=128 lanes (or full D)."""
    if head_dim % 128 == 0:
        return 1
    if 128 % head_dim == 0:
        hpg = 128 // head_dim
        if num_heads % hpg == 0:
            return hpg
    return num_heads  # fall back to all heads (full D) per step


# ----------------------------- in-kernel helpers ---------------------------- #

def _ln_normalize(x):
    mean = jnp.mean(x, axis=-1, keepdims=True)
    var = jnp.mean((x - mean) ** 2, axis=-1, keepdims=True)
    return (x - mean) * lax.rsqrt(var + LN_EPS)


def _gelu_exact(x):
    # nn.GELU() default is the exact erf formulation.
    return 0.5 * x * (1.0 + lax.erf(x * 0.7071067811865475))


# ----------------------------- kernels -------------------------------------- #

def grn_qkv_kernel(st_ref,
                   wq_ref, bq_ref, gq_ref, baq_ref,
                   wk_ref, bk_ref, gk_ref, bak_ref,
                   wv_ref, bv_ref, gv_ref, bav_ref,
                   q_ref, k_ref, v_ref,
                   accq_ref, acck_ref, accv_ref, accn_ref,
                   *, n_layers):
    """Fused GRNv3 for q/k/v with L on the grid as a reduction axis.

    st_ref : (tn, D) bf16 block of layer l (L is the squeezed grid axis 1)
    w*_ref : (D, D) bf16, pre-transposed (in, out); b/g/ba: (1, D) f32
    outputs: (tn, D) bf16; accumulators: (tn, D) f32 VMEM scratch.
    """
    l = pl.program_id(1)

    @pl.when(l == 0)
    def _():
        accq_ref[...] = jnp.zeros_like(accq_ref)
        acck_ref[...] = jnp.zeros_like(acck_ref)
        accv_ref[...] = jnp.zeros_like(accv_ref)
        accn_ref[...] = jnp.zeros_like(accn_ref)

    s_bf = st_ref[...]                       # (tn, D) bf16, read once, shared q/k/v
    s = s_bf.astype(jnp.float32)
    accn_ref[...] += _ln_normalize(s)        # gamma/beta applied once at finalize
    accq_ref[...] += jnp.maximum(
        jnp.dot(s_bf, wq_ref[...], preferred_element_type=jnp.float32) + bq_ref[...], 0.0)
    acck_ref[...] += jnp.maximum(
        jnp.dot(s_bf, wk_ref[...], preferred_element_type=jnp.float32) + bk_ref[...], 0.0)
    accv_ref[...] += jnp.maximum(
        jnp.dot(s_bf, wv_ref[...], preferred_element_type=jnp.float32) + bv_ref[...], 0.0)

    @pl.when(l == n_layers - 1)
    def _():
        nrm = accn_ref[...]
        lf = float(n_layers)
        q_ref[...] = (accq_ref[...] + nrm * gq_ref[...] + lf * baq_ref[...]).astype(q_ref.dtype)
        k_ref[...] = (acck_ref[...] + nrm * gk_ref[...] + lf * bak_ref[...]).astype(k_ref.dtype)
        v_ref[...] = (accv_ref[...] + nrm * gv_ref[...] + lf * bav_ref[...]).astype(v_ref.dtype)


def attn_kernel(q_ref, k_ref, v_ref, o_ref, *, heads_per_step, scale):
    """One (batch row, head group) per grid step; blocks are (1, S, heads*Dh) bf16."""
    cols = q_ref.shape[-1]
    dh = cols // heads_per_step
    outs = []
    for h in range(heads_per_step):          # static unrolled
        c0, c1 = h * dh, (h + 1) * dh
        qh = q_ref[0, :, c0:c1]
        kh = k_ref[0, :, c0:c1]
        vh = v_ref[0, :, c0:c1]
        s = lax.dot_general(qh, kh, (((1,), (1,)), ((), ())),
                            preferred_element_type=jnp.float32) * scale
        m = jnp.max(s, axis=-1, keepdims=True)
        e = jnp.exp(s - m)
        inv = pl.reciprocal(jnp.sum(e, axis=-1, keepdims=True), approx=True)
        p = (e * inv).astype(jnp.bfloat16)
        outs.append(jnp.dot(p, vh, preferred_element_type=jnp.float32))
    res = outs[0] if heads_per_step == 1 else jnp.concatenate(outs, axis=-1)
    o_ref[0] = res.astype(o_ref.dtype)       # single lane-dense store per step
    # TODO(synk): for long sequences, tile the K/V axis with an online-softmax
    # (flash) loop instead of materializing the full (S, S) score matrix.


def proj_ffn_kernel(x_ref, a_ref,
                    wo_ref, bo_ref, go_ref, bno_ref,
                    w1_ref, b1_ref, w2_ref, b2_ref, gf_ref, bnf_ref,
                    out_ref, *, ffn_chunk):
    """out = h1 + LN(FFN(h1)),  h1 = x + LN(a @ Wo + bo); FFN hidden dim K-tiled."""
    x = x_ref[...]                                        # (tn, D) f32
    a = a_ref[...]                                        # (tn, D) bf16
    proj = jnp.dot(a, wo_ref[...], preferred_element_type=jnp.float32) + bo_ref[...]
    h1 = x + _ln_normalize(proj) * go_ref[...] + bno_ref[...]
    h1_bf = h1.astype(jnp.bfloat16)

    dm = w1_ref.shape[1]
    acc = jnp.zeros(out_ref.shape, jnp.float32)
    for c in range(0, dm, ffn_chunk):                     # static unrolled
        hid = _gelu_exact(
            jnp.dot(h1_bf, w1_ref[:, c:c + ffn_chunk],
                    preferred_element_type=jnp.float32) + b1_ref[:, c:c + ffn_chunk])
        acc += jnp.dot(hid.astype(jnp.bfloat16), w2_ref[c:c + ffn_chunk, :],
                       preferred_element_type=jnp.float32)
    f = acc + b2_ref[...]
    out_ref[...] = h1 + _ln_normalize(f) * gf_ref[...] + bnf_ref[...]


# ----------------------------- wrappers -------------------------------------- #

def grn_qkv(stacked_buf, n_layers, pp, tn, vmem_limit):
    """stacked_buf: (max_L, N, D) bf16 layer-output buffer (first n_layers rows valid)."""
    _, N, D = stacked_buf.shape
    grid = (pl.cdiv(N, tn), n_layers)

    st_spec = pl.BlockSpec((None, tn, D), lambda i, l: (l, i, 0))
    w_spec = pl.BlockSpec((D, D), lambda i, l: (0, 0), pipeline_mode=pl.Buffered(1))
    b_spec = pl.BlockSpec((1, D), lambda i, l: (0, 0), pipeline_mode=pl.Buffered(1))
    row_out = pl.BlockSpec((tn, D), lambda i, l: (i, 0))

    args = [stacked_buf]
    in_specs = [st_spec]
    for name in ("q", "k", "v"):
        args += [pp[f"grn_{name}_w"], pp[f"grn_{name}_b"],
                 pp[f"grn_{name}_g"], pp[f"grn_{name}_be"]]
        in_specs += [w_spec, b_spec, b_spec, b_spec]

    q, k, v = pl.pallas_call(
        functools.partial(grn_qkv_kernel, n_layers=n_layers),
        out_shape=(jax.ShapeDtypeStruct((N, D), jnp.bfloat16),) * 3,
        grid=grid,
        in_specs=in_specs,
        out_specs=(row_out, row_out, row_out),
        scratch_shapes=[pltpu.VMEM((tn, D), jnp.float32)] * 4,
        compiler_params=pltpu.CompilerParams(
            dimension_semantics=("parallel", "arbitrary"),
            vmem_limit_bytes=vmem_limit),
    )(*args)
    return q, k, v


def attention(q, k, v, num_heads, vmem_limit):
    """q/k/v/out are (B, S, D) bf16; grid over (batch, head-group)."""
    B, S, D = q.shape
    dh = D // num_heads
    scale = dh ** (-0.5)
    hpg = _head_group(num_heads, dh)
    gc = hpg * dh
    spec = pl.BlockSpec((1, S, gc), lambda b, g: (b, 0, g))
    return pl.pallas_call(
        functools.partial(attn_kernel, heads_per_step=hpg, scale=scale),
        out_shape=jax.ShapeDtypeStruct((B, S, D), jnp.bfloat16),
        grid=(B, num_heads // hpg),
        in_specs=[spec, spec, spec],
        out_specs=spec,
        compiler_params=pltpu.CompilerParams(
            dimension_semantics=("parallel", "parallel"),
            vmem_limit_bytes=vmem_limit),
    )(q, k, v)


def proj_ffn(x_flat, a_flat, pp, tn, vmem_limit):
    """Fused: attn-out projection + LN + residual + FFN + LN + residual."""
    N, D = x_flat.shape
    Dm = pp["ffn_w1"].shape[1]
    grid = (pl.cdiv(N, tn),)
    row = pl.BlockSpec((tn, D), lambda i: (i, 0))

    def const(shape):
        return pl.BlockSpec(shape, lambda i: (0, 0), pipeline_mode=pl.Buffered(1))

    ffn_chunk = 1024 if (Dm > 1024 and Dm % 1024 == 0) else Dm

    return pl.pallas_call(
        functools.partial(proj_ffn_kernel, ffn_chunk=ffn_chunk),
        out_shape=jax.ShapeDtypeStruct((N, D), jnp.float32),
        grid=grid,
        in_specs=[row, row,
                  const((D, D)), const((1, D)), const((1, D)), const((1, D)),
                  const((D, Dm)), const((1, Dm)),
                  const((Dm, D)), const((1, D)), const((1, D)), const((1, D))],
        out_specs=row,
        compiler_params=pltpu.CompilerParams(
            dimension_semantics=("parallel",),
            vmem_limit_bytes=vmem_limit),
    )(x_flat, a_flat,
      pp["attn_out_w"], pp["attn_out_b"], pp["attn_norm_g"], pp["attn_norm_b"],
      pp["ffn_w1"], pp["ffn_b1"], pp["ffn_w2"], pp["ffn_b2"],
      pp["ffn_norm_g"], pp["ffn_norm_b"])


def dca_transformer_forward(x, prepared_params, num_heads):
    B, S, D = x.shape
    N = B * S
    depth = len(prepared_params)
    vmem_limit = _vmem_limit_bytes()
    tn = _row_tile(N, vmem_limit)

    # Preallocated layer-output buffer (bf16): no O(depth^2) re-stacking.
    buf = jnp.zeros((depth + 1, N, D), jnp.bfloat16)
    buf = lax.dynamic_update_slice(buf, x.reshape(1, N, D).astype(jnp.bfloat16), (0, 0, 0))

    x_flat = x.reshape(N, D)
    for li, pp in enumerate(prepared_params):
        q, k, v = grn_qkv(buf, li + 1, pp, tn, vmem_limit)
        attn = attention(q.reshape(B, S, D), k.reshape(B, S, D), v.reshape(B, S, D),
                         num_heads, vmem_limit)
        x_flat = proj_ffn(x_flat, attn.reshape(N, D), pp, tn, vmem_limit)
        buf = lax.dynamic_update_slice(
            buf, x_flat.reshape(1, N, D).astype(jnp.bfloat16), (li + 1, 0, 0))
    return x_flat.reshape(B, S, D)


# ------------------------ parameters (init + one-time prep) ------------------ #

def init_layer_params(key, dim, mlp_ratio):
    ks = jax.random.split(key, 10)

    def lin_w(k, out_d, in_d):
        return jax.random.normal(k, (out_d, in_d), jnp.float32) * 0.02

    def lin_b(k, out_d):
        return jax.random.normal(k, (out_d,), jnp.float32) * 0.02

    def grn_params(k):
        k1, k2 = jax.random.split(k)
        return (lin_w(k1, dim, dim), lin_b(k2, dim),
                jnp.ones((dim,), jnp.float32), jnp.zeros((dim,), jnp.float32))

    return dict(
        grn_q=grn_params(ks[0]),
        grn_k=grn_params(ks[1]),
        grn_v=grn_params(ks[2]),
        attn_out_w=lin_w(ks[3], dim, dim),
        attn_out_b=lin_b(ks[4], dim),
        attn_norm_g=jnp.ones((dim,), jnp.float32),
        attn_norm_b=jnp.zeros((dim,), jnp.float32),
        ffn_w1=lin_w(ks[5], mlp_ratio * dim, dim),
        ffn_b1=lin_b(ks[6], mlp_ratio * dim),
        ffn_w2=lin_w(ks[7], dim, mlp_ratio * dim),
        ffn_b2=lin_b(ks[8], dim),
        ffn_norm_g=jnp.ones((dim,), jnp.float32),
        ffn_norm_b=jnp.zeros((dim,), jnp.float32),
    )


def prepare_layer_params(p):
    """One-time prep: transpose Linear weights to (in,out), cast bf16, reshape biases."""
    D = p["attn_out_w"].shape[0]
    Dm = p["ffn_w1"].shape[0]

    def wt(w):  # (out,in) -> (in,out) bf16
        return jnp.asarray(w.T, jnp.bfloat16)

    def row(v):
        return v.reshape(1, -1).astype(jnp.float32)

    out = {}
    for name in ("q", "k", "v"):
        W, b, g, be = p[f"grn_{name}"]
        out[f"grn_{name}_w"] = wt(W)
        out[f"grn_{name}_b"] = row(b)
        out[f"grn_{name}_g"] = row(g)
        out[f"grn_{name}_be"] = row(be)
    out["attn_out_w"] = wt(p["attn_out_w"])
    out["attn_out_b"] = row(p["attn_out_b"])
    out["attn_norm_g"] = row(p["attn_norm_g"])
    out["attn_norm_b"] = row(p["attn_norm_b"])
    out["ffn_w1"] = wt(p["ffn_w1"])            # (D, Dm)
    out["ffn_b1"] = row(p["ffn_b1"])           # (1, Dm)
    out["ffn_w2"] = wt(p["ffn_w2"])            # (Dm, D)
    out["ffn_b2"] = row(p["ffn_b2"])
    out["ffn_norm_g"] = row(p["ffn_norm_g"])
    out["ffn_norm_b"] = row(p["ffn_norm_b"])
    del D, Dm
    return out


# ----------------------------- pure-JAX f32 reference ------------------------ #

def _ln_ref(t, g, b):
    m = t.mean(-1, keepdims=True)
    v = ((t - m) ** 2).mean(-1, keepdims=True)
    return (t - m) / jnp.sqrt(v + LN_EPS) * g + b


def _grn_ref(stacked, W, b, g, be):
    lin = jnp.einsum("blsd,ed->blse", stacked, W) + b
    return (jnp.maximum(lin, 0.0) + _ln_ref(stacked, g, be)).sum(axis=1)


def _block_ref(x, layer_outputs, p, num_heads):
    B, S, D = x.shape
    H, Dh = num_heads, D // num_heads
    stacked = jnp.stack(layer_outputs, axis=1)  # (B, L, S, D)
    q = _grn_ref(stacked, *p["grn_q"])
    k = _grn_ref(stacked, *p["grn_k"])
    v = _grn_ref(stacked, *p["grn_v"])

    def split(t):
        return t.reshape(B, S, H, Dh).transpose(0, 2, 1, 3)

    qh, kh, vh = split(q), split(k), split(v)
    attn = jax.nn.softmax(jnp.einsum("bhqd,bhkd->bhqk", qh, kh) * Dh ** (-0.5), axis=-1)
    o = jnp.einsum("bhqk,bhkd->bhqd", attn, vh).transpose(0, 2, 1, 3).reshape(B, S, D)
    o = o @ p["attn_out_w"].T + p["attn_out_b"]
    out = x + _ln_ref(o, p["attn_norm_g"], p["attn_norm_b"])
    h = jax.nn.gelu(out @ p["ffn_w1"].T + p["ffn_b1"], approximate=False)
    f = h @ p["ffn_w2"].T + p["ffn_b2"]
    return out + _ln_ref(f, p["ffn_norm_g"], p["ffn_norm_b"])


def _transformer_ref(x, layer_params, num_heads):
    layer_outputs = [x]
    for p in layer_params:
        x = _block_ref(x, layer_outputs, p, num_heads)
        layer_outputs.append(x)
    return x


# --------------------------------- main --------------------------------------- #

if __name__ == "__main__":
    B, S, D = 2, 8, 32
    num_heads = 8
    depth = 2
    mlp_ratio = 4

    key = jax.random.PRNGKey(0)
    kx, kp = jax.random.split(key)
    x = jax.random.normal(kx, (B, S, D), jnp.float32)
    layer_params = [init_layer_params(k, D, mlp_ratio)
                    for k in jax.random.split(kp, depth)]
    prepared = [prepare_layer_params(p) for p in layer_params]

    fwd = jax.jit(dca_transformer_forward, static_argnums=(2,))
    out = fwd(x, prepared, num_heads)
    out = jax.block_until_ready(out)

    ref = _transformer_ref(x, layer_params, num_heads)
    assert out.shape == (B, S, D)
    assert bool(jnp.all(jnp.isfinite(out)))
    # bf16 matmuls / bf16 HBM intermediates / approx reciprocal -> relative tolerance
    max_err = float(jnp.max(jnp.abs(out - ref)))
    ref_scale = max(float(jnp.max(jnp.abs(ref))), 1.0)
    assert max_err < 3e-2 * ref_scale, \
        f"mismatch vs reference: abs {max_err}, ref scale {ref_scale}"

    print("KERNEL_OK")
</pallas_src>

<mosaic_0001>
module attributes {stable_mosaic.version = 11 : i64} {
  func.func @grn_qkv_kernel(%arg0: i32, %arg1: i32, %arg2: memref<1x16x32xbf16, #tpu.memory_space<vmem>>, %arg3: memref<32x32xbf16, #tpu.memory_space<vmem>>, %arg4: memref<1x32xf32, #tpu.memory_space<vmem>>, %arg5: memref<1x32xf32, #tpu.memory_space<vmem>>, %arg6: memref<1x32xf32, #tpu.memory_space<vmem>>, %arg7: memref<32x32xbf16, #tpu.memory_space<vmem>>, %arg8: memref<1x32xf32, #tpu.memory_space<vmem>>, %arg9: memref<1x32xf32, #tpu.memory_space<vmem>>, %arg10: memref<1x32xf32, #tpu.memory_space<vmem>>, %arg11: memref<32x32xbf16, #tpu.memory_space<vmem>>, %arg12: memref<1x32xf32, #tpu.memory_space<vmem>>, %arg13: memref<1x32xf32, #tpu.memory_space<vmem>>, %arg14: memref<1x32xf32, #tpu.memory_space<vmem>>, %arg15: memref<16x32xbf16, #tpu.memory_space<vmem>>, %arg16: memref<16x32xbf16, #tpu.memory_space<vmem>>, %arg17: memref<16x32xbf16, #tpu.memory_space<vmem>>, %arg18: memref<16x32xf32, #tpu.memory_space<vmem>>, %arg19: memref<16x32xf32, #tpu.memory_space<vmem>>, %arg20: memref<16x32xf32, #tpu.memory_space<vmem>>, %arg21: memref<16x32xf32, #tpu.memory_space<vmem>>) attributes {dimension_semantics = [#tpu.dimension_semantics<parallel>, #tpu.dimension_semantics<arbitrary>], iteration_bounds = array<i64: 1, 1>, scalar_prefetch = 0 : i64, scratch_operands = 4 : i64, tpu.core_type = #tpu.core_type<tc>, window_params = [{transform_indices = @transform_0, window_bounds = array<i64: 1, 16, 32>}, {pipeline_mode = #tpu.pipeline_mode<synchronous>, transform_indices = @transform_1, window_bounds = array<i64: 32, 32>}, {pipeline_mode = #tpu.pipeline_mode<synchronous>, transform_indices = @transform_2, window_bounds = array<i64: 1, 32>}, {pipeline_mode = #tpu.pipeline_mode<synchronous>, transform_indices = @transform_3, window_bounds = array<i64: 1, 32>}, {pipeline_mode = #tpu.pipeline_mode<synchronous>, transform_indices = @transform_4, window_bounds = array<i64: 1, 32>}, {pipeline_mode = #tpu.pipeline_mode<synchronous>, transform_indices = @transform_5, window_bounds = array<i64: 32, 32>}, {pipeline_mode = #tpu.pipeline_mode<synchronous>, transform_indices = @transform_6, window_bounds = array<i64: 1, 32>}, {pipeline_mode = #tpu.pipeline_mode<synchronous>, transform_indices = @transform_7, window_bounds = array<i64: 1, 32>}, {pipeline_mode = #tpu.pipeline_mode<synchronous>, transform_indices = @transform_8, window_bounds = array<i64: 1, 32>}, {pipeline_mode = #tpu.pipeline_mode<synchronous>, transform_indices = @transform_9, window_bounds = array<i64: 32, 32>}, {pipeline_mode = #tpu.pipeline_mode<synchronous>, transform_indices = @transform_10, window_bounds = array<i64: 1, 32>}, {pipeline_mode = #tpu.pipeline_mode<synchronous>, transform_indices = @transform_11, window_bounds = array<i64: 1, 32>}, {pipeline_mode = #tpu.pipeline_mode<synchronous>, transform_indices = @transform_12, window_bounds = array<i64: 1, 32>}, {transform_indices = @transform_13, window_bounds = array<i64: 16, 32>}, {transform_indices = @transform_14, window_bounds = array<i64: 16, 32>}, {transform_indices = @transform_15, window_bounds = array<i64: 16, 32>}]} {
    %c0_i32 = arith.constant 0 : i32
    %0 = arith.cmpi eq, %arg1, %c0_i32 : i32
    %1 = arith.extui %0 : i1 to i32
    %c0_i32_0 = arith.constant 0 : i32
    %2 = arith.cmpi ne, %1, %c0_i32_0 : i32
    scf.if %2 {
      %cst_43 = arith.constant 0.000000e+00 : f32
      %60 = vector.broadcast %cst_43 : f32 to vector<16x32xf32>
      %c0_44 = arith.constant 0 : index
      %c0_45 = arith.constant 0 : index
      %61 = vector.load %arg18[%c0_44, %c0_45] : memref<16x32xf32, #tpu.memory_space<vmem>>, vector<16x32xf32>
      tpu.vector_store %arg18[%c0_44, %c0_45], %60 {strides = array<i32>} : memref<16x32xf32, #tpu.memory_space<vmem>>, vector<16x32xf32>,
      %cst_46 = arith.constant 0.000000e+00 : f32
      %62 = vector.broadcast %cst_46 : f32 to vector<16x32xf32>
      %c0_47 = arith.constant 0 : index
      %c0_48 = arith.constant 0 : index
      %63 = vector.load %arg19[%c0_47, %c0_48] : memref<16x32xf32, #tpu.memory_space<vmem>>, vector<16x32xf32>
      tpu.vector_store %arg19[%c0_47, %c0_48], %62 {strides = array<i32>} : memref<16x32xf32, #tpu.memory_space<vmem>>, vector<16x32xf32>,
      %cst_49 = arith.constant 0.000000e+00 : f32
      %64 = vector.broadcast %cst_49 : f32 to vector<16x32xf32>
      %c0_50 = arith.constant 0 : index
      %c0_51 = arith.constant 0 : index
      %65 = vector.load %arg20[%c0_50, %c0_51] : memref<16x32xf32, #tpu.memory_space<vmem>>, vector<16x32xf32>
      tpu.vector_store %arg20[%c0_50, %c0_51], %64 {strides = array<i32>} : memref<16x32xf32, #tpu.memory_space<vmem>>, vector<16x32xf32>,
      %cst_52 = arith.constant 0.000000e+00 : f32
      %66 = vector.broadcast %cst_52 : f32 to vector<16x32xf32>
      %c0_53 = arith.constant 0 : index
      %c0_54 = arith.constant 0 : index
      %67 = vector.load %arg21[%c0_53, %c0_54] : memref<16x32xf32, #tpu.memory_space<vmem>>, vector<16x32xf32>
      tpu.vector_store %arg21[%c0_53, %c0_54], %66 {strides = array<i32>} : memref<16x32xf32, #tpu.memory_space<vmem>>, vector<16x32xf32>,
    } else {
    }
    %c0 = arith.constant 0 : index
    %c0_1 = arith.constant 0 : index
    %c0_2 = arith.constant 0 : index
    %3 = vector.load %arg2[%c0, %c0_1, %c0_2] : memref<1x16x32xbf16, #tpu.memory_space<vmem>>, vector<1x16x32xbf16>
    %4 = vector.shape_cast %3 : vector<1x16x32xbf16> to vector<16x32xbf16>
    %5 = arith.extf %4 : vector<16x32xbf16> to vector<16x32xf32>
    %c0_3 = arith.constant 0 : index
    %c0_4 = arith.constant 0 : index
    %6 = vector.load %arg21[%c0_3, %c0_4] : memref<16x32xf32, #tpu.memory_space<vmem>>, vector<16x32xf32>
    %cst = arith.constant dense<0.000000e+00> : vector<16xf32>
    %7 = vector.multi_reduction <add>, %5, %cst [1] : vector<16x32xf32> to vector<16xf32>
    %8 = vector.shape_cast %7 : vector<16xf32> to vector<16x1xf32>
    %cst_5 = arith.constant 3.200000e+01 : f32
    %9 = vector.broadcast %cst_5 : f32 to vector<16x1xf32>
    %10 = arith.divf %8, %9 : vector<16x1xf32>
    %11 = vector.broadcast %10 : vector<16x1xf32> to vector<16x32xf32>
    %12 = arith.subf %5, %11 : vector<16x32xf32>
    %13 = arith.mulf %12, %12 : vector<16x32xf32>
    %cst_6 = arith.constant dense<0.000000e+00> : vector<16xf32>
    %14 = vector.multi_reduction <add>, %13, %cst_6 [1] : vector<16x32xf32> to vector<16xf32>
    %15 = vector.shape_cast %14 : vector<16xf32> to vector<16x1xf32>
    %cst_7 = arith.constant 3.200000e+01 : f32
    %16 = vector.broadcast %cst_7 : f32 to vector<16x1xf32>
    %17 = arith.divf %15, %16 : vector<16x1xf32>
    %18 = vector.broadcast %10 : vector<16x1xf32> to vector<16x32xf32>
    %19 = arith.subf %5, %18 : vector<16x32xf32>
    %cst_8 = arith.constant 9.99999974E-6 : f32
    %20 = vector.broadcast %cst_8 : f32 to vector<16x1xf32>
    %21 = arith.addf %17, %20 : vector<16x1xf32>
    %22 = math.rsqrt %21 : vector<16x1xf32>
    %23 = vector.broadcast %22 : vector<16x1xf32> to vector<16x32xf32>
    %24 = arith.mulf %19, %23 : vector<16x32xf32>
    %25 = arith.addf %6, %24 : vector<16x32xf32>
    %c0_9 = arith.constant 0 : index
    %c0_10 = arith.constant 0 : index
    %26 = vector.load %arg21[%c0_9, %c0_10] : memref<16x32xf32, #tpu.memory_space<vmem>>, vector<16x32xf32>
    tpu.vector_store %arg21[%c0_9, %c0_10], %25 {strides = array<i32>} : memref<16x32xf32, #tpu.memory_space<vmem>>, vector<16x32xf32>,
    %c0_11 = arith.constant 0 : index
    %c0_12 = arith.constant 0 : index
    %27 = vector.load %arg18[%c0_11, %c0_12] : memref<16x32xf32, #tpu.memory_space<vmem>>, vector<16x32xf32>
    %c0_13 = arith.constant 0 : index
    %c0_14 = arith.constant 0 : index
    %28 = vector.load %arg3[%c0_13, %c0_14] : memref<32x32xbf16, #tpu.memory_space<vmem>>, vector<32x32xbf16>
    %cst_15 = arith.constant dense<0.000000e+00> : vector<16x32xf32>
    %29 = tpu.matmul %4, %28, %cst_15 {dimension_numbers = #tpu.dot_dimension_numbers<[1], [0], [0], [1], [0, 0, 1, 1], [], []>} : vector<16x32xbf16>, vector<32x32xbf16>, vector<16x32xf32> -> vector<16x32xf32>
    %c0_16 = arith.constant 0 : index
    %c0_17 = arith.constant 0 : index
    %30 = vector.load %arg4[%c0_16, %c0_17] : memref<1x32xf32, #tpu.memory_space<vmem>>, vector<1x32xf32>
    %31 = vector.broadcast %30 : vector<1x32xf32> to vector<16x32xf32>
    %32 = arith.addf %29, %31 : vector<16x32xf32>
    %cst_18 = arith.constant 0.000000e+00 : f32
    %33 = vector.broadcast %cst_18 : f32 to vector<16x32xf32>
    %34 = arith.maximumf %32, %33 : vector<16x32xf32>
    %35 = arith.addf %27, %34 : vector<16x32xf32>
    %c0_19 = arith.constant 0 : index
    %c0_20 = arith.constant 0 : index
    %36 = vector.load %arg18[%c0_19, %c0_20] : memref<16x32xf32, #tpu.memory_space<vmem>>, vector<16x32xf32>
    tpu.vector_store %arg18[%c0_19, %c0_20], %35 {strides = array<i32>} : memref<16x32xf32, #tpu.memory_space<vmem>>, vector<16x32xf32>,
    %c0_21 = arith.constant 0 : index
    %c0_22 = arith.constant 0 : index
    %37 = vector.load %arg19[%c0_21, %c0_22] : memref<16x32xf32, #tpu.memory_space<vmem>>, vector<16x32xf32>
    %c0_23 = arith.constant 0 : index
    %c0_24 = arith.constant 0 : index
    %38 = vector.load %arg7[%c0_23, %c0_24] : memref<32x32xbf16, #tpu.memory_space<vmem>>, vector<32x32xbf16>
    %cst_25 = arith.constant dense<0.000000e+00> : vector<16x32xf32>
    %39 = tpu.matmul %4, %38, %cst_25 {dimension_numbers = #tpu.dot_dimension_numbers<[1], [0], [0], [1], [0, 0, 1, 1], [], []>} : vector<16x32xbf16>, vector<32x32xbf16>, vector<16x32xf32> -> vector<16x32xf32>
    %c0_26 = arith.constant 0 : index
    %c0_27 = arith.constant 0 : index
    %40 = vector.load %arg8[%c0_26, %c0_27] : memref<1x32xf32, #tpu.memory_space<vmem>>, vector<1x32xf32>
    %41 = vector.broadcast %40 : vector<1x32xf32> to vector<16x32xf32>
    %42 = arith.addf %39, %41 : vector<16x32xf32>
    %cst_28 = arith.constant 0.000000e+00 : f32
    %43 = vector.broadcast %cst_28 : f32 to vector<16x32xf32>
    %44 = arith.maximumf %42, %43 : vector<16x32xf32>
    %45 = arith.addf %37, %44 : vector<16x32xf32>
    %c0_29 = arith.constant 0 : index
    %c0_30 = arith.constant 0 : index
    %46 = vector.load %arg19[%c0_29, %c0_30] : memref<16x32xf32, #tpu.memory_space<vmem>>, vector<16x32xf32>
    tpu.vector_store %arg19[%c0_29, %c0_30], %45 {strides = array<i32>} : memref<16x32xf32, #tpu.memory_space<vmem>>, vector<16x32xf32>,
    %c0_31 = arith.constant 0 : index
    %c0_32 = arith.constant 0 : index
    %47 = vector.load %arg20[%c0_31, %c0_32] : memref<16x32xf32, #tpu.memory_space<vmem>>, vector<16x32xf32>
    %c0_33 = arith.constant 0 : index
    %c0_34 = arith.constant 0 : index
    %48 = vector.load %arg11[%c0_33, %c0_34] : memref<32x32xbf16, #tpu.memory_space<vmem>>, vector<32x32xbf16>
    %cst_35 = arith.constant dense<0.000000e+00> : vector<16x32xf32>
    %49 = tpu.matmul %4, %48, %cst_35 {dimension_numbers = #tpu.dot_dimension_numbers<[1], [0], [0], [1], [0, 0, 1, 1], [], []>} : vector<16x32xbf16>, vector<32x32xbf16>, vector<16x32xf32> -> vector<16x32xf32>
    %c0_36 = arith.constant 0 : index
    %c0_37 = arith.constant 0 : index
    %50 = vector.load %arg12[%c0_36, %c0_37] : memref<1x32xf32, #tpu.memory_space<vmem>>, vector<1x32xf32>
    %51 = vector.broadcast %50 : vector<1x32xf32> to vector<16x32xf32>
    %52 = arith.addf %49, %51 : vector<16x32xf32>
    %cst_38 = arith.constant 0.000000e+00 : f32
    %53 = vector.broadcast %cst_38 : f32 to vector<16x32xf32>
    %54 = arith.maximumf %52, %53 : vector<16x32xf32>
    %55 = arith.addf %47, %54 : vector<16x32xf32>
    %c0_39 = arith.constant 0 : index
    %c0_40 = arith.constant 0 : index
    %56 = vector.load %arg20[%c0_39, %c0_40] : memref<16x32xf32, #tpu.memory_space<vmem>>, vector<16x32xf32>
    tpu.vector_store %arg20[%c0_39, %c0_40], %55 {strides = array<i32>} : memref<16x32xf32, #tpu.memory_space<vmem>>, vector<16x32xf32>,
    %c0_i32_41 = arith.constant 0 : i32
    %57 = arith.cmpi eq, %arg1, %c0_i32_41 : i32
    %58 = arith.extui %57 : i1 to i32
    %c0_i32_42 = arith.constant 0 : i32
    %59 = arith.cmpi ne, %58, %c0_i32_42 : i32
    scf.if %59 {
      %c0_43 = arith.constant 0 : index
      %c0_44 = arith.constant 0 : index
      %60 = vector.load %arg21[%c0_43, %c0_44] : memref<16x32xf32, #tpu.memory_space<vmem>>, vector<16x32xf32>
      %c0_45 = arith.constant 0 : index
      %c0_46 = arith.constant 0 : index
      %61 = vector.load %arg18[%c0_45, %c0_46] : memref<16x32xf32, #tpu.memory_space<vmem>>, vector<16x32xf32>
      %c0_47 = arith.constant 0 : index
      %c0_48 = arith.constant 0 : index
      %62 = vector.load %arg5[%c0_47, %c0_48] : memref<1x32xf32, #tpu.memory_space<vmem>>, vector<1x32xf32>
      %63 = vector.broadcast %62 : vector<1x32xf32> to vector<16x32xf32>
      %64 = arith.mulf %60, %63 : vector<16x32xf32>
      %65 = arith.addf %61, %64 : vector<16x32xf32>
      %c0_49 = arith.constant 0 : index
      %c0_50 = arith.constant 0 : index
      %66 = vector.load %arg6[%c0_49, %c0_50] : memref<1x32xf32, #tpu.memory_space<vmem>>, vector<1x32xf32>
      %cst_51 = arith.constant 1.000000e+00 : f32
      %67 = vector.broadcast %cst_51 : f32 to vector<1x32xf32>
      %68 = arith.mulf %67, %66 : vector<1x32xf32>
      %69 = vector.broadcast %68 : vector<1x32xf32> to vector<16x32xf32>
      %70 = arith.addf %65, %69 : vector<16x32xf32>
      %71 = arith.truncf %70 : vector<16x32xf32> to vector<16x32xbf16>
      %c0_52 = arith.constant 0 : index
      %c0_53 = arith.constant 0 : index
      %72 = vector.load %arg15[%c0_52, %c0_53] : memref<16x32xbf16, #tpu.memory_space<vmem>>, vector<16x32xbf16>
      tpu.vector_store %arg15[%c0_52, %c0_53], %71 {strides = array<i32>} : memref<16x32xbf16, #tpu.memory_space<vmem>>, vector<16x32xbf16>,
      %c0_54 = arith.constant 0 : index
      %c0_55 = arith.constant 0 : index
      %73 = vector.load %arg19[%c0_54, %c0_55] : memref<16x32xf32, #tpu.memory_space<vmem>>, vector<16x32xf32>
      %c0_56 = arith.constant 0 : index
      %c0_57 = arith.constant 0 : index
      %74 = vector.load %arg9[%c0_56, %c0_57] : memref<1x32xf32, #tpu.memory_space<vmem>>, vector<1x32xf32>
      %75 = vector.broadcast %74 : vector<1x32xf32> to vector<16x32xf32>
      %76 = arith.mulf %60, %75 : vector<16x32xf32>
      %77 = arith.addf %73, %76 : vector<16x32xf32>
      %c0_58 = arith.constant 0 : index
      %c0_59 = arith.constant 0 : index
      %78 = vector.load %arg10[%c0_58, %c0_59] : memref<1x32xf32, #tpu.memory_space<vmem>>, vector<1x32xf32>
      %cst_60 = arith.constant 1.000000e+00 : f32
      %79 = vector.broadcast %cst_60 : f32 to vector<1x32xf32>
      %80 = arith.mulf %79, %78 : vector<1x32xf32>
      %81 = vector.broadcast %80 : vector<1x32xf32> to vector<16x32xf32>
      %82 = arith.addf %77, %81 : vector<16x32xf32>
      %83 = arith.truncf %82 : vector<16x32xf32> to vector<16x32xbf16>
      %c0_61 = arith.constant 0 : index
      %c0_62 = arith.constant 0 : index
      %84 = vector.load %arg16[%c0_61, %c0_62] : memref<16x32xbf16, #tpu.memory_space<vmem>>, vector<16x32xbf16>
      tpu.vector_store %arg16[%c0_61, %c0_62], %83 {strides = array<i32>} : memref<16x32xbf16, #tpu.memory_space<vmem>>, vector<16x32xbf16>,
      %c0_63 = arith.constant 0 : index
      %c0_64 = arith.constant 0 : index
      %85 = vector.load %arg20[%c0_63, %c0_64] : memref<16x32xf32, #tpu.memory_space<vmem>>, vector<16x32xf32>
      %c0_65 = arith.constant 0 : index
      %c0_66 = arith.constant 0 : index
      %86 = vector.load %arg13[%c0_65, %c0_66] : memref<1x32xf32, #tpu.memory_space<vmem>>, vector<1x32xf32>
      %87 = vector.broadcast %86 : vector<1x32xf32> to vector<16x32xf32>
      %88 = arith.mulf %60, %87 : vector<16x32xf32>
      %89 = arith.addf %85, %88 : vector<16x32xf32>
      %c0_67 = arith.constant 0 : index
      %c0_68 = arith.constant 0 : index
      %90 = vector.load %arg14[%c0_67, %c0_68] : memref<1x32xf32, #tpu.memory_space<vmem>>, vector<1x32xf32>
      %cst_69 = arith.constant 1.000000e+00 : f32
      %91 = vector.broadcast %cst_69 : f32 to vector<1x32xf32>
      %92 = arith.mulf %91, %90 : vector<1x32xf32>
      %93 = vector.broadcast %92 : vector<1x32xf32> to vector<16x32xf32>
      %94 = arith.addf %89, %93 : vector<16x32xf32>
      %95 = arith.truncf %94 : vector<16x32xf32> to vector<16x32xbf16>
      %c0_70 = arith.constant 0 : index
      %c0_71 = arith.constant 0 : index
      %96 = vector.load %arg17[%c0_70, %c0_71] : memref<16x32xbf16, #tpu.memory_space<vmem>>, vector<16x32xbf16>
      tpu.vector_store %arg17[%c0_70, %c0_71], %95 {strides = array<i32>} : memref<16x32xbf16, #tpu.memory_space<vmem>>, vector<16x32xbf16>,
    } else {
    }
    return
  }
  func.func @transform_0(%arg0: i32, %arg1: i32) -> (i32, i32, i32) {
    %c0_i32 = arith.constant 0 : i32
    %c0_i32_0 = arith.constant 0 : i32
    return %arg1, %arg0, %c0_i32 : i32, i32, i32
  }
  func.func @transform_1(%arg0: i32, %arg1: i32) -> (i32, i32) {
    %c0_i32 = arith.constant 0 : i32
    %c0_i32_0 = arith.constant 0 : i32
    %c0_i32_1 = arith.constant 0 : i32
    return %c0_i32, %c0_i32_0 : i32, i32
  }
  func.func @transform_2(%arg0: i32, %arg1: i32) -> (i32, i32) {
    %c0_i32 = arith.constant 0 : i32
    %c0_i32_0 = arith.constant 0 : i32
    %c0_i32_1 = arith.constant 0 : i32
    return %c0_i32, %c0_i32_0 : i32, i32
  }
  func.func @transform_3(%arg0: i32, %arg1: i32) -> (i32, i32) {
    %c0_i32 = arith.constant 0 : i32
    %c0_i32_0 = arith.constant 0 : i32
    %c0_i32_1 = arith.constant 0 : i32
    return %c0_i32, %c0_i32_0 : i32, i32
  }
  func.func @transform_4(%arg0: i32, %arg1: i32) -> (i32, i32) {
    %c0_i32 = arith.constant 0 : i32
    %c0_i32_0 = arith.constant 0 : i32
    %c0_i32_1 = arith.constant 0 : i32
    return %c0_i32, %c0_i32_0 : i32, i32
  }
  func.func @transform_5(%arg0: i32, %arg1: i32) -> (i32, i32) {
    %c0_i32 = arith.constant 0 : i32
    %c0_i32_0 = arith.constant 0 : i32
    %c0_i32_1 = arith.constant 0 : i32
    return %c0_i32, %c0_i32_0 : i32, i32
  }
  func.func @transform_6(%arg0: i32, %arg1: i32) -> (i32, i32) {
    %c0_i32 = arith.constant 0 : i32
    %c0_i32_0 = arith.constant 0 : i32
    %c0_i32_1 = arith.constant 0 : i32
    return %c0_i32, %c0_i32_0 : i32, i32
  }
  func.func @transform_7(%arg0: i32, %arg1: i32) -> (i32, i32) {
    %c0_i32 = arith.constant 0 : i32
    %c0_i32_0 = arith.constant 0 : i32
    %c0_i32_1 = arith.constant 0 : i32
    return %c0_i32, %c0_i32_0 : i32, i32
  }
  func.func @transform_8(%arg0: i32, %arg1: i32) -> (i32, i32) {
    %c0_i32 = arith.constant 0 : i32
    %c0_i32_0 = arith.constant 0 : i32
    %c0_i32_1 = arith.constant 0 : i32
    return %c0_i32, %c0_i32_0 : i32, i32
  }
  func.func @transform_9(%arg0: i32, %arg1: i32) -> (i32, i32) {
    %c0_i32 = arith.constant 0 : i32
    %c0_i32_0 = arith.constant 0 : i32
    %c0_i32_1 = arith.constant 0 : i32
    return %c0_i32, %c0_i32_0 : i32, i32
  }
  func.func @transform_10(%arg0: i32, %arg1: i32) -> (i32, i32) {
    %c0_i32 = arith.constant 0 : i32
    %c0_i32_0 = arith.constant 0 : i32
    %c0_i32_1 = arith.constant 0 : i32
    return %c0_i32, %c0_i32_0 : i32, i32
  }
  func.func @transform_11(%arg0: i32, %arg1: i32) -> (i32, i32) {
    %c0_i32 = arith.constant 0 : i32
    %c0_i32_0 = arith.constant 0 : i32
    %c0_i32_1 = arith.constant 0 : i32
    return %c0_i32, %c0_i32_0 : i32, i32
  }
  func.func @transform_12(%arg0: i32, %arg1: i32) -> (i32, i32) {
    %c0_i32 = arith.constant 0 : i32
    %c0_i32_0 = arith.constant 0 : i32
    %c0_i32_1 = arith.constant 0 : i32
    return %c0_i32, %c0_i32_0 : i32, i32
  }
  func.func @transform_13(%arg0: i32, %arg1: i32) -> (i32, i32) {
    %c0_i32 = arith.constant 0 : i32
    %c0_i32_0 = arith.constant 0 : i32
    return %arg0, %c0_i32 : i32, i32
  }
  func.func @transform_14(%arg0: i32, %arg1: i32) -> (i32, i32) {
    %c0_i32 = arith.constant 0 : i32
    %c0_i32_0 = arith.constant 0 : i32
    return %arg0, %c0_i32 : i32, i32
  }
  func.func @transform_15(%arg0: i32, %arg1: i32) -> (i32, i32) {
    %c0_i32 = arith.constant 0 : i32
    %c0_i32_0 = arith.constant 0 : i32
    return %arg0, %c0_i32 : i32, i32
  }
}

module attributes {stable_mosaic.version = 11 : i64} {
  func.func @attn_kernel(%arg0: i32, %arg1: i32, %arg2: memref<1x8x32xbf16, #tpu.memory_space<vmem>>, %arg3: memref<1x8x32xbf16, #tpu.memory_space<vmem>>, %arg4: memref<1x8x32xbf16, #tpu.memory_space<vmem>>, %arg5: memref<1x8x32xbf16, #tpu.memory_space<vmem>>) attributes {dimension_semantics = [#tpu.dimension_semantics<parallel>, #tpu.dimension_semantics<parallel>], iteration_bounds = array<i64: 2, 1>, scalar_prefetch = 0 : i64, scratch_operands = 0 : i64, tpu.core_type = #tpu.core_type<tc>, window_params = [{transform_indices = @transform_0, window_bounds = array<i64: 1, 8, 32>}, {transform_indices = @transform_1, window_bounds = array<i64: 1, 8, 32>}, {transform_indices = @transform_2, window_bounds = array<i64: 1, 8, 32>}, {transform_indices = @transform_3, window_bounds = array<i64: 1, 8, 32>}]} {
    %c0 = arith.constant 0 : index
    %c0_0 = arith.constant 0 : index
    %c0_1 = arith.constant 0 : index
    %0 = vector.load %arg2[%c0, %c0_0, %c0_1] : memref<1x8x32xbf16, #tpu.memory_space<vmem>>, vector<1x8x4xbf16>
    %1 = vector.shape_cast %0 : vector<1x8x4xbf16> to vector<8x4xbf16>
    %c0_2 = arith.constant 0 : index
    %c0_3 = arith.constant 0 : index
    %c0_4 = arith.constant 0 : index
    %2 = vector.load %arg3[%c0_2, %c0_3, %c0_4] : memref<1x8x32xbf16, #tpu.memory_space<vmem>>, vector<1x8x4xbf16>
    %3 = vector.shape_cast %2 : vector<1x8x4xbf16> to vector<8x4xbf16>
    %c0_5 = arith.constant 0 : index
    %c0_6 = arith.constant 0 : index
    %c0_7 = arith.constant 0 : index
    %4 = vector.load %arg4[%c0_5, %c0_6, %c0_7] : memref<1x8x32xbf16, #tpu.memory_space<vmem>>, vector<1x8x4xbf16>
    %5 = vector.shape_cast %4 : vector<1x8x4xbf16> to vector<8x4xbf16>
    %cst = arith.constant dense<0.000000e+00> : vector<8x8xf32>
    %6 = tpu.matmul %1, %3, %cst {dimension_numbers = #tpu.dot_dimension_numbers<[1], [1], [0], [0], [0, 0, 1, 0], [], []>} : vector<8x4xbf16>, vector<8x4xbf16>, vector<8x8xf32> -> vector<8x8xf32>
    %cst_8 = arith.constant 5.000000e-01 : f32
    %7 = vector.broadcast %cst_8 : f32 to vector<8x8xf32>
    %8 = arith.mulf %6, %7 : vector<8x8xf32>
    %cst_9 = arith.constant dense<0xFF800000> : vector<8xf32>
    %9 = vector.multi_reduction <maximumf>, %8, %cst_9 [1] : vector<8x8xf32> to vector<8xf32>
    %10 = vector.shape_cast %9 : vector<8xf32> to vector<8x1xf32>
    %11 = vector.broadcast %10 : vector<8x1xf32> to vector<8x8xf32>
    %12 = arith.subf %8, %11 : vector<8x8xf32>
    %13 = math.exp %12 : vector<8x8xf32>
    %cst_10 = arith.constant dense<0.000000e+00> : vector<8xf32>
    %14 = vector.multi_reduction <add>, %13, %cst_10 [1] : vector<8x8xf32> to vector<8xf32>
    %15 = vector.shape_cast %14 : vector<8xf32> to vector<8x1xf32>
    %16 = tpu.reciprocal %15 {approx = true} : vector<8x1xf32> -> vector<8x1xf32>
    %17 = vector.broadcast %16 : vector<8x1xf32> to vector<8x8xf32>
    %18 = arith.mulf %13, %17 : vector<8x8xf32>
    %19 = arith.truncf %18 : vector<8x8xf32> to vector<8x8xbf16>
    %cst_11 = arith.constant dense<0.000000e+00> : vector<8x4xf32>
    %20 = tpu.matmul %19, %5, %cst_11 {dimension_numbers = #tpu.dot_dimension_numbers<[1], [0], [0], [1], [0, 0, 1, 1], [], []>} : vector<8x8xbf16>, vector<8x4xbf16>, vector<8x4xf32> -> vector<8x4xf32>
    %c0_12 = arith.constant 0 : index
    %c0_13 = arith.constant 0 : index
    %c4 = arith.constant 4 : index
    %21 = vector.load %arg2[%c0_12, %c0_13, %c4] : memref<1x8x32xbf16, #tpu.memory_space<vmem>>, vector<1x8x4xbf16>
    %22 = vector.shape_cast %21 : vector<1x8x4xbf16> to vector<8x4xbf16>
    %c0_14 = arith.constant 0 : index
    %c0_15 = arith.constant 0 : index
    %c4_16 = arith.constant 4 : index
    %23 = vector.load %arg3[%c0_14, %c0_15, %c4_16] : memref<1x8x32xbf16, #tpu.memory_space<vmem>>, vector<1x8x4xbf16>
    %24 = vector.shape_cast %23 : vector<1x8x4xbf16> to vector<8x4xbf16>
    %c0_17 = arith.constant 0 : index
    %c0_18 = arith.constant 0 : index
    %c4_19 = arith.constant 4 : index
    %25 = vector.load %arg4[%c0_17, %c0_18, %c4_19] : memref<1x8x32xbf16, #tpu.memory_space<vmem>>, vector<1x8x4xbf16>
    %26 = vector.shape_cast %25 : vector<1x8x4xbf16> to vector<8x4xbf16>
    %cst_20 = arith.constant dense<0.000000e+00> : vector<8x8xf32>
    %27 = tpu.matmul %22, %24, %cst_20 {dimension_numbers = #tpu.dot_dimension_numbers<[1], [1], [0], [0], [0, 0, 1, 0], [], []>} : vector<8x4xbf16>, vector<8x4xbf16>, vector<8x8xf32> -> vector<8x8xf32>
    %cst_21 = arith.constant 5.000000e-01 : f32
    %28 = vector.broadcast %cst_21 : f32 to vector<8x8xf32>
    %29 = arith.mulf %27, %28 : vector<8x8xf32>
    %cst_22 = arith.constant dense<0xFF800000> : vector<8xf32>
    %30 = vector.multi_reduction <maximumf>, %29, %cst_22 [1] : vector<8x8xf32> to vector<8xf32>
    %31 = vector.shape_cast %30 : vector<8xf32> to vector<8x1xf32>
    %32 = vector.broadcast %31 : vector<8x1xf32> to vector<8x8xf32>
    %33 = arith.subf %29, %32 : vector<8x8xf32>
    %34 = math.exp %33 : vector<8x8xf32>
    %cst_23 = arith.constant dense<0.000000e+00> : vector<8xf32>
    %35 = vector.multi_reduction <add>, %34, %cst_23 [1] : vector<8x8xf32> to vector<8xf32>
    %36 = vector.shape_cast %35 : vector<8xf32> to vector<8x1xf32>
    %37 = tpu.reciprocal %36 {approx = true} : vector<8x1xf32> -> vector<8x1xf32>
    %38 = vector.broadcast %37 : vector<8x1xf32> to vector<8x8xf32>
    %39 = arith.mulf %34, %38 : vector<8x8xf32>
    %40 = arith.truncf %39 : vector<8x8xf32> to vector<8x8xbf16>
    %cst_24 = arith.constant dense<0.000000e+00> : vector<8x4xf32>
    %41 = tpu.matmul %40, %26, %cst_24 {dimension_numbers = #tpu.dot_dimension_numbers<[1], [0], [0], [1], [0, 0, 1, 1], [], []>} : vector<8x8xbf16>, vector<8x4xbf16>, vector<8x4xf32> -> vector<8x4xf32>
    %c0_25 = arith.constant 0 : index
    %c0_26 = arith.constant 0 : index
    %c8 = arith.constant 8 : index
    %42 = vector.load %arg2[%c0_25, %c0_26, %c8] : memref<1x8x32xbf16, #tpu.memory_space<vmem>>, vector<1x8x4xbf16>
    %43 = vector.shape_cast %42 : vector<1x8x4xbf16> to vector<8x4xbf16>
    %c0_27 = arith.constant 0 : index
    %c0_28 = arith.constant 0 : index
    %c8_29 = arith.constant 8 : index
    %44 = vector.load %arg3[%c0_27, %c0_28, %c8_29] : memref<1x8x32xbf16, #tpu.memory_space<vmem>>, vector<1x8x4xbf16>
    %45 = vector.shape_cast %44 : vector<1x8x4xbf16> to vector<8x4xbf16>
    %c0_30 = arith.constant 0 : index
    %c0_31 = arith.constant 0 : index
    %c8_32 = arith.constant 8 : index
    %46 = vector.load %arg4[%c0_30, %c0_31, %c8_32] : memref<1x8x32xbf16, #tpu.memory_space<vmem>>, vector<1x8x4xbf16>
    %47 = vector.shape_cast %46 : vector<1x8x4xbf16> to vector<8x4xbf16>
    %cst_33 = arith.constant dense<0.000000e+00> : vector<8x8xf32>
    %48 = tpu.matmul %43, %45, %cst_33 {dimension_numbers = #tpu.dot_dimension_numbers<[1], [1], [0], [0], [0, 0, 1, 0], [], []>} : vector<8x4xbf16>, vector<8x4xbf16>, vector<8x8xf32> -> vector<8x8xf32>
    %cst_34 = arith.constant 5.000000e-01 : f32
    %49 = vector.broadcast %cst_34 : f32 to vector<8x8xf32>
    %50 = arith.mulf %48, %49 : vector<8x8xf32>
    %cst_35 = arith.constant dense<0xFF800000> : vector<8xf32>
    %51 = vector.multi_reduction <maximumf>, %50, %cst_35 [1] : vector<8x8xf32> to vector<8xf32>
    %52 = vector.shape_cast %51 : vector<8xf32> to vector<8x1xf32>
    %53 = vector.broadcast %52 : vector<8x1xf32> to vector<8x8xf32>
    %54 = arith.subf %50, %53 : vector<8x8xf32>
    %55 = math.exp %54 : vector<8x8xf32>
    %cst_36 = arith.constant dense<0.000000e+00> : vector<8xf32>
    %56 = vector.multi_reduction <add>, %55, %cst_36 [1] : vector<8x8xf32> to vector<8xf32>
    %57 = vector.shape_cast %56 : vector<8xf32> to vector<8x1xf32>
    %58 = tpu.reciprocal %57 {approx = true} : vector<8x1xf32> -> vector<8x1xf32>
    %59 = vector.broadcast %58 : vector<8x1xf32> to vector<8x8xf32>
    %60 = arith.mulf %55, %59 : vector<8x8xf32>
    %61 = arith.truncf %60 : vector<8x8xf32> to vector<8x8xbf16>
    %cst_37 = arith.constant dense<0.000000e+00> : vector<8x4xf32>
    %62 = tpu.matmul %61, %47, %cst_37 {dimension_numbers = #tpu.dot_dimension_numbers<[1], [0], [0], [1], [0, 0, 1, 1], [], []>} : vector<8x8xbf16>, vector<8x4xbf16>, vector<8x4xf32> -> vector<8x4xf32>
    %c0_38 = arith.constant 0 : index
    %c0_39 = arith.constant 0 : index
    %c12 = arith.constant 12 : index
    %63 = vector.load %arg2[%c0_38, %c0_39, %c12] : memref<1x8x32xbf16, #tpu.memory_space<vmem>>, vector<1x8x4xbf16>
    %64 = vector.shape_cast %63 : vector<1x8x4xbf16> to vector<8x4xbf16>
    %c0_40 = arith.constant 0 : index
    %c0_41 = arith.constant 0 : index
    %c12_42 = arith.constant 12 : index
    %65 = vector.load %arg3[%c0_40, %c0_41, %c12_42] : memref<1x8x32xbf16, #tpu.memory_space<vmem>>, vector<1x8x4xbf16>
    %66 = vector.shape_cast %65 : vector<1x8x4xbf16> to vector<8x4xbf16>
    %c0_43 = arith.constant 0 : index
    %c0_44 = arith.constant 0 : index
    %c12_45 = arith.constant 12 : index
    %67 = vector.load %arg4[%c0_43, %c0_44, %c12_45] : memref<1x8x32xbf16, #tpu.memory_space<vmem>>, vector<1x8x4xbf16>
    %68 = vector.shape_cast %67 : vector<1x8x4xbf16> to vector<8x4xbf16>
    %cst_46 = arith.constant dense<0.000000e+00> : vector<8x8xf32>
    %69 = tpu.matmul %64, %66, %cst_46 {dimension_numbers = #tpu.dot_dimension_numbers<[1], [1], [0], [0], [0, 0, 1, 0], [], []>} : vector<8x4xbf16>, vector<8x4xbf16>, vector<8x8xf32> -> vector<8x8xf32>
    %cst_47 = arith.constant 5.000000e-01 : f32
    %70 = vector.broadcast %cst_47 : f32 to vector<8x8xf32>
    %71 = arith.mulf %69, %70 : vector<8x8xf32>
    %cst_48 = arith.constant dense<0xFF800000> : vector<8xf32>
    %72 = vector.multi_reduction <maximumf>, %71, %cst_48 [1] : vector<8x8xf32> to vector<8xf32>
    %73 = vector.shape_cast %72 : vector<8xf32> to vector<8x1xf32>
    %74 = vector.broadcast %73 : vector<8x1xf32> to vector<8x8xf32>
    %75 = arith.subf %71, %74 : vector<8x8xf32>
    %76 = math.exp %75 : vector<8x8xf32>
    %cst_49 = arith.constant dense<0.000000e+00> : vector<8xf32>
    %77 = vector.multi_reduction <add>, %76, %cst_49 [1] : vector<8x8xf32> to vector<8xf32>
    %78 = vector.shape_cast %77 : vector<8xf32> to vector<8x1xf32>
    %79 = tpu.reciprocal %78 {approx = true} : vector<8x1xf32> -> vector<8x1xf32>
    %80 = vector.broadcast %79 : vector<8x1xf32> to vector<8x8xf32>
    %81 = arith.mulf %76, %80 : vector<8x8xf32>
    %82 = arith.truncf %81 : vector<8x8xf32> to vector<8x8xbf16>
    %cst_50 = arith.constant dense<0.000000e+00> : vector<8x4xf32>
    %83 = tpu.matmul %82, %68, %cst_50 {dimension_numbers = #tpu.dot_dimension_numbers<[1], [0], [0], [1], [0, 0, 1, 1], [], []>} : vector<8x8xbf16>, vector<8x4xbf16>, vector<8x4xf32> -> vector<8x4xf32>
    %c0_51 = arith.constant 0 : index
    %c0_52 = arith.constant 0 : index
    %c16 = arith.constant 16 : index
    %84 = vector.load %arg2[%c0_51, %c0_52, %c16] : memref<1x8x32xbf16, #tpu.memory_space<vmem>>, vector<1x8x4xbf16>
    %85 = vector.shape_cast %84 : vector<1x8x4xbf16> to vector<8x4xbf16>
    %c0_53 = arith.constant 0 : index
    %c0_54 = arith.constant 0 : index
    %c16_55 = arith.constant 16 : index
    %86 = vector.load %arg3[%c0_53, %c0_54, %c16_55] : memref<1x8x32xbf16, #tpu.memory_space<vmem>>, vector<1x8x4xbf16>
    %87 = vector.shape_cast %86 : vector<1x8x4xbf16> to vector<8x4xbf16>
    %c0_56 = arith.constant 0 : index
    %c0_57 = arith.constant 0 : index
    %c16_58 = arith.constant 16 : index
    %88 = vector.load %arg4[%c0_56, %c0_57, %c16_58] : memref<1x8x32xbf16, #tpu.memory_space<vmem>>, vector<1x8x4xbf16>
    %89 = vector.shape_cast %88 : vector<1x8x4xbf16> to vector<8x4xbf16>
    %cst_59 = arith.constant dense<0.000000e+00> : vector<8x8xf32>
    %90 = tpu.matmul %85, %87, %cst_59 {dimension_numbers = #tpu.dot_dimension_numbers<[1], [1], [0], [0], [0, 0, 1, 0], [], []>} : vector<8x4xbf16>, vector<8x4xbf16>, vector<8x8xf32> -> vector<8x8xf32>
    %cst_60 = arith.constant 5.000000e-01 : f32
    %91 = vector.broadcast %cst_60 : f32 to vector<8x8xf32>
    %92 = arith.mulf %90, %91 : vector<8x8xf32>
    %cst_61 = arith.constant dense<0xFF800000> : vector<8xf32>
    %93 = vector.multi_reduction <maximumf>, %92, %cst_61 [1] : vector<8x8xf32> to vector<8xf32>
    %94 = vector.shape_cast %93 : vector<8xf32> to vector<8x1xf32>
    %95 = vector.broadcast %94 : vector<8x1xf32> to vector<8x8xf32>
    %96 = arith.subf %92, %95 : vector<8x8xf32>
    %97 = math.exp %96 : vector<8x8xf32>
    %cst_62 = arith.constant dense<0.000000e+00> : vector<8xf32>
    %98 = vector.multi_reduction <add>, %97, %cst_62 [1] : vector<8x8xf32> to vector<8xf32>
    %99 = vector.shape_cast %98 : vector<8xf32> to vector<8x1xf32>
    %100 = tpu.reciprocal %99 {approx = true} : vector<8x1xf32> -> vector<8x1xf32>
    %101 = vector.broadcast %100 : vector<8x1xf32> to vector<8x8xf32>
    %102 = arith.mulf %97, %101 : vector<8x8xf32>
    %103 = arith.truncf %102 : vector<8x8xf32> to vector<8x8xbf16>
    %cst_63 = arith.constant dense<0.000000e+00> : vector<8x4xf32>
    %104 = tpu.matmul %103, %89, %cst_63 {dimension_numbers = #tpu.dot_dimension_numbers<[1], [0], [0], [1], [0, 0, 1, 1], [], []>} : vector<8x8xbf16>, vector<8x4xbf16>, vector<8x4xf32> -> vector<8x4xf32>
    %c0_64 = arith.constant 0 : index
    %c0_65 = arith.constant 0 : index
    %c20 = arith.constant 20 : index
    %105 = vector.load %arg2[%c0_64, %c0_65, %c20] : memref<1x8x32xbf16, #tpu.memory_space<vmem>>, vector<1x8x4xbf16>
    %106 = vector.shape_cast %105 : vector<1x8x4xbf16> to vector<8x4xbf16>
    %c0_66 = arith.constant 0 : index
    %c0_67 = arith.constant 0 : index
    %c20_68 = arith.constant 20 : index
    %107 = vector.load %arg3[%c0_66, %c0_67, %c20_68] : memref<1x8x32xbf16, #tpu.memory_space<vmem>>, vector<1x8x4xbf16>
    %108 = vector.shape_cast %107 : vector<1x8x4xbf16> to vector<8x4xbf16>
    %c0_69 = arith.constant 0 : index
    %c0_70 = arith.constant 0 : index
    %c20_71 = arith.constant 20 : index
    %109 = vector.load %arg4[%c0_69, %c0_70, %c20_71] : memref<1x8x32xbf16, #tpu.memory_space<vmem>>, vector<1x8x4xbf16>
    %110 = vector.shape_cast %109 : vector<1x8x4xbf16> to vector<8x4xbf16>
    %cst_72 = arith.constant dense<0.000000e+00> : vector<8x8xf32>
    %111 = tpu.matmul %106, %108, %cst_72 {dimension_numbers = #tpu.dot_dimension_numbers<[1], [1], [0], [0], [0, 0, 1, 0], [], []>} : vector<8x4xbf16>, vector<8x4xbf16>, vector<8x8xf32> -> vector<8x8xf32>
    %cst_73 = arith.constant 5.000000e-01 : f32
    %112 = vector.broadcast %cst_73 : f32 to vector<8x8xf32>
    %113 = arith.mulf %111, %112 : vector<8x8xf32>
    %cst_74 = arith.constant dense<0xFF800000> : vector<8xf32>
    %114 = vector.multi_reduction <maximumf>, %113, %cst_74 [1] : vector<8x8xf32> to vector<8xf32>
    %115 = vector.shape_cast %114 : vector<8xf32> to vector<8x1xf32>
    %116 = vector.broadcast %115 : vector<8x1xf32> to vector<8x8xf32>
    %117 = arith.subf %113, %116 : vector<8x8xf32>
    %118 = math.exp %117 : vector<8x8xf32>
    %cst_75 = arith.constant dense<0.000000e+00> : vector<8xf32>
    %119 = vector.multi_reduction <add>, %118, %cst_75 [1] : vector<8x8xf32> to vector<8xf32>
    %120 = vector.shape_cast %119 : vector<8xf32> to vector<8x1xf32>
    %121 = tpu.reciprocal %120 {approx = true} : vector<8x1xf32> -> vector<8x1xf32>
    %122 = vector.broadcast %121 : vector<8x1xf32> to vector<8x8xf32>
    %123 = arith.mulf %118, %122 : vector<8x8xf32>
    %124 = arith.truncf %123 : vector<8x8xf32> to vector<8x8xbf16>
    %cst_76 = arith.constant dense<0.000000e+00> : vector<8x4xf32>
    %125 = tpu.matmul %124, %110, %cst_76 {dimension_numbers = #tpu.dot_dimension_numbers<[1], [0], [0], [1], [0, 0, 1, 1], [], []>} : vector<8x8xbf16>, vector<8x4xbf16>, vector<8x4xf32> -> vector<8x4xf32>
    %c0_77 = arith.constant 0 : index
    %c0_78 = arith.constant 0 : index
    %c24 = arith.constant 24 : index
    %126 = vector.load %arg2[%c0_77, %c0_78, %c24] : memref<1x8x32xbf16, #tpu.memory_space<vmem>>, vector<1x8x4xbf16>
    %127 = vector.shape_cast %126 : vector<1x8x4xbf16> to vector<8x4xbf16>
    %c0_79 = arith.constant 0 : index
    %c0_80 = arith.constant 0 : index
    %c24_81 = arith.constant 24 : index
    %128 = vector.load %arg3[%c0_79, %c0_80, %c24_81] : memref<1x8x32xbf16, #tpu.memory_space<vmem>>, vector<1x8x4xbf16>
    %129 = vector.shape_cast %128 : vector<1x8x4xbf16> to vector<8x4xbf16>
    %c0_82 = arith.constant 0 : index
    %c0_83 = arith.constant 0 : index
    %c24_84 = arith.constant 24 : index
    %130 = vector.load %arg4[%c0_82, %c0_83, %c24_84] : memref<1x8x32xbf16, #tpu.memory_space<vmem>>, vector<1x8x4xbf16>
    %131 = vector.shape_cast %130 : vector<1x8x4xbf16> to vector<8x4xbf16>
    %cst_85 = arith.constant dense<0.000000e+00> : vector<8x8xf32>
    %132 = tpu.matmul %127, %129, %cst_85 {dimension_numbers = #tpu.dot_dimension_numbers<[1], [1], [0], [0], [0, 0, 1, 0], [], []>} : vector<8x4xbf16>, vector<8x4xbf16>, vector<8x8xf32> -> vector<8x8xf32>
    %cst_86 = arith.constant 5.000000e-01 : f32
    %133 = vector.broadcast %cst_86 : f32 to vector<8x8xf32>
    %134 = arith.mulf %132, %133 : vector<8x8xf32>
    %cst_87 = arith.constant dense<0xFF800000> : vector<8xf32>
    %135 = vector.multi_reduction <maximumf>, %134, %cst_87 [1] : vector<8x8xf32> to vector<8xf32>
    %136 = vector.shape_cast %135 : vector<8xf32> to vector<8x1xf32>
    %137 = vector.broadcast %136 : vector<8x1xf32> to vector<8x8xf32>
    %138 = arith.subf %134, %137 : vector<8x8xf32>
    %139 = math.exp %138 : vector<8x8xf32>
    %cst_88 = arith.constant dense<0.000000e+00> : vector<8xf32>
    %140 = vector.multi_reduction <add>, %139, %cst_88 [1] : vector<8x8xf32> to vector<8xf32>
    %141 = vector.shape_cast %140 : vector<8xf32> to vector<8x1xf32>
    %142 = tpu.reciprocal %141 {approx = true} : vector<8x1xf32> -> vector<8x1xf32>
    %143 = vector.broadcast %142 : vector<8x1xf32> to vector<8x8xf32>
    %144 = arith.mulf %139, %143 : vector<8x8xf32>
    %145 = arith.truncf %144 : vector<8x8xf32> to vector<8x8xbf16>
    %cst_89 = arith.constant dense<0.000000e+00> : vector<8x4xf32>
    %146 = tpu.matmul %145, %131, %cst_89 {dimension_numbers = #tpu.dot_dimension_numbers<[1], [0], [0], [1], [0, 0, 1, 1], [], []>} : vector<8x8xbf16>, vector<8x4xbf16>, vector<8x4xf32> -> vector<8x4xf32>
    %c0_90 = arith.constant 0 : index
    %c0_91 = arith.constant 0 : index
    %c28 = arith.constant 28 : index
    %147 = vector.load %arg2[%c0_90, %c0_91, %c28] : memref<1x8x32xbf16, #tpu.memory_space<vmem>>, vector<1x8x4xbf16>
    %148 = vector.shape_cast %147 : vector<1x8x4xbf16> to vector<8x4xbf16>
    %c0_92 = arith.constant 0 : index
    %c0_93 = arith.constant 0 : index
    %c28_94 = arith.constant 28 : index
    %149 = vector.load %arg3[%c0_92, %c0_93, %c28_94] : memref<1x8x32xbf16, #tpu.memory_space<vmem>>, vector<1x8x4xbf16>
    %150 = vector.shape_cast %149 : vector<1x8x4xbf16> to vector<8x4xbf16>
    %c0_95 = arith.constant 0 : index
    %c0_96 = arith.constant 0 : index
    %c28_97 = arith.constant 28 : index
    %151 = vector.load %arg4[%c0_95, %c0_96, %c28_97] : memref<1x8x32xbf16, #tpu.memory_space<vmem>>, vector<1x8x4xbf16>
    %152 = vector.shape_cast %151 : vector<1x8x4xbf16> to vector<8x4xbf16>
    %cst_98 = arith.constant dense<0.000000e+00> : vector<8x8xf32>
    %153 = tpu.matmul %148, %150, %cst_98 {dimension_numbers = #tpu.dot_dimension_numbers<[1], [1], [0], [0], [0, 0, 1, 0], [], []>} : vector<8x4xbf16>, vector<8x4xbf16>, vector<8x8xf32> -> vector<8x8xf32>
    %cst_99 = arith.constant 5.000000e-01 : f32
    %154 = vector.broadcast %cst_99 : f32 to vector<8x8xf32>
    %155 = arith.mulf %153, %154 : vector<8x8xf32>
    %cst_100 = arith.constant dense<0xFF800000> : vector<8xf32>
    %156 = vector.multi_reduction <maximumf>, %155, %cst_100 [1] : vector<8x8xf32> to vector<8xf32>
    %157 = vector.shape_cast %156 : vector<8xf32> to vector<8x1xf32>
    %158 = vector.broadcast %157 : vector<8x1xf32> to vector<8x8xf32>
    %159 = arith.subf %155, %158 : vector<8x8xf32>
    %160 = math.exp %159 : vector<8x8xf32>
    %cst_101 = arith.constant dense<0.000000e+00> : vector<8xf32>
    %161 = vector.multi_reduction <add>, %160, %cst_101 [1] : vector<8x8xf32> to vector<8xf32>
    %162 = vector.shape_cast %161 : vector<8xf32> to vector<8x1xf32>
    %163 = tpu.reciprocal %162 {approx = true} : vector<8x1xf32> -> vector<8x1xf32>
    %164 = vector.broadcast %163 : vector<8x1xf32> to vector<8x8xf32>
    %165 = arith.mulf %160, %164 : vector<8x8xf32>
    %166 = arith.truncf %165 : vector<8x8xf32> to vector<8x8xbf16>
    %cst_102 = arith.constant dense<0.000000e+00> : vector<8x4xf32>
    %167 = tpu.matmul %166, %152, %cst_102 {dimension_numbers = #tpu.dot_dimension_numbers<[1], [0], [0], [1], [0, 0, 1, 1], [], []>} : vector<8x8xbf16>, vector<8x4xbf16>, vector<8x4xf32> -> vector<8x4xf32>
    %168 = tpu.concatenate %20, %41, %62, %83, %104, %125, %146, %167 in 1 : vector<8x4xf32>, vector<8x4xf32>, vector<8x4xf32>, vector<8x4xf32>, vector<8x4xf32>, vector<8x4xf32>, vector<8x4xf32>, vector<8x4xf32> -> vector<8x32xf32>
    %169 = arith.truncf %168 : vector<8x32xf32> to vector<8x32xbf16>
    %c0_103 = arith.constant 0 : index
    %c0_104 = arith.constant 0 : index
    %c0_105 = arith.constant 0 : index
    %170 = vector.load %arg5[%c0_103, %c0_104, %c0_105] : memref<1x8x32xbf16, #tpu.memory_space<vmem>>, vector<1x8x32xbf16>
    %171 = vector.shape_cast %170 : vector<1x8x32xbf16> to vector<8x32xbf16>
    %172 = vector.shape_cast %169 : vector<8x32xbf16> to vector<1x8x32xbf16>
    tpu.vector_store %arg5[%c0_103, %c0_104, %c0_105], %172 {strides = array<i32>} : memref<1x8x32xbf16, #tpu.memory_space<vmem>>, vector<1x8x32xbf16>,
    return
  }
  func.func @transform_0(%arg0: i32, %arg1: i32) -> (i32, i32, i32) {
    %c0_i32 = arith.constant 0 : i32
    %c0_i32_0 = arith.constant 0 : i32
    return %arg0, %c0_i32, %arg1 : i32, i32, i32
  }
  func.func @transform_1(%arg0: i32, %arg1: i32) -> (i32, i32, i32) {
    %c0_i32 = arith.constant 0 : i32
    %c0_i32_0 = arith.constant 0 : i32
    return %arg0, %c0_i32, %arg1 : i32, i32, i32
  }
  func.func @transform_2(%arg0: i32, %arg1: i32) -> (i32, i32, i32) {
    %c0_i32 = arith.constant 0 : i32
    %c0_i32_0 = arith.constant 0 : i32
    return %arg0, %c0_i32, %arg1 : i32, i32, i32
  }
  func.func @transform_3(%arg0: i32, %arg1: i32) -> (i32, i32, i32) {
    %c0_i32 = arith.constant 0 : i32
    %c0_i32_0 = arith.constant 0 : i32
    return %arg0, %c0_i32, %arg1 : i32, i32, i32
  }
}

module attributes {stable_mosaic.version = 11 : i64} {
  func.func @proj_ffn_kernel(%arg0: i32, %arg1: memref<16x32xf32, #tpu.memory_space<vmem>>, %arg2: memref<16x32xbf16, #tpu.memory_space<vmem>>, %arg3: memref<32x32xbf16, #tpu.memory_space<vmem>>, %arg4: memref<1x32xf32, #tpu.memory_space<vmem>>, %arg5: memref<1x32xf32, #tpu.memory_space<vmem>>, %arg6: memref<1x32xf32, #tpu.memory_space<vmem>>, %arg7: memref<32x128xbf16, #tpu.memory_space<vmem>>, %arg8: memref<1x128xf32, #tpu.memory_space<vmem>>, %arg9: memref<128x32xbf16, #tpu.memory_space<vmem>>, %arg10: memref<1x32xf32, #tpu.memory_space<vmem>>, %arg11: memref<1x32xf32, #tpu.memory_space<vmem>>, %arg12: memref<1x32xf32, #tpu.memory_space<vmem>>, %arg13: memref<16x32xf32, #tpu.memory_space<vmem>>) attributes {dimension_semantics = [#tpu.dimension_semantics<parallel>], iteration_bounds = array<i64: 1>, scalar_prefetch = 0 : i64, scratch_operands = 0 : i64, tpu.core_type = #tpu.core_type<tc>, window_params = [{transform_indices = @transform_0, window_bounds = array<i64: 16, 32>}, {transform_indices = @transform_1, window_bounds = array<i64: 16, 32>}, {pipeline_mode = #tpu.pipeline_mode<synchronous>, transform_indices = @transform_2, window_bounds = array<i64: 32, 32>}, {pipeline_mode = #tpu.pipeline_mode<synchronous>, transform_indices = @transform_3, window_bounds = array<i64: 1, 32>}, {pipeline_mode = #tpu.pipeline_mode<synchronous>, transform_indices = @transform_4, window_bounds = array<i64: 1, 32>}, {pipeline_mode = #tpu.pipeline_mode<synchronous>, transform_indices = @transform_5, window_bounds = array<i64: 1, 32>}, {pipeline_mode = #tpu.pipeline_mode<synchronous>, transform_indices = @transform_6, window_bounds = array<i64: 32, 128>}, {pipeline_mode = #tpu.pipeline_mode<synchronous>, transform_indices = @transform_7, window_bounds = array<i64: 1, 128>}, {pipeline_mode = #tpu.pipeline_mode<synchronous>, transform_indices = @transform_8, window_bounds = array<i64: 128, 32>}, {pipeline_mode = #tpu.pipeline_mode<synchronous>, transform_indices = @transform_9, window_bounds = array<i64: 1, 32>}, {pipeline_mode = #tpu.pipeline_mode<synchronous>, transform_indices = @transform_10, window_bounds = array<i64: 1, 32>}, {pipeline_mode = #tpu.pipeline_mode<synchronous>, transform_indices = @transform_11, window_bounds = array<i64: 1, 32>}, {transform_indices = @transform_12, window_bounds = array<i64: 16, 32>}]} {
    %c0 = arith.constant 0 : index
    %c0_0 = arith.constant 0 : index
    %0 = vector.load %arg1[%c0, %c0_0] : memref<16x32xf32, #tpu.memory_space<vmem>>, vector<16x32xf32>
    %c0_1 = arith.constant 0 : index
    %c0_2 = arith.constant 0 : index
    %1 = vector.load %arg2[%c0_1, %c0_2] : memref<16x32xbf16, #tpu.memory_space<vmem>>, vector<16x32xbf16>
    %c0_3 = arith.constant 0 : index
    %c0_4 = arith.constant 0 : index
    %2 = vector.load %arg3[%c0_3, %c0_4] : memref<32x32xbf16, #tpu.memory_space<vmem>>, vector<32x32xbf16>
    %cst = arith.constant dense<0.000000e+00> : vector<16x32xf32>
    %3 = tpu.matmul %1, %2, %cst {dimension_numbers = #tpu.dot_dimension_numbers<[1], [0], [0], [1], [0, 0, 1, 1], [], []>} : vector<16x32xbf16>, vector<32x32xbf16>, vector<16x32xf32> -> vector<16x32xf32>
    %c0_5 = arith.constant 0 : index
    %c0_6 = arith.constant 0 : index
    %4 = vector.load %arg4[%c0_5, %c0_6] : memref<1x32xf32, #tpu.memory_space<vmem>>, vector<1x32xf32>
    %5 = vector.broadcast %4 : vector<1x32xf32> to vector<16x32xf32>
    %6 = arith.addf %3, %5 : vector<16x32xf32>
    %cst_7 = arith.constant dense<0.000000e+00> : vector<16xf32>
    %7 = vector.multi_reduction <add>, %6, %cst_7 [1] : vector<16x32xf32> to vector<16xf32>
    %8 = vector.shape_cast %7 : vector<16xf32> to vector<16x1xf32>
    %cst_8 = arith.constant 3.200000e+01 : f32
    %9 = vector.broadcast %cst_8 : f32 to vector<16x1xf32>
    %10 = arith.divf %8, %9 : vector<16x1xf32>
    %11 = vector.broadcast %10 : vector<16x1xf32> to vector<16x32xf32>
    %12 = arith.subf %6, %11 : vector<16x32xf32>
    %13 = arith.mulf %12, %12 : vector<16x32xf32>
    %cst_9 = arith.constant dense<0.000000e+00> : vector<16xf32>
    %14 = vector.multi_reduction <add>, %13, %cst_9 [1] : vector<16x32xf32> to vector<16xf32>
    %15 = vector.shape_cast %14 : vector<16xf32> to vector<16x1xf32>
    %cst_10 = arith.constant 3.200000e+01 : f32
    %16 = vector.broadcast %cst_10 : f32 to vector<16x1xf32>
    %17 = arith.divf %15, %16 : vector<16x1xf32>
    %18 = vector.broadcast %10 : vector<16x1xf32> to vector<16x32xf32>
    %19 = arith.subf %6, %18 : vector<16x32xf32>
    %cst_11 = arith.constant 9.99999974E-6 : f32
    %20 = vector.broadcast %cst_11 : f32 to vector<16x1xf32>
    %21 = arith.addf %17, %20 : vector<16x1xf32>
    %22 = math.rsqrt %21 : vector<16x1xf32>
    %23 = vector.broadcast %22 : vector<16x1xf32> to vector<16x32xf32>
    %24 = arith.mulf %19, %23 : vector<16x32xf32>
    %c0_12 = arith.constant 0 : index
    %c0_13 = arith.constant 0 : index
    %25 = vector.load %arg5[%c0_12, %c0_13] : memref<1x32xf32, #tpu.memory_space<vmem>>, vector<1x32xf32>
    %26 = vector.broadcast %25 : vector<1x32xf32> to vector<16x32xf32>
    %27 = arith.mulf %24, %26 : vector<16x32xf32>
    %28 = arith.addf %0, %27 : vector<16x32xf32>
    %c0_14 = arith.constant 0 : index
    %c0_15 = arith.constant 0 : index
    %29 = vector.load %arg6[%c0_14, %c0_15] : memref<1x32xf32, #tpu.memory_space<vmem>>, vector<1x32xf32>
    %30 = vector.broadcast %29 : vector<1x32xf32> to vector<16x32xf32>
    %31 = arith.addf %28, %30 : vector<16x32xf32>
    %32 = arith.truncf %31 : vector<16x32xf32> to vector<16x32xbf16>
    %cst_16 = arith.constant 0.000000e+00 : f32
    %33 = vector.broadcast %cst_16 : f32 to vector<16x32xf32>
    %c0_17 = arith.constant 0 : index
    %c0_18 = arith.constant 0 : index
    %34 = vector.load %arg7[%c0_17, %c0_18] : memref<32x128xbf16, #tpu.memory_space<vmem>>, vector<32x128xbf16>
    %cst_19 = arith.constant dense<0.000000e+00> : vector<16x128xf32>
    %35 = tpu.matmul %32, %34, %cst_19 {dimension_numbers = #tpu.dot_dimension_numbers<[1], [0], [0], [1], [0, 0, 1, 1], [], []>} : vector<16x32xbf16>, vector<32x128xbf16>, vector<16x128xf32> -> vector<16x128xf32>
    %c0_20 = arith.constant 0 : index
    %c0_21 = arith.constant 0 : index
    %36 = vector.load %arg8[%c0_20, %c0_21] : memref<1x128xf32, #tpu.memory_space<vmem>>, vector<1x128xf32>
    %37 = vector.broadcast %36 : vector<1x128xf32> to vector<16x128xf32>
    %38 = arith.addf %35, %37 : vector<16x128xf32>
    %cst_22 = arith.constant 5.000000e-01 : f32
    %39 = vector.broadcast %cst_22 : f32 to vector<16x128xf32>
    %40 = arith.mulf %39, %38 : vector<16x128xf32>
    %cst_23 = arith.constant 0.707106769 : f32
    %41 = vector.broadcast %cst_23 : f32 to vector<16x128xf32>
    %42 = arith.mulf %38, %41 : vector<16x128xf32>
    %43 = math.erf %42 : vector<16x128xf32>
    %cst_24 = arith.constant 1.000000e+00 : f32
    %44 = vector.broadcast %cst_24 : f32 to vector<16x128xf32>
    %45 = arith.addf %44, %43 : vector<16x128xf32>
    %46 = arith.mulf %40, %45 : vector<16x128xf32>
    %47 = arith.truncf %46 : vector<16x128xf32> to vector<16x128xbf16>
    %c0_25 = arith.constant 0 : index
    %c0_26 = arith.constant 0 : index
    %48 = vector.load %arg9[%c0_25, %c0_26] : memref<128x32xbf16, #tpu.memory_space<vmem>>, vector<128x32xbf16>
    %cst_27 = arith.constant dense<0.000000e+00> : vector<16x32xf32>
    %49 = tpu.matmul %47, %48, %cst_27 {dimension_numbers = #tpu.dot_dimension_numbers<[1], [0], [0], [1], [0, 0, 1, 1], [], []>} : vector<16x128xbf16>, vector<128x32xbf16>, vector<16x32xf32> -> vector<16x32xf32>
    %50 = arith.addf %33, %49 : vector<16x32xf32>
    %c0_28 = arith.constant 0 : index
    %c0_29 = arith.constant 0 : index
    %51 = vector.load %arg10[%c0_28, %c0_29] : memref<1x32xf32, #tpu.memory_space<vmem>>, vector<1x32xf32>
    %52 = vector.broadcast %51 : vector<1x32xf32> to vector<16x32xf32>
    %53 = arith.addf %50, %52 : vector<16x32xf32>
    %cst_30 = arith.constant dense<0.000000e+00> : vector<16xf32>
    %54 = vector.multi_reduction <add>, %53, %cst_30 [1] : vector<16x32xf32> to vector<16xf32>
    %55 = vector.shape_cast %54 : vector<16xf32> to vector<16x1xf32>
    %cst_31 = arith.constant 3.200000e+01 : f32
    %56 = vector.broadcast %cst_31 : f32 to vector<16x1xf32>
    %57 = arith.divf %55, %56 : vector<16x1xf32>
    %58 = vector.broadcast %57 : vector<16x1xf32> to vector<16x32xf32>
    %59 = arith.subf %53, %58 : vector<16x32xf32>
    %60 = arith.mulf %59, %59 : vector<16x32xf32>
    %cst_32 = arith.constant dense<0.000000e+00> : vector<16xf32>
    %61 = vector.multi_reduction <add>, %60, %cst_32 [1] : vector<16x32xf32> to vector<16xf32>
    %62 = vector.shape_cast %61 : vector<16xf32> to vector<16x1xf32>
    %cst_33 = arith.constant 3.200000e+01 : f32
    %63 = vector.broadcast %cst_33 : f32 to vector<16x1xf32>
    %64 = arith.divf %62, %63 : vector<16x1xf32>
    %65 = vector.broadcast %57 : vector<16x1xf32> to vector<16x32xf32>
    %66 = arith.subf %53, %65 : vector<16x32xf32>
    %cst_34 = arith.constant 9.99999974E-6 : f32
    %67 = vector.broadcast %cst_34 : f32 to vector<16x1xf32>
    %68 = arith.addf %64, %67 : vector<16x1xf32>
    %69 = math.rsqrt %68 : vector<16x1xf32>
    %70 = vector.broadcast %69 : vector<16x1xf32> to vector<16x32xf32>
    %71 = arith.mulf %66, %70 : vector<16x32xf32>
    %c0_35 = arith.constant 0 : index
    %c0_36 = arith.constant 0 : index
    %72 = vector.load %arg11[%c0_35, %c0_36] : memref<1x32xf32, #tpu.memory_space<vmem>>, vector<1x32xf32>
    %73 = vector.broadcast %72 : vector<1x32xf32> to vector<16x32xf32>
    %74 = arith.mulf %71, %73 : vector<16x32xf32>
    %75 = arith.addf %31, %74 : vector<16x32xf32>
    %c0_37 = arith.constant 0 : index
    %c0_38 = arith.constant 0 : index
    %76 = vector.load %arg12[%c0_37, %c0_38] : memref<1x32xf32, #tpu.memory_space<vmem>>, vector<1x32xf32>
    %77 = vector.broadcast %76 : vector<1x32xf32> to vector<16x32xf32>
    %78 = arith.addf %75, %77 : vector<16x32xf32>
    %c0_39 = arith.constant 0 : index
    %c0_40 = arith.constant 0 : index
    %79 = vector.load %arg13[%c0_39, %c0_40] : memref<16x32xf32, #tpu.memory_space<vmem>>, vector<16x32xf32>
    tpu.vector_store %arg13[%c0_39, %c0_40], %78 {strides = array<i32>} : memref<16x32xf32, #tpu.memory_space<vmem>>, vector<16x32xf32>,
    return
  }
  func.func @transform_0(%arg0: i32) -> (i32, i32) {
    %c0_i32 = arith.constant 0 : i32
    %c0_i32_0 = arith.constant 0 : i32
    return %arg0, %c0_i32 : i32, i32
  }
  func.func @transform_1(%arg0: i32) -> (i32, i32) {
    %c0_i32 = arith.constant 0 : i32
    %c0_i32_0 = arith.constant 0 : i32
    return %arg0, %c0_i32 : i32, i32
  }
  func.func @transform_2(%arg0: i32) -> (i32, i32) {
    %c0_i32 = arith.constant 0 : i32
    %c0_i32_0 = arith.constant 0 : i32
    %c0_i32_1 = arith.constant 0 : i32
    return %c0_i32, %c0_i32_0 : i32, i32
  }
  func.func @transform_3(%arg0: i32) -> (i32, i32) {
    %c0_i32 = arith.constant 0 : i32
    %c0_i32_0 = arith.constant 0 : i32
    %c0_i32_1 = arith.constant 0 : i32
    return %c0_i32, %c0_i32_0 : i32, i32
  }
  func.func @transform_4(%arg0: i32) -> (i32, i32) {
    %c0_i32 = arith.constant 0 : i32
    %c0_i32_0 = arith.constant 0 : i32
    %c0_i32_1 = arith.constant 0 : i32
    return %c0_i32, %c0_i32_0 : i32, i32
  }
  func.func @transform_5(%arg0: i32) -> (i32, i32) {
    %c0_i32 = arith.constant 0 : i32
    %c0_i32_0 = arith.constant 0 : i32
    %c0_i32_1 = arith.constant 0 : i32
    return %c0_i32, %c0_i32_0 : i32, i32
  }
  func.func @transform_6(%arg0: i32) -> (i32, i32) {
    %c0_i32 = arith.constant 0 : i32
    %c0_i32_0 = arith.constant 0 : i32
    %c0_i32_1 = arith.constant 0 : i32
    return %c0_i32, %c0_i32_0 : i32, i32
  }
  func.func @transform_7(%arg0: i32) -> (i32, i32) {
    %c0_i32 = arith.constant 0 : i32
    %c0_i32_0 = arith.constant 0 : i32
    %c0_i32_1 = arith.constant 0 : i32
    return %c0_i32, %c0_i32_0 : i32, i32
  }
  func.func @transform_8(%arg0: i32) -> (i32, i32) {
    %c0_i32 = arith.constant 0 : i32
    %c0_i32_0 = arith.constant 0 : i32
    %c0_i32_1 = arith.constant 0 : i32
    return %c0_i32, %c0_i32_0 : i32, i32
  }
  func.func @transform_9(%arg0: i32) -> (i32, i32) {
    %c0_i32 = arith.constant 0 : i32
    %c0_i32_0 = arith.constant 0 : i32
    %c0_i32_1 = arith.constant 0 : i32
    return %c0_i32, %c0_i32_0 : i32, i32
  }
  func.func @transform_10(%arg0: i32) -> (i32, i32) {
    %c0_i32 = arith.constant 0 : i32
    %c0_i32_0 = arith.constant 0 : i32
    %c0_i32_1 = arith.constant 0 : i32
    return %c0_i32, %c0_i32_0 : i32, i32
  }
  func.func @transform_11(%arg0: i32) -> (i32, i32) {
    %c0_i32 = arith.constant 0 : i32
    %c0_i32_0 = arith.constant 0 : i32
    %c0_i32_1 = arith.constant 0 : i32
    return %c0_i32, %c0_i32_0 : i32, i32
  }
  func.func @transform_12(%arg0: i32) -> (i32, i32) {
    %c0_i32 = arith.constant 0 : i32
    %c0_i32_0 = arith.constant 0 : i32
    return %arg0, %c0_i32 : i32, i32
  }
}

module attributes {stable_mosaic.version = 11 : i64} {
  func.func @grn_qkv_kernel(%arg0: i32, %arg1: i32, %arg2: memref<1x16x32xbf16, #tpu.memory_space<vmem>>, %arg3: memref<32x32xbf16, #tpu.memory_space<vmem>>, %arg4: memref<1x32xf32, #tpu.memory_space<vmem>>, %arg5: memref<1x32xf32, #tpu.memory_space<vmem>>, %arg6: memref<1x32xf32, #tpu.memory_space<vmem>>, %arg7: memref<32x32xbf16, #tpu.memory_space<vmem>>, %arg8: memref<1x32xf32, #tpu.memory_space<vmem>>, %arg9: memref<1x32xf32, #tpu.memory_space<vmem>>, %arg10: memref<1x32xf32, #tpu.memory_space<vmem>>, %arg11: memref<32x32xbf16, #tpu.memory_space<vmem>>, %arg12: memref<1x32xf32, #tpu.memory_space<vmem>>, %arg13: memref<1x32xf32, #tpu.memory_space<vmem>>, %arg14: memref<1x32xf32, #tpu.memory_space<vmem>>, %arg15: memref<16x32xbf16, #tpu.memory_space<vmem>>, %arg16: memref<16x32xbf16, #tpu.memory_space<vmem>>, %arg17: memref<16x32xbf16, #tpu.memory_space<vmem>>, %arg18: memref<16x32xf32, #tpu.memory_space<vmem>>, %arg19: memref<16x32xf32, #tpu.memory_space<vmem>>, %arg20: memref<16x32xf32, #tpu.memory_space<vmem>>, %arg21: memref<16x32xf32, #tpu.memory_space<vmem>>) attributes {dimension_semantics = [#tpu.dimension_semantics<parallel>, #tpu.dimension_semantics<arbitrary>], iteration_bounds = array<i64: 1, 2>, scalar_prefetch = 0 : i64, scratch_operands = 4 : i64, tpu.core_type = #tpu.core_type<tc>, window_params = [{transform_indices = @transform_0, window_bounds = array<i64: 1, 16, 32>}, {pipeline_mode = #tpu.pipeline_mode<synchronous>, transform_indices = @transform_1, window_bounds = array<i64: 32, 32>}, {pipeline_mode = #tpu.pipeline_mode<synchronous>, transform_indices = @transform_2, window_bounds = array<i64: 1, 32>}, {pipeline_mode = #tpu.pipeline_mode<synchronous>, transform_indices = @transform_3, window_bounds = array<i64: 1, 32>}, {pipeline_mode = #tpu.pipeline_mode<synchronous>, transform_indices = @transform_4, window_bounds = array<i64: 1, 32>}, {pipeline_mode = #tpu.pipeline_mode<synchronous>, transform_indices = @transform_5, window_bounds = array<i64: 32, 32>}, {pipeline_mode = #tpu.pipeline_mode<synchronous>, transform_indices = @transform_6, window_bounds = array<i64: 1, 32>}, {pipeline_mode = #tpu.pipeline_mode<synchronous>, transform_indices = @transform_7, window_bounds = array<i64: 1, 32>}, {pipeline_mode = #tpu.pipeline_mode<synchronous>, transform_indices = @transform_8, window_bounds = array<i64: 1, 32>}, {pipeline_mode = #tpu.pipeline_mode<synchronous>, transform_indices = @transform_9, window_bounds = array<i64: 32, 32>}, {pipeline_mode = #tpu.pipeline_mode<synchronous>, transform_indices = @transform_10, window_bounds = array<i64: 1, 32>}, {pipeline_mode = #tpu.pipeline_mode<synchronous>, transform_indices = @transform_11, window_bounds = array<i64: 1, 32>}, {pipeline_mode = #tpu.pipeline_mode<synchronous>, transform_indices = @transform_12, window_bounds = array<i64: 1, 32>}, {transform_indices = @transform_13, window_bounds = array<i64: 16, 32>}, {transform_indices = @transform_14, window_bounds = array<i64: 16, 32>}, {transform_indices = @transform_15, window_bounds = array<i64: 16, 32>}]} {
    %c0_i32 = arith.constant 0 : i32
    %0 = arith.cmpi eq, %arg1, %c0_i32 : i32
    %1 = arith.extui %0 : i1 to i32
    %c0_i32_0 = arith.constant 0 : i32
    %2 = arith.cmpi ne, %1, %c0_i32_0 : i32
    scf.if %2 {
      %cst_42 = arith.constant 0.000000e+00 : f32
      %60 = vector.broadcast %cst_42 : f32 to vector<16x32xf32>
      %c0_43 = arith.constant 0 : index
      %c0_44 = arith.constant 0 : index
      %61 = vector.load %arg18[%c0_43, %c0_44] : memref<16x32xf32, #tpu.memory_space<vmem>>, vector<16x32xf32>
      tpu.vector_store %arg18[%c0_43, %c0_44], %60 {strides = array<i32>} : memref<16x32xf32, #tpu.memory_space<vmem>>, vector<16x32xf32>,
      %cst_45 = arith.constant 0.000000e+00 : f32
      %62 = vector.broadcast %cst_45 : f32 to vector<16x32xf32>
      %c0_46 = arith.constant 0 : index
      %c0_47 = arith.constant 0 : index
      %63 = vector.load %arg19[%c0_46, %c0_47] : memref<16x32xf32, #tpu.memory_space<vmem>>, vector<16x32xf32>
      tpu.vector_store %arg19[%c0_46, %c0_47], %62 {strides = array<i32>} : memref<16x32xf32, #tpu.memory_space<vmem>>, vector<16x32xf32>,
      %cst_48 = arith.constant 0.000000e+00 : f32
      %64 = vector.broadcast %cst_48 : f32 to vector<16x32xf32>
      %c0_49 = arith.constant 0 : index
      %c0_50 = arith.constant 0 : index
      %65 = vector.load %arg20[%c0_49, %c0_50] : memref<16x32xf32, #tpu.memory_space<vmem>>, vector<16x32xf32>
      tpu.vector_store %arg20[%c0_49, %c0_50], %64 {strides = array<i32>} : memref<16x32xf32, #tpu.memory_space<vmem>>, vector<16x32xf32>,
      %cst_51 = arith.constant 0.000000e+00 : f32
      %66 = vector.broadcast %cst_51 : f32 to vector<16x32xf32>
      %c0_52 = arith.constant 0 : index
      %c0_53 = arith.constant 0 : index
      %67 = vector.load %arg21[%c0_52, %c0_53] : memref<16x32xf32, #tpu.memory_space<vmem>>, vector<16x32xf32>
      tpu.vector_store %arg21[%c0_52, %c0_53], %66 {strides = array<i32>} : memref<16x32xf32, #tpu.memory_space<vmem>>, vector<16x32xf32>,
    } else {
    }
    %c0 = arith.constant 0 : index
    %c0_1 = arith.constant 0 : index
    %c0_2 = arith.constant 0 : index
    %3 = vector.load %arg2[%c0, %c0_1, %c0_2] : memref<1x16x32xbf16, #tpu.memory_space<vmem>>, vector<1x16x32xbf16>
    %4 = vector.shape_cast %3 : vector<1x16x32xbf16> to vector<16x32xbf16>
    %5 = arith.extf %4 : vector<16x32xbf16> to vector<16x32xf32>
    %c0_3 = arith.constant 0 : index
    %c0_4 = arith.constant 0 : index
    %6 = vector.load %arg21[%c0_3, %c0_4] : memref<16x32xf32, #tpu.memory_space<vmem>>, vector<16x32xf32>
    %cst = arith.constant dense<0.000000e+00> : vector<16xf32>
    %7 = vector.multi_reduction <add>, %5, %cst [1] : vector<16x32xf32> to vector<16xf32>
    %8 = vector.shape_cast %7 : vector<16xf32> to vector<16x1xf32>
    %cst_5 = arith.constant 3.200000e+01 : f32
    %9 = vector.broadcast %cst_5 : f32 to vector<16x1xf32>
    %10 = arith.divf %8, %9 : vector<16x1xf32>
    %11 = vector.broadcast %10 : vector<16x1xf32> to vector<16x32xf32>
    %12 = arith.subf %5, %11 : vector<16x32xf32>
    %13 = arith.mulf %12, %12 : vector<16x32xf32>
    %cst_6 = arith.constant dense<0.000000e+00> : vector<16xf32>
    %14 = vector.multi_reduction <add>, %13, %cst_6 [1] : vector<16x32xf32> to vector<16xf32>
    %15 = vector.shape_cast %14 : vector<16xf32> to vector<16x1xf32>
    %cst_7 = arith.constant 3.200000e+01 : f32
    %16 = vector.broadcast %cst_7 : f32 to vector<16x1xf32>
    %17 = arith.divf %15, %16 : vector<16x1xf32>
    %18 = vector.broadcast %10 : vector<16x1xf32> to vector<16x32xf32>
    %19 = arith.subf %5, %18 : vector<16x32xf32>
    %cst_8 = arith.constant 9.99999974E-6 : f32
    %20 = vector.broadcast %cst_8 : f32 to vector<16x1xf32>
    %21 = arith.addf %17, %20 : vector<16x1xf32>
    %22 = math.rsqrt %21 : vector<16x1xf32>
    %23 = vector.broadcast %22 : vector<16x1xf32> to vector<16x32xf32>
    %24 = arith.mulf %19, %23 : vector<16x32xf32>
    %25 = arith.addf %6, %24 : vector<16x32xf32>
    %c0_9 = arith.constant 0 : index
    %c0_10 = arith.constant 0 : index
    %26 = vector.load %arg21[%c0_9, %c0_10] : memref<16x32xf32, #tpu.memory_space<vmem>>, vector<16x32xf32>
    tpu.vector_store %arg21[%c0_9, %c0_10], %25 {strides = array<i32>} : memref<16x32xf32, #tpu.memory_space<vmem>>, vector<16x32xf32>,
    %c0_11 = arith.constant 0 : index
    %c0_12 = arith.constant 0 : index
    %27 = vector.load %arg18[%c0_11, %c0_12] : memref<16x32xf32, #tpu.memory_space<vmem>>, vector<16x32xf32>
    %c0_13 = arith.constant 0 : index
    %c0_14 = arith.constant 0 : index
    %28 = vector.load %arg3[%c0_13, %c0_14] : memref<32x32xbf16, #tpu.memory_space<vmem>>, vector<32x32xbf16>
    %cst_15 = arith.constant dense<0.000000e+00> : vector<16x32xf32>
    %29 = tpu.matmul %4, %28, %cst_15 {dimension_numbers = #tpu.dot_dimension_numbers<[1], [0], [0], [1], [0, 0, 1, 1], [], []>} : vector<16x32xbf16>, vector<32x32xbf16>, vector<16x32xf32> -> vector<16x32xf32>
    %c0_16 = arith.constant 0 : index
    %c0_17 = arith.constant 0 : index
    %30 = vector.load %arg4[%c0_16, %c0_17] : memref<1x32xf32, #tpu.memory_space<vmem>>, vector<1x32xf32>
    %31 = vector.broadcast %30 : vector<1x32xf32> to vector<16x32xf32>
    %32 = arith.addf %29, %31 : vector<16x32xf32>
    %cst_18 = arith.constant 0.000000e+00 : f32
    %33 = vector.broadcast %cst_18 : f32 to vector<16x32xf32>
    %34 = arith.maximumf %32, %33 : vector<16x32xf32>
    %35 = arith.addf %27, %34 : vector<16x32xf32>
    %c0_19 = arith.constant 0 : index
    %c0_20 = arith.constant 0 : index
    %36 = vector.load %arg18[%c0_19, %c0_20] : memref<16x32xf32, #tpu.memory_space<vmem>>, vector<16x32xf32>
    tpu.vector_store %arg18[%c0_19, %c0_20], %35 {strides = array<i32>} : memref<16x32xf32, #tpu.memory_space<vmem>>, vector<16x32xf32>,
    %c0_21 = arith.constant 0 : index
    %c0_22 = arith.constant 0 : index
    %37 = vector.load %arg19[%c0_21, %c0_22] : memref<16x32xf32, #tpu.memory_space<vmem>>, vector<16x32xf32>
    %c0_23 = arith.constant 0 : index
    %c0_24 = arith.constant 0 : index
    %38 = vector.load %arg7[%c0_23, %c0_24] : memref<32x32xbf16, #tpu.memory_space<vmem>>, vector<32x32xbf16>
    %cst_25 = arith.constant dense<0.000000e+00> : vector<16x32xf32>
    %39 = tpu.matmul %4, %38, %cst_25 {dimension_numbers = #tpu.dot_dimension_numbers<[1], [0], [0], [1], [0, 0, 1, 1], [], []>} : vector<16x32xbf16>, vector<32x32xbf16>, vector<16x32xf32> -> vector<16x32xf32>
    %c0_26 = arith.constant 0 : index
    %c0_27 = arith.constant 0 : index
    %40 = vector.load %arg8[%c0_26, %c0_27] : memref<1x32xf32, #tpu.memory_space<vmem>>, vector<1x32xf32>
    %41 = vector.broadcast %40 : vector<1x32xf32> to vector<16x32xf32>
    %42 = arith.addf %39, %41 : vector<16x32xf32>
    %cst_28 = arith.constant 0.000000e+00 : f32
    %43 = vector.broadcast %cst_28 : f32 to vector<16x32xf32>
    %44 = arith.maximumf %42, %43 : vector<16x32xf32>
    %45 = arith.addf %37, %44 : vector<16x32xf32>
    %c0_29 = arith.constant 0 : index
    %c0_30 = arith.constant 0 : index
    %46 = vector.load %arg19[%c0_29, %c0_30] : memref<16x32xf32, #tpu.memory_space<vmem>>, vector<16x32xf32>
    tpu.vector_store %arg19[%c0_29, %c0_30], %45 {strides = array<i32>} : memref<16x32xf32, #tpu.memory_space<vmem>>, vector<16x32xf32>,
    %c0_31 = arith.constant 0 : index
    %c0_32 = arith.constant 0 : index
    %47 = vector.load %arg20[%c0_31, %c0_32] : memref<16x32xf32, #tpu.memory_space<vmem>>, vector<16x32xf32>
    %c0_33 = arith.constant 0 : index
    %c0_34 = arith.constant 0 : index
    %48 = vector.load %arg11[%c0_33, %c0_34] : memref<32x32xbf16, #tpu.memory_space<vmem>>, vector<32x32xbf16>
    %cst_35 = arith.constant dense<0.000000e+00> : vector<16x32xf32>
    %49 = tpu.matmul %4, %48, %cst_35 {dimension_numbers = #tpu.dot_dimension_numbers<[1], [0], [0], [1], [0, 0, 1, 1], [], []>} : vector<16x32xbf16>, vector<32x32xbf16>, vector<16x32xf32> -> vector<16x32xf32>
    %c0_36 = arith.constant 0 : index
    %c0_37 = arith.constant 0 : index
    %50 = vector.load %arg12[%c0_36, %c0_37] : memref<1x32xf32, #tpu.memory_space<vmem>>, vector<1x32xf32>
    %51 = vector.broadcast %50 : vector<1x32xf32> to vector<16x32xf32>
    %52 = arith.addf %49, %51 : vector<16x32xf32>
    %cst_38 = arith.constant 0.000000e+00 : f32
    %53 = vector.broadcast %cst_38 : f32 to vector<16x32xf32>
    %54 = arith.maximumf %52, %53 : vector<16x32xf32>
    %55 = arith.addf %47, %54 : vector<16x32xf32>
    %c0_39 = arith.constant 0 : index
    %c0_40 = arith.constant 0 : index
    %56 = vector.load %arg20[%c0_39, %c0_40] : memref<16x32xf32, #tpu.memory_space<vmem>>, vector<16x32xf32>
    tpu.vector_store %arg20[%c0_39, %c0_40], %55 {strides = array<i32>} : memref<16x32xf32, #tpu.memory_space<vmem>>, vector<16x32xf32>,
    %c1_i32 = arith.constant 1 : i32
    %57 = arith.cmpi eq, %arg1, %c1_i32 : i32
    %58 = arith.extui %57 : i1 to i32
    %c0_i32_41 = arith.constant 0 : i32
    %59 = arith.cmpi ne, %58, %c0_i32_41 : i32
    scf.if %59 {
      %c0_42 = arith.constant 0 : index
      %c0_43 = arith.constant 0 : index
      %60 = vector.load %arg21[%c0_42, %c0_43] : memref<16x32xf32, #tpu.memory_space<vmem>>, vector<16x32xf32>
      %c0_44 = arith.constant 0 : index
      %c0_45 = arith.constant 0 : index
      %61 = vector.load %arg18[%c0_44, %c0_45] : memref<16x32xf32, #tpu.memory_space<vmem>>, vector<16x32xf32>
      %c0_46 = arith.constant 0 : index
      %c0_47 = arith.constant 0 : index
      %62 = vector.load %arg5[%c0_46, %c0_47] : memref<1x32xf32, #tpu.memory_space<vmem>>, vector<1x32xf32>
      %63 = vector.broadcast %62 : vector<1x32xf32> to vector<16x32xf32>
      %64 = arith.mulf %60, %63 : vector<16x32xf32>
      %65 = arith.addf %61, %64 : vector<16x32xf32>
      %c0_48 = arith.constant 0 : index
      %c0_49 = arith.constant 0 : index
      %66 = vector.load %arg6[%c0_48, %c0_49] : memref<1x32xf32, #tpu.memory_space<vmem>>, vector<1x32xf32>
      %cst_50 = arith.constant 2.000000e+00 : f32
      %67 = vector.broadcast %cst_50 : f32 to vector<1x32xf32>
      %68 = arith.mulf %67, %66 : vector<1x32xf32>
      %69 = vector.broadcast %68 : vector<1x32xf32> to vector<16x32xf32>
      %70 = arith.addf %65, %69 : vector<16x32xf32>
      %71 = arith.truncf %70 : vector<16x32xf32> to vector<16x32xbf16>
      %c0_51 = arith.constant 0 : index
      %c0_52 = arith.constant 0 : index
      %72 = vector.load %arg15[%c0_51, %c0_52] : memref<16x32xbf16, #tpu.memory_space<vmem>>, vector<16x32xbf16>
      tpu.vector_store %arg15[%c0_51, %c0_52], %71 {strides = array<i32>} : memref<16x32xbf16, #tpu.memory_space<vmem>>, vector<16x32xbf16>,
      %c0_53 = arith.constant 0 : index
      %c0_54 = arith.constant 0 : index
      %73 = vector.load %arg19[%c0_53, %c0_54] : memref<16x32xf32, #tpu.memory_space<vmem>>, vector<16x32xf32>
      %c0_55 = arith.constant 0 : index
      %c0_56 = arith.constant 0 : index
      %74 = vector.load %arg9[%c0_55, %c0_56] : memref<1x32xf32, #tpu.memory_space<vmem>>, vector<1x32xf32>
      %75 = vector.broadcast %74 : vector<1x32xf32> to vector<16x32xf32>
      %76 = arith.mulf %60, %75 : vector<16x32xf32>
      %77 = arith.addf %73, %76 : vector<16x32xf32>
      %c0_57 = arith.constant 0 : index
      %c0_58 = arith.constant 0 : index
      %78 = vector.load %arg10[%c0_57, %c0_58] : memref<1x32xf32, #tpu.memory_space<vmem>>, vector<1x32xf32>
      %cst_59 = arith.constant 2.000000e+00 : f32
      %79 = vector.broadcast %cst_59 : f32 to vector<1x32xf32>
      %80 = arith.mulf %79, %78 : vector<1x32xf32>
      %81 = vector.broadcast %80 : vector<1x32xf32> to vector<16x32xf32>
      %82 = arith.addf %77, %81 : vector<16x32xf32>
      %83 = arith.truncf %82 : vector<16x32xf32> to vector<16x32xbf16>
      %c0_60 = arith.constant 0 : index
      %c0_61 = arith.constant 0 : index
      %84 = vector.load %arg16[%c0_60, %c0_61] : memref<16x32xbf16, #tpu.memory_space<vmem>>, vector<16x32xbf16>
      tpu.vector_store %arg16[%c0_60, %c0_61], %83 {strides = array<i32>} : memref<16x32xbf16, #tpu.memory_space<vmem>>, vector<16x32xbf16>,
      %c0_62 = arith.constant 0 : index
      %c0_63 = arith.constant 0 : index
      %85 = vector.load %arg20[%c0_62, %c0_63] : memref<16x32xf32, #tpu.memory_space<vmem>>, vector<16x32xf32>
      %c0_64 = arith.constant 0 : index
      %c0_65 = arith.constant 0 : index
      %86 = vector.load %arg13[%c0_64, %c0_65] : memref<1x32xf32, #tpu.memory_space<vmem>>, vector<1x32xf32>
      %87 = vector.broadcast %86 : vector<1x32xf32> to vector<16x32xf32>
      %88 = arith.mulf %60, %87 : vector<16x32xf32>
      %89 = arith.addf %85, %88 : vector<16x32xf32>
      %c0_66 = arith.constant 0 : index
      %c0_67 = arith.constant 0 : index
      %90 = vector.load %arg14[%c0_66, %c0_67] : memref<1x32xf32, #tpu.memory_space<vmem>>, vector<1x32xf32>
      %cst_68 = arith.constant 2.000000e+00 : f32
      %91 = vector.broadcast %cst_68 : f32 to vector<1x32xf32>
      %92 = arith.mulf %91, %90 : vector<1x32xf32>
      %93 = vector.broadcast %92 : vector<1x32xf32> to vector<16x32xf32>
      %94 = arith.addf %89, %93 : vector<16x32xf32>
      %95 = arith.truncf %94 : vector<16x32xf32> to vector<16x32xbf16>
      %c0_69 = arith.constant 0 : index
      %c0_70 = arith.constant 0 : index
      %96 = vector.load %arg17[%c0_69, %c0_70] : memref<16x32xbf16, #tpu.memory_space<vmem>>, vector<16x32xbf16>
      tpu.vector_store %arg17[%c0_69, %c0_70], %95 {strides = array<i32>} : memref<16x32xbf16, #tpu.memory_space<vmem>>, vector<16x32xbf16>,
    } else {
    }
    return
  }
  func.func @transform_0(%arg0: i32, %arg1: i32) -> (i32, i32, i32) {
    %c0_i32 = arith.constant 0 : i32
    %c0_i32_0 = arith.constant 0 : i32
    return %arg1, %arg0, %c0_i32 : i32, i32, i32
  }
  func.func @transform_1(%arg0: i32, %arg1: i32) -> (i32, i32) {
    %c0_i32 = arith.constant 0 : i32
    %c0_i32_0 = arith.constant 0 : i32
    %c0_i32_1 = arith.constant 0 : i32
    return %c0_i32, %c0_i32_0 : i32, i32
  }
  func.func @transform_2(%arg0: i32, %arg1: i32) -> (i32, i32) {
    %c0_i32 = arith.constant 0 : i32
    %c0_i32_0 = arith.constant 0 : i32
    %c0_i32_1 = arith.constant 0 : i32
    return %c0_i32, %c0_i32_0 : i32, i32
  }
  func.func @transform_3(%arg0: i32, %arg1: i32) -> (i32, i32) {
    %c0_i32 = arith.constant 0 : i32
    %c0_i32_0 = arith.constant 0 : i32
    %c0_i32_1 = arith.constant 0 : i32
    return %c0_i32, %c0_i32_0 : i32, i32
  }
  func.func @transform_4(%arg0: i32, %arg1: i32) -> (i32, i32) {
    %c0_i32 = arith.constant 0 : i32
    %c0_i32_0 = arith.constant 0 : i32
    %c0_i32_1 = arith.constant 0 : i32
    return %c0_i32, %c0_i32_0 : i32, i32
  }
  func.func @transform_5(%arg0: i32, %arg1: i32) -> (i32, i32) {
    %c0_i32 = arith.constant 0 : i32
    %c0_i32_0 = arith.constant 0 : i32
    %c0_i32_1 = arith.constant 0 : i32
    return %c0_i32, %c0_i32_0 : i32, i32
  }
  func.func @transform_6(%arg0: i32, %arg1: i32) -> (i32, i32) {
    %c0_i32 = arith.constant 0 : i32
    %c0_i32_0 = arith.constant 0 : i32
    %c0_i32_1 = arith.constant 0 : i32
    return %c0_i32, %c0_i32_0 : i32, i32
  }
  func.func @transform_7(%arg0: i32, %arg1: i32) -> (i32, i32) {
    %c0_i32 = arith.constant 0 : i32
    %c0_i32_0 = arith.constant 0 : i32
    %c0_i32_1 = arith.constant 0 : i32
    return %c0_i32, %c0_i32_0 : i32, i32
  }
  func.func @transform_8(%arg0: i32, %arg1: i32) -> (i32, i32) {
    %c0_i32 = arith.constant 0 : i32
    %c0_i32_0 = arith.constant 0 : i32
    %c0_i32_1 = arith.constant 0 : i32
    return %c0_i32, %c0_i32_0 : i32, i32
  }
  func.func @transform_9(%arg0: i32, %arg1: i32) -> (i32, i32) {
    %c0_i32 = arith.constant 0 : i32
    %c0_i32_0 = arith.constant 0 : i32
    %c0_i32_1 = arith.constant 0 : i32
    return %c0_i32, %c0_i32_0 : i32, i32
  }
  func.func @transform_10(%arg0: i32, %arg1: i32) -> (i32, i32) {
    %c0_i32 = arith.constant 0 : i32
    %c0_i32_0 = arith.constant 0 : i32
    %c0_i32_1 = arith.constant 0 : i32
    return %c0_i32, %c0_i32_0 : i32, i32
  }
  func.func @transform_11(%arg0: i32, %arg1: i32) -> (i32, i32) {
    %c0_i32 = arith.constant 0 : i32
    %c0_i32_0 = arith.constant 0 : i32
    %c0_i32_1 = arith.constant 0 : i32
    return %c0_i32, %c0_i32_0 : i32, i32
  }
  func.func @transform_12(%arg0: i32, %arg1: i32) -> (i32, i32) {
    %c0_i32 = arith.constant 0 : i32
    %c0_i32_0 = arith.constant 0 : i32
    %c0_i32_1 = arith.constant 0 : i32
    return %c0_i32, %c0_i32_0 : i32, i32
  }
  func.func @transform_13(%arg0: i32, %arg1: i32) -> (i32, i32) {
    %c0_i32 = arith.constant 0 : i32
    %c0_i32_0 = arith.constant 0 : i32
    return %arg0, %c0_i32 : i32, i32
  }
  func.func @transform_14(%arg0: i32, %arg1: i32) -> (i32, i32) {
    %c0_i32 = arith.constant 0 : i32
    %c0_i32_0 = arith.constant 0 : i32
    return %arg0, %c0_i32 : i32, i32
  }
  func.func @transform_15(%arg0: i32, %arg1: i32) -> (i32, i32) {
    %c0_i32 = arith.constant 0 : i32
    %c0_i32_0 = arith.constant 0 : i32
    return %arg0, %c0_i32 : i32, i32
  }
}

module attributes {stable_mosaic.version = 11 : i64} {
  func.func @proj_ffn_kernel(%arg0: i32, %arg1: memref<16x32xf32, #tpu.memory_space<vmem>>, %arg2: memref<16x32xbf16, #tpu.memory_space<vmem>>, %arg3: memref<32x32xbf16, #tpu.memory_space<vmem>>, %arg4: memref<1x32xf32, #tpu.memory_space<vmem>>, %arg5: memref<1x32xf32, #tpu.memory_space<vmem>>, %arg6: memref<1x32xf32, #tpu.memory_space<vmem>>, %arg7: memref<32x128xbf16, #tpu.memory_space<vmem>>, %arg8: memref<1x128xf32, #tpu.memory_space<vmem>>, %arg9: memref<128x32xbf16, #tpu.memory_space<vmem>>, %arg10: memref<1x32xf32, #tpu.memory_space<vmem>>, %arg11: memref<1x32xf32, #tpu.memory_space<vmem>>, %arg12: memref<1x32xf32, #tpu.memory_space<vmem>>, %arg13: memref<16x32xf32, #tpu.memory_space<vmem>>) attributes {dimension_semantics = [#tpu.dimension_semantics<parallel>], iteration_bounds = array<i64: 1>, scalar_prefetch = 0 : i64, scratch_operands = 0 : i64, tpu.core_type = #tpu.core_type<tc>, window_params = [{transform_indices = @transform_0, window_bounds = array<i64: 16, 32>}, {transform_indices = @transform_1, window_bounds = array<i64: 16, 32>}, {pipeline_mode = #tpu.pipeline_mode<synchronous>, transform_indices = @transform_2, window_bounds = array<i64: 32, 32>}, {pipeline_mode = #tpu.pipeline_mode<synchronous>, transform_indices = @transform_3, window_bounds = array<i64: 1, 32>}, {pipeline_mode = #tpu.pipeline_mode<synchronous>, transform_indices = @transform_4, window_bounds = array<i64: 1, 32>}, {pipeline_mode = #tpu.pipeline_mode<synchronous>, transform_indices = @transform_5, window_bounds = array<i64: 1, 32>}, {pipeline_mode = #tpu.pipeline_mode<synchronous>, transform_indices = @transform_6, window_bounds = array<i64: 32, 128>}, {pipeline_mode = #tpu.pipeline_mode<synchronous>, transform_indices = @transform_7, window_bounds = array<i64: 1, 128>}, {pipeline_mode = #tpu.pipeline_mode<synchronous>, transform_indices = @transform_8, window_bounds = array<i64: 128, 32>}, {pipeline_mode = #tpu.pipeline_mode<synchronous>, transform_indices = @transform_9, window_bounds = array<i64: 1, 32>}, {pipeline_mode = #tpu.pipeline_mode<synchronous>, transform_indices = @transform_10, window_bounds = array<i64: 1, 32>}, {pipeline_mode = #tpu.pipeline_mode<synchronous>, transform_indices = @transform_11, window_bounds = array<i64: 1, 32>}, {transform_indices = @transform_12, window_bounds = array<i64: 16, 32>}]} {
    %c0 = arith.constant 0 : index
    %c0_0 = arith.constant 0 : index
    %0 = vector.load %arg1[%c0, %c0_0] : memref<16x32xf32, #tpu.memory_space<vmem>>, vector<16x32xf32>
    %c0_1 = arith.constant 0 : index
    %c0_2 = arith.constant 0 : index
    %1 = vector.load %arg2[%c0_1, %c0_2] : memref<16x32xbf16, #tpu.memory_space<vmem>>, vector<16x32xbf16>
    %c0_3 = arith.constant 0 : index
    %c0_4 = arith.constant 0 : index
    %2 = vector.load %arg3[%c0_3, %c0_4] : memref<32x32xbf16, #tpu.memory_space<vmem>>, vector<32x32xbf16>
    %cst = arith.constant dense<0.000000e+00> : vector<16x32xf32>
    %3 = tpu.matmul %1, %2, %cst {dimension_numbers = #tpu.dot_dimension_numbers<[1], [0], [0], [1], [0, 0, 1, 1], [], []>} : vector<16x32xbf16>, vector<32x32xbf16>, vector<16x32xf32> -> vector<16x32xf32>
    %c0_5 = arith.constant 0 : index
    %c0_6 = arith.constant 0 : index
    %4 = vector.load %arg4[%c0_5, %c0_6] : memref<1x32xf32, #tpu.memory_space<vmem>>, vector<1x32xf32>
    %5 = vector.broadcast %4 : vector<1x32xf32> to vector<16x32xf32>
    %6 = arith.addf %3, %5 : vector<16x32xf32>
    %cst_7 = arith.constant dense<0.000000e+00> : vector<16xf32>
    %7 = vector.multi_reduction <add>, %6, %cst_7 [1] : vector<16x32xf32> to vector<16xf32>
    %8 = vector.shape_cast %7 : vector<16xf32> to vector<16x1xf32>
    %cst_8 = arith.constant 3.200000e+01 : f32
    %9 = vector.broadcast %cst_8 : f32 to vector<16x1xf32>
    %10 = arith.divf %8, %9 : vector<16x1xf32>
    %11 = vector.broadcast %10 : vector<16x1xf32> to vector<16x32xf32>
    %12 = arith.subf %6, %11 : vector<16x32xf32>
    %13 = arith.mulf %12, %12 : vector<16x32xf32>
    %cst_9 = arith.constant dense<0.000000e+00> : vector<16xf32>
    %14 = vector.multi_reduction <add>, %13, %cst_9 [1] : vector<16x32xf32> to vector<16xf32>
    %15 = vector.shape_cast %14 : vector<16xf32> to vector<16x1xf32>
    %cst_10 = arith.constant 3.200000e+01 : f32
    %16 = vector.broadcast %cst_10 : f32 to vector<16x1xf32>
    %17 = arith.divf %15, %16 : vector<16x1xf32>
    %18 = vector.broadcast %10 : vector<16x1xf32> to vector<16x32xf32>
    %19 = arith.subf %6, %18 : vector<16x32xf32>
    %cst_11 = arith.constant 9.99999974E-6 : f32
    %20 = vector.broadcast %cst_11 : f32 to vector<16x1xf32>
    %21 = arith.addf %17, %20 : vector<16x1xf32>
    %22 = math.rsqrt %21 : vector<16x1xf32>
    %23 = vector.broadcast %22 : vector<16x1xf32> to vector<16x32xf32>
    %24 = arith.mulf %19, %23 : vector<16x32xf32>
    %c0_12 = arith.constant 0 : index
    %c0_13 = arith.constant 0 : index
    %25 = vector.load %arg5[%c0_12, %c0_13] : memref<1x32xf32, #tpu.memory_space<vmem>>, vector<1x32xf32>
    %26 = vector.broadcast %25 : vector<1x32xf32> to vector<16x32xf32>
    %27 = arith.mulf %24, %26 : vector<16x32xf32>
    %28 = arith.addf %0, %27 : vector<16x32xf32>
    %c0_14 = arith.constant 0 : index
    %c0_15 = arith.constant 0 : index
    %29 = vector.load %arg6[%c0_14, %c0_15] : memref<1x32xf32, #tpu.memory_space<vmem>>, vector<1x32xf32>
    %30 = vector.broadcast %29 : vector<1x32xf32> to vector<16x32xf32>
    %31 = arith.addf %28, %30 : vector<16x32xf32>
    %32 = arith.truncf %31 : vector<16x32xf32> to vector<16x32xbf16>
    %cst_16 = arith.constant 0.000000e+00 : f32
    %33 = vector.broadcast %cst_16 : f32 to vector<16x32xf32>
    %c0_17 = arith.constant 0 : index
    %c0_18 = arith.constant 0 : index
    %34 = vector.load %arg7[%c0_17, %c0_18] : memref<32x128xbf16, #tpu.memory_space<vmem>>, vector<32x128xbf16>
    %cst_19 = arith.constant dense<0.000000e+00> : vector<16x128xf32>
    %35 = tpu.matmul %32, %34, %cst_19 {dimension_numbers = #tpu.dot_dimension_numbers<[1], [0], [0], [1], [0, 0, 1, 1], [], []>} : vector<16x32xbf16>, vector<32x128xbf16>, vector<16x128xf32> -> vector<16x128xf32>
    %c0_20 = arith.constant 0 : index
    %c0_21 = arith.constant 0 : index
    %36 = vector.load %arg8[%c0_20, %c0_21] : memref<1x128xf32, #tpu.memory_space<vmem>>, vector<1x128xf32>
    %37 = vector.broadcast %36 : vector<1x128xf32> to vector<16x128xf32>
    %38 = arith.addf %35, %37 : vector<16x128xf32>
    %cst_22 = arith.constant 5.000000e-01 : f32
    %39 = vector.broadcast %cst_22 : f32 to vector<16x128xf32>
    %40 = arith.mulf %39, %38 : vector<16x128xf32>
    %cst_23 = arith.constant 0.707106769 : f32
    %41 = vector.broadcast %cst_23 : f32 to vector<16x128xf32>
    %42 = arith.mulf %38, %41 : vector<16x128xf32>
    %43 = math.erf %42 : vector<16x128xf32>
    %cst_24 = arith.constant 1.000000e+00 : f32
    %44 = vector.broadcast %cst_24 : f32 to vector<16x128xf32>
    %45 = arith.addf %44, %43 : vector<16x128xf32>
    %46 = arith.mulf %40, %45 : vector<16x128xf32>
    %47 = arith.truncf %46 : vector<16x128xf32> to vector<16x128xbf16>
    %c0_25 = arith.constant 0 : index
    %c0_26 = arith.constant 0 : index
    %48 = vector.load %arg9[%c0_25, %c0_26] : memref<128x32xbf16, #tpu.memory_space<vmem>>, vector<128x32xbf16>
    %cst_27 = arith.constant dense<0.000000e+00> : vector<16x32xf32>
    %49 = tpu.matmul %47, %48, %cst_27 {dimension_numbers = #tpu.dot_dimension_numbers<[1], [0], [0], [1], [0, 0, 1, 1], [], []>} : vector<16x128xbf16>, vector<128x32xbf16>, vector<16x32xf32> -> vector<16x32xf32>
    %50 = arith.addf %33, %49 : vector<16x32xf32>
    %c0_28 = arith.constant 0 : index
    %c0_29 = arith.constant 0 : index
    %51 = vector.load %arg10[%c0_28, %c0_29] : memref<1x32xf32, #tpu.memory_space<vmem>>, vector<1x32xf32>
    %52 = vector.broadcast %51 : vector<1x32xf32> to vector<16x32xf32>
    %53 = arith.addf %50, %52 : vector<16x32xf32>
    %cst_30 = arith.constant dense<0.000000e+00> : vector<16xf32>
    %54 = vector.multi_reduction <add>, %53, %cst_30 [1] : vector<16x32xf32> to vector<16xf32>
    %55 = vector.shape_cast %54 : vector<16xf32> to vector<16x1xf32>
    %cst_31 = arith.constant 3.200000e+01 : f32
    %56 = vector.broadcast %cst_31 : f32 to vector<16x1xf32>
    %57 = arith.divf %55, %56 : vector<16x1xf32>
    %58 = vector.broadcast %57 : vector<16x1xf32> to vector<16x32xf32>
    %59 = arith.subf %53, %58 : vector<16x32xf32>
    %60 = arith.mulf %59, %59 : vector<16x32xf32>
    %cst_32 = arith.constant dense<0.000000e+00> : vector<16xf32>
    %61 = vector.multi_reduction <add>, %60, %cst_32 [1] : vector<16x32xf32> to vector<16xf32>
    %62 = vector.shape_cast %61 : vector<16xf32> to vector<16x1xf32>
    %cst_33 = arith.constant 3.200000e+01 : f32
    %63 = vector.broadcast %cst_33 : f32 to vector<16x1xf32>
    %64 = arith.divf %62, %63 : vector<16x1xf32>
    %65 = vector.broadcast %57 : vector<16x1xf32> to vector<16x32xf32>
    %66 = arith.subf %53, %65 : vector<16x32xf32>
    %cst_34 = arith.constant 9.99999974E-6 : f32
    %67 = vector.broadcast %cst_34 : f32 to vector<16x1xf32>
    %68 = arith.addf %64, %67 : vector<16x1xf32>
    %69 = math.rsqrt %68 : vector<16x1xf32>
    %70 = vector.broadcast %69 : vector<16x1xf32> to vector<16x32xf32>
    %71 = arith.mulf %66, %70 : vector<16x32xf32>
    %c0_35 = arith.constant 0 : index
    %c0_36 = arith.constant 0 : index
    %72 = vector.load %arg11[%c0_35, %c0_36] : memref<1x32xf32, #tpu.memory_space<vmem>>, vector<1x32xf32>
    %73 = vector.broadcast %72 : vector<1x32xf32> to vector<16x32xf32>
    %74 = arith.mulf %71, %73 : vector<16x32xf32>
    %75 = arith.addf %31, %74 : vector<16x32xf32>
    %c0_37 = arith.constant 0 : index
    %c0_38 = arith.constant 0 : index
    %76 = vector.load %arg12[%c0_37, %c0_38] : memref<1x32xf32, #tpu.memory_space<vmem>>, vector<1x32xf32>
    %77 = vector.broadcast %76 : vector<1x32xf32> to vector<16x32xf32>
    %78 = arith.addf %75, %77 : vector<16x32xf32>
    %c0_39 = arith.constant 0 : index
    %c0_40 = arith.constant 0 : index
    %79 = vector.load %arg13[%c0_39, %c0_40] : memref<16x32xf32, #tpu.memory_space<vmem>>, vector<16x32xf32>
    tpu.vector_store %arg13[%c0_39, %c0_40], %78 {strides = array<i32>} : memref<16x32xf32, #tpu.memory_space<vmem>>, vector<16x32xf32>,
    return
  }
  func.func @transform_0(%arg0: i32) -> (i32, i32) {
    %c0_i32 = arith.constant 0 : i32
    %c0_i32_0 = arith.constant 0 : i32
    return %arg0, %c0_i32 : i32, i32
  }
  func.func @transform_1(%arg0: i32) -> (i32, i32) {
    %c0_i32 = arith.constant 0 : i32
    %c0_i32_0 = arith.constant 0 : i32
    return %arg0, %c0_i32 : i32, i32
  }
  func.func @transform_2(%arg0: i32) -> (i32, i32) {
    %c0_i32 = arith.constant 0 : i32
    %c0_i32_0 = arith.constant 0 : i32
    %c0_i32_1 = arith.constant 0 : i32
    return %c0_i32, %c0_i32_0 : i32, i32
  }
  func.func @transform_3(%arg0: i32) -> (i32, i32) {
    %c0_i32 = arith.constant 0 : i32
    %c0_i32_0 = arith.constant 0 : i32
    %c0_i32_1 = arith.constant 0 : i32
    return %c0_i32, %c0_i32_0 : i32, i32
  }
  func.func @transform_4(%arg0: i32) -> (i32, i32) {
    %c0_i32 = arith.constant 0 : i32
    %c0_i32_0 = arith.constant 0 : i32
    %c0_i32_1 = arith.constant 0 : i32
    return %c0_i32, %c0_i32_0 : i32, i32
  }
  func.func @transform_5(%arg0: i32) -> (i32, i32) {
    %c0_i32 = arith.constant 0 : i32
    %c0_i32_0 = arith.constant 0 : i32
    %c0_i32_1 = arith.constant 0 : i32
    return %c0_i32, %c0_i32_0 : i32, i32
  }
  func.func @transform_6(%arg0: i32) -> (i32, i32) {
    %c0_i32 = arith.constant 0 : i32
    %c0_i32_0 = arith.constant 0 : i32
    %c0_i32_1 = arith.constant 0 : i32
    return %c0_i32, %c0_i32_0 : i32, i32
  }
  func.func @transform_7(%arg0: i32) -> (i32, i32) {
    %c0_i32 = arith.constant 0 : i32
    %c0_i32_0 = arith.constant 0 : i32
    %c0_i32_1 = arith.constant 0 : i32
    return %c0_i32, %c0_i32_0 : i32, i32
  }
  func.func @transform_8(%arg0: i32) -> (i32, i32) {
    %c0_i32 = arith.constant 0 : i32
    %c0_i32_0 = arith.constant 0 : i32
    %c0_i32_1 = arith.constant 0 : i32
    return %c0_i32, %c0_i32_0 : i32, i32
  }
  func.func @transform_9(%arg0: i32) -> (i32, i32) {
    %c0_i32 = arith.constant 0 : i32
    %c0_i32_0 = arith.constant 0 : i32
    %c0_i32_1 = arith.constant 0 : i32
    return %c0_i32, %c0_i32_0 : i32, i32
  }
  func.func @transform_10(%arg0: i32) -> (i32, i32) {
    %c0_i32 = arith.constant 0 : i32
    %c0_i32_0 = arith.constant 0 : i32
    %c0_i32_1 = arith.constant 0 : i32
    return %c0_i32, %c0_i32_0 : i32, i32
  }
  func.func @transform_11(%arg0: i32) -> (i32, i32) {
    %c0_i32 = arith.constant 0 : i32
    %c0_i32_0 = arith.constant 0 : i32
    %c0_i32_1 = arith.constant 0 : i32
    return %c0_i32, %c0_i32_0 : i32, i32
  }
  func.func @transform_12(%arg0: i32) -> (i32, i32) {
    %c0_i32 = arith.constant 0 : i32
    %c0_i32_0 = arith.constant 0 : i32
    return %arg0, %c0_i32 : i32, i32
  }
}

</mosaic_0001>

<llo_original>
// kernel: dca_transformer_forward.6
$region0: #{dca_transformer_forward.6}
  #allocation0 [shape = 'u32[]', space=smem, size = 0x4, offset = 0x4, fixed_abs, tag = 'smem constant byte address 0x4 - core index']
  #allocation1 [shape = 'u32[144,128]{1,0:T(1,128)}', space=vmem, size = 0x12000, scoped, tag = 'internal scratch']
  #allocation2 [shape = 'f32[16,32]{1,0:T(8,128)}', space=vmem, size = 0x2000, scoped, tag = 'scratch operand']
  #allocation3 [shape = 'f32[16,32]{1,0:T(8,128)}', space=vmem, size = 0x2000, scoped, tag = 'scratch operand']
  #allocation4 [shape = 'f32[16,32]{1,0:T(8,128)}', space=vmem, size = 0x2000, scoped, tag = 'scratch operand']
  #allocation5 [shape = 'f32[16,32]{1,0:T(8,128)}', space=vmem, size = 0x2000, scoped, tag = 'scratch operand']
  %s0 = inlined_call_operand.vmem [shape: bf16[3,16,32], index: 0, kind: input, shape index: {}]
  %s1 = inlined_call_operand.vmem [shape: bf16[32,32], index: 1, kind: input, shape index: {}]
  %s2 = inlined_call_operand.vmem [shape: f32[1,32], index: 2, kind: input, shape index: {}]
  %s3 = inlined_call_operand.vmem [shape: f32[1,32], index: 3, kind: input, shape index: {}]
  %s4 = inlined_call_operand.vmem [shape: f32[1,32], index: 4, kind: input, shape index: {}]
  %s5 = inlined_call_operand.vmem [shape: bf16[32,32], index: 5, kind: input, shape index: {}]
  %s6 = inlined_call_operand.vmem [shape: f32[1,32], index: 6, kind: input, shape index: {}]
  %s7 = inlined_call_operand.vmem [shape: f32[1,32], index: 7, kind: input, shape index: {}]
  %s8 = inlined_call_operand.vmem [shape: f32[1,32], index: 8, kind: input, shape index: {}]
  %s9 = inlined_call_operand.vmem [shape: bf16[32,32], index: 9, kind: input, shape index: {}]
  %s10 = inlined_call_operand.vmem [shape: f32[1,32], index: 10, kind: input, shape index: {}]
  %s11 = inlined_call_operand.vmem [shape: f32[1,32], index: 11, kind: input, shape index: {}]
  %s12 = inlined_call_operand.vmem [shape: f32[1,32], index: 12, kind: input, shape index: {}]
  %s13 = inlined_call_operand.vmem [shape: bf16[16,32], index: 13, kind: output, shape index: {0}]
  %s14 = inlined_call_operand.vmem [shape: bf16[16,32], index: 14, kind: output, shape index: {1}]
  %s15 = inlined_call_operand.vmem [shape: bf16[16,32], index: 15, kind: output, shape index: {2}]
  %16 = xla_tuple %s13, %s14, %s15
  %s17 = sld [smem:[#allocation0]]
  $region86: #{dca_transformer_forward.6} parent=0
    _
  %s19 = ssub.s32 1, %s17
  %s20 = scalar_select 0, %s19, %s17
  // Predicated region
  $region2: #{dca_transformer_forward.6} parent=0 // pred_check
    _
  $region3: #{dca_transformer_forward.6} parent=0 // pred_check_branch
    %22 = sbr.rel (0) target = $region5
  $region4: #{dca_transformer_forward.6} parent=0 // pred_region
    _
  $region5: #{dca_transformer_forward.6} parent=0 // pred_fallthru
    _
  // Predicated region
  $region6: #{dca_transformer_forward.6} parent=0 // pred_check
    _
  $region7: #{dca_transformer_forward.6} parent=0 // pred_check_branch
    %24 = sbr.rel (0) target = $region9
  $region8: #{dca_transformer_forward.6} parent=0 // pred_region
    _
  $region9: #{dca_transformer_forward.6} parent=0 // pred_fallthru
    _
  // Predicated region
  $region10: #{dca_transformer_forward.6} parent=0 // pred_check
    _
  $region11: #{dca_transformer_forward.6} parent=0 // pred_check_branch
    %26 = sbr.rel (0) target = $region13
  $region12: #{dca_transformer_forward.6} parent=0 // pred_region
    _
  $region13: #{dca_transformer_forward.6} parent=0 // pred_fallthru
    _
  // Predicated region
  $region14: #{dca_transformer_forward.6} parent=0 // pred_check
    _
  $region15: #{dca_transformer_forward.6} parent=0 // pred_check_branch
    %28 = sbr.rel (0) target = $region17
  $region16: #{dca_transformer_forward.6} parent=0 // pred_region
    _
  $region17: #{dca_transformer_forward.6} parent=0 // pred_fallthru
    _
  // Predicated region
  $region18: #{dca_transformer_forward.6} parent=0 // pred_check
    _
  $region19: #{dca_transformer_forward.6} parent=0 // pred_check_branch
    %30 = sbr.rel (0) target = $region21
  $region20: #{dca_transformer_forward.6} parent=0 // pred_region
    _
  $region21: #{dca_transformer_forward.6} parent=0 // pred_fallthru
    _
  // Predicated region
  $region22: #{dca_transformer_forward.6} parent=0 // pred_check
    _
  $region23: #{dca_transformer_forward.6} parent=0 // pred_check_branch
    %32 = sbr.rel (0) target = $region25
  $region24: #{dca_transformer_forward.6} parent=0 // pred_region
    _
  $region25: #{dca_transformer_forward.6} parent=0 // pred_fallthru
    _
  // Predicated region
  $region26: #{dca_transformer_forward.6} parent=0 // pred_check
    _
  $region27: #{dca_transformer_forward.6} parent=0 // pred_check_branch
    %34 = sbr.rel (0) target = $region29
  $region28: #{dca_transformer_forward.6} parent=0 // pred_region
    _
  $region29: #{dca_transformer_forward.6} parent=0 // pred_fallthru
    _
  // Predicated region
  $region30: #{dca_transformer_forward.6} parent=0 // pred_check
    _
  $region31: #{dca_transformer_forward.6} parent=0 // pred_check_branch
    %36 = sbr.rel (0) target = $region33
  $region32: #{dca_transformer_forward.6} parent=0 // pred_region
    _
  $region33: #{dca_transformer_forward.6} parent=0 // pred_fallthru
    _
  // Predicated region
  $region34: #{dca_transformer_forward.6} parent=0 // pred_check
    _
  $region35: #{dca_transformer_forward.6} parent=0 // pred_check_branch
    %38 = sbr.rel (0) target = $region37
  $region36: #{dca_transformer_forward.6} parent=0 // pred_region
    _
  $region37: #{dca_transformer_forward.6} parent=0 // pred_fallthru
    _
  // Predicated region
  $region38: #{dca_transformer_forward.6} parent=0 // pred_check
    _
  $region39: #{dca_transformer_forward.6} parent=0 // pred_check_branch
    %40 = sbr.rel (0) target = $region41
  $region40: #{dca_transformer_forward.6} parent=0 // pred_region
    _
  $region41: #{dca_transformer_forward.6} parent=0 // pred_fallthru
    _
  // Predicated region
  $region42: #{dca_transformer_forward.6} parent=0 // pred_check
    _
  $region43: #{dca_transformer_forward.6} parent=0 // pred_check_branch
    %42 = sbr.rel (0) target = $region45
  $region44: #{dca_transformer_forward.6} parent=0 // pred_region
    _
  $region45: #{dca_transformer_forward.6} parent=0 // pred_fallthru
    _
  // Predicated region
  $region46: #{dca_transformer_forward.6} parent=0 // pred_check
    _
  $region47: #{dca_transformer_forward.6} parent=0 // pred_check_branch
    %44 = sbr.rel (0) target = $region49
  $region48: #{dca_transformer_forward.6} parent=0 // pred_region
    _
  $region49: #{dca_transformer_forward.6} parent=0 // pred_fallthru
    _
  // Predicated region
  $region50: #{dca_transformer_forward.6} parent=0 // pred_check
    _
  $region51: #{dca_transformer_forward.6} parent=0 // pred_check_branch
    %46 = sbr.rel (0) target = $region53
  $region52: #{dca_transformer_forward.6} parent=0 // pred_region
    _
  $region53: #{dca_transformer_forward.6} parent=0 // pred_fallthru
    _
  %p48 = scmp.eq.s32.totalorder 0, 0
  // Predicated region
  $region54: #{dca_transformer_forward.6} parent=0 // pred_check
    %p49 = pneg %p48
  $region55: #{dca_transformer_forward.6} parent=0 // pred_check_branch
    %51 = sbr.rel (%p49) target = $region57
  $region56: #{dca_transformer_forward.6} parent=0 // pred_region
    %vm52 = vcmask 261120
    %53 = vst.msk [vmem:[#allocation2] sm:$0xff] %vm52, 0.0
    %54 = vst.msk [vmem:[#allocation2 + $0x8] sm:$0xff] %vm52, 0.0
    %55 = vst.msk [vmem:[#allocation3] sm:$0xff] %vm52, 0.0
    %56 = vst.msk [vmem:[#allocation3 + $0x8] sm:$0xff] %vm52, 0.0
    %57 = vst.msk [vmem:[#allocation4] sm:$0xff] %vm52, 0.0
    %58 = vst.msk [vmem:[#allocation4 + $0x8] sm:$0xff] %vm52, 0.0
    %59 = vst.msk [vmem:[#allocation5] sm:$0xff] %vm52, 0.0
    %60 = vst.msk [vmem:[#allocation5 + $0x8] sm:$0xff] %vm52, 0.0
  $region57: #{dca_transformer_forward.6} parent=0 // pred_fallthru
    _
  %v61 = vld [vmem:[%s0] sm:$0xf]
  %v62 = vld [vmem:[%s0 + $0x4] sm:$0xf]
  %v63 = vunpack.c.l.bf16 %v61
  %v64 = vunpack.c.l.bf16 %v62
  %v65 = vld [vmem:[#allocation5] sm:$0xff]
  %v66 = vld [vmem:[#allocation5 + $0x8] sm:$0xff]
  %vm67 = vcmask 261120
  %v68 = vsel %vm67, %v63, 0.0
  %69 = vadd.xlane.f32.xlu0 %v68
  %v70 = vpop.xlane.xlu0 %69
  %v71 = vsel %vm67, %v64, 0.0
  %72 = vadd.xlane.f32.xlu0 %v71
  %v73 = vpop.xlane.xlu0 %72
  %v74 = vrcp.pop 32.0
  %v75 = vmul.f32 %v70, %v74
  %v76 = vmul.f32 %v73, %v74
  %v77 = vsub.f32 %v63, %v75
  %v78 = vsub.f32 %v64, %v76
  %v79 = vmul.f32 %v77, %v77
  %v80 = vmul.f32 %v78, %v78
  %v81 = vsel %vm67, %v79, 0.0
  %82 = vadd.xlane.f32.xlu0 %v81
  %v83 = vpop.xlane.xlu0 %82
  %v84 = vsel %vm67, %v80, 0.0
  %85 = vadd.xlane.f32.xlu0 %v84
  %v86 = vpop.xlane.xlu0 %85
  %v87 = vmul.f32 %v83, %v74
  %v88 = vmul.f32 %v86, %v74
  %v89 = vadd.f32 %v87, 1e-05
  %v90 = vadd.f32 %v88, 1e-05
  %v91 = vrsqrt.pop %v89
  %v92 = vrsqrt.pop %v90
  %v93 = vmul.f32 %v77, %v91
  %v94 = vmul.f32 %v78, %v92
  %v95 = vadd.f32 %v65, %v93
  %v96 = vadd.f32 %v66, %v94
  %97 = vst.msk [vmem:[#allocation5] sm:$0xff] %vm67, %v95
  %98 = vst.msk [vmem:[#allocation5 + $0x8] sm:$0xff] %vm67, %v96
  %v99 = vld [vmem:[#allocation2] sm:$0xff]
  %v100 = vld [vmem:[#allocation2 + $0x8] sm:$0xff]
  %v101 = vld [vmem:[%s1] sm:$0xf]
  %v102 = vld [vmem:[%s1 + $0x4] sm:$0xf]
  %v103 = vld [vmem:[%s1 + $0x8] sm:$0xf]
  %v104 = vld [vmem:[%s1 + $0xc] sm:$0xf]
  %v105 = vld [vmem:[%s2] sm:$0x1]
  %v107 = vlaneseq
  %v108 = vshrl.u32 %v107, 7
  %v109 = vsub.s32 0, %v108
  %v110 = vrot.slane %v105, %v109
  %v114 = vunpack.c.l.b16 %v61
  %v115 = vunpack.c.l.b16 %v62
  %v116 = vpack.c.b16 %v115, %v114
  %v121 = vunpack.c.l.b16 %v101
  %v122 = vunpack.c.l.b16 %v102
  %v123 = vunpack.c.l.b16 %v103
  %v124 = vunpack.c.l.b16 %v104
  %v125 = vpack.c.b16 %v122, %v121
  %v126 = vpack.c.b16 %v124, %v123
  %v130 = vsel %vm67, %v116, 0
  %132 = vmatprep.subr.bf16.mxu0 0
  %133 = vmatpush1.bf16.msra.mxu0 0
  %134 = vmatprep.subr.bf16.mxu0 0
  %135 = vmatpush1.bf16.msra.mxu0 0
  %136 = vmatprep.subr.bf16.mxu0 0
  %137 = vmatpush1.bf16.msra.mxu0 0
  %138 = vmatprep.subr.bf16.mxu0 0
  %139 = vmatpush1.bf16.msra.mxu0 0
  %140 = vmatprep.subr.bf16.mxu0 0
  %141 = vmatpush1.bf16.msra.mxu0 0
  %142 = vmatprep.subr.bf16.mxu0 0
  %143 = vmatpush1.bf16.msra.mxu0 0
  %144 = vmatprep.subr.bf16.mxu0 0
  %145 = vmatpush1.bf16.msra.mxu0 %v126
  %146 = vmatprep.subr.bf16.mxu0 0
  %147 = vmatpush1.bf16.msra.mxu0 %v125
  %148 = vmatprep.subr.bf16.mxu0 0
  %149 = vmatpush2.bf16.msra.mxu0 0
  %150 = vmatprep.subr.bf16.mxu0 0
  %151 = vmatpush2.bf16.msra.mxu0 0
  %152 = vmatprep.subr.bf16.mxu0 0
  %153 = vmatpush2.bf16.msra.mxu0 0
  %154 = vmatprep.subr.bf16.mxu0 0
  %155 = vmatpush2.bf16.msra.mxu0 0
  %156 = vmatprep.subr.bf16.mxu0 0
  %157 = vmatpush2.bf16.msra.mxu0 0
  %158 = vmatprep.subr.bf16.mxu0 0
  %159 = vmatpush2.bf16.msra.mxu0 0
  %160 = vmatprep.subr.bf16.mxu0 0
  %161 = vmatpush2.bf16.msra.mxu0 0
  %162 = vmatprep.subr.bf16.mxu0 0
  %163 = vmatpush2.bf16.msra.mxu0 0
  %164 = vmatprep.mubr.bf16.mxu0 0
  %165 = vmatmul.mubr.bf16.gmra.mxu0 %v130
  %v166 = vpop.f32.mrf.mxu0
  %v167 = vadd.f32 %v110, %v166
  %v168 = vpop.f32.mrf.mxu0
  %v169 = vpop.f32.mrf.mxu0
  %v170 = vadd.f32 %v110, %v169
  %v171 = vpop.f32.mrf.mxu0
  %172 = vdwg.mxu0
  %v173 = vmax.f32 %v167, 0.0
  %v174 = vmax.f32 %v170, 0.0
  %v175 = vadd.f32 %v99, %v173
  %v176 = vadd.f32 %v100, %v174
  %177 = vst.msk [vmem:[#allocation2] sm:$0xff] %vm67, %v175
  %178 = vst.msk [vmem:[#allocation2 + $0x8] sm:$0xff] %vm67, %v176
  %v179 = vld [vmem:[#allocation3] sm:$0xff]
  %v180 = vld [vmem:[#allocation3 + $0x8] sm:$0xff]
  %v181 = vld [vmem:[%s5] sm:$0xf]
  %v182 = vld [vmem:[%s5 + $0x4] sm:$0xf]
  %v183 = vld [vmem:[%s5 + $0x8] sm:$0xf]
  %v184 = vld [vmem:[%s5 + $0xc] sm:$0xf]
  %v185 = vld [vmem:[%s6] sm:$0x1]
  %v187 = vlaneseq
  %v188 = vshrl.u32 %v187, 7
  %v189 = vsub.s32 0, %v188
  %v190 = vrot.slane %v185, %v189
  %v196 = vunpack.c.l.b16 %v181
  %v197 = vunpack.c.l.b16 %v182
  %v198 = vunpack.c.l.b16 %v183
  %v199 = vunpack.c.l.b16 %v184
  %v200 = vpack.c.b16 %v197, %v196
  %v201 = vpack.c.b16 %v199, %v198
  %204 = vmatprep.subr.bf16.mxu0 0
  %205 = vmatpush1.bf16.msra.mxu0 0
  %206 = vmatprep.subr.bf16.mxu0 0
  %207 = vmatpush1.bf16.msra.mxu0 0
  %208 = vmatprep.subr.bf16.mxu0 0
  %209 = vmatpush1.bf16.msra.mxu0 0
  %210 = vmatprep.subr.bf16.mxu0 0
  %211 = vmatpush1.bf16.msra.mxu0 0
  %212 = vmatprep.subr.bf16.mxu0 0
  %213 = vmatpush1.bf16.msra.mxu0 0
  %214 = vmatprep.subr.bf16.mxu0 0
  %215 = vmatpush1.bf16.msra.mxu0 0
  %216 = vmatprep.subr.bf16.mxu0 0
  %217 = vmatpush1.bf16.msra.mxu0 %v201
  %218 = vmatprep.subr.bf16.mxu0 0
  %219 = vmatpush1.bf16.msra.mxu0 %v200
  %220 = vmatprep.subr.bf16.mxu0 0
  %221 = vmatpush2.bf16.msra.mxu0 0
  %222 = vmatprep.subr.bf16.mxu0 0
  %223 = vmatpush2.bf16.msra.mxu0 0
  %224 = vmatprep.subr.bf16.mxu0 0
  %225 = vmatpush2.bf16.msra.mxu0 0
  %226 = vmatprep.subr.bf16.mxu0 0
  %227 = vmatpush2.bf16.msra.mxu0 0
  %228 = vmatprep.subr.bf16.mxu0 0
  %229 = vmatpush2.bf16.msra.mxu0 0
  %230 = vmatprep.subr.bf16.mxu0 0
  %231 = vmatpush2.bf16.msra.mxu0 0
  %232 = vmatprep.subr.bf16.mxu0 0
  %233 = vmatpush2.bf16.msra.mxu0 0
  %234 = vmatprep.subr.bf16.mxu0 0
  %235 = vmatpush2.bf16.msra.mxu0 0
  %236 = vmatprep.mubr.bf16.mxu0 0
  %237 = vmatmul.mubr.bf16.gmra.mxu0 %v130
  %v238 = vpop.f32.mrf.mxu0
  %v239 = vadd.f32 %v190, %v238
  %v240 = vpop.f32.mrf.mxu0
  %v241 = vpop.f32.mrf.mxu0
  %v242 = vadd.f32 %v190, %v241
  %v243 = vpop.f32.mrf.mxu0
  %244 = vdwg.mxu0
  %v245 = vmax.f32 %v239, 0.0
  %v246 = vmax.f32 %v242, 0.0
  %v247 = vadd.f32 %v179, %v245
  %v248 = vadd.f32 %v180, %v246
  %249 = vst.msk [vmem:[#allocation3] sm:$0xff] %vm67, %v247
  %250 = vst.msk [vmem:[#allocation3 + $0x8] sm:$0xff] %vm67, %v248
  %v251 = vld [vmem:[#allocation4] sm:$0xff]
  %v252 = vld [vmem:[#allocation4 + $0x8] sm:$0xff]
  %v253 = vld [vmem:[%s9] sm:$0xf]
  %v254 = vld [vmem:[%s9 + $0x4] sm:$0xf]
  %v255 = vld [vmem:[%s9 + $0x8] sm:$0xf]
  %v256 = vld [vmem:[%s9 + $0xc] sm:$0xf]
  %v257 = vld [vmem:[%s10] sm:$0x1]
  %v259 = vlaneseq
  %v260 = vshrl.u32 %v259, 7
  %v261 = vsub.s32 0, %v260
  %v262 = vrot.slane %v257, %v261
  %v268 = vunpack.c.l.b16 %v253
  %v269 = vunpack.c.l.b16 %v254
  %v270 = vunpack.c.l.b16 %v255
  %v271 = vunpack.c.l.b16 %v256
  %v272 = vpack.c.b16 %v269, %v268
  %v273 = vpack.c.b16 %v271, %v270
  %276 = vmatprep.subr.bf16.mxu0 0
  %277 = vmatpush1.bf16.msra.mxu0 0
  %278 = vmatprep.subr.bf16.mxu0 0
  %279 = vmatpush1.bf16.msra.mxu0 0
  %280 = vmatprep.subr.bf16.mxu0 0
  %281 = vmatpush1.bf16.msra.mxu0 0
  %282 = vmatprep.subr.bf16.mxu0 0
  %283 = vmatpush1.bf16.msra.mxu0 0
  %284 = vmatprep.subr.bf16.mxu0 0
  %285 = vmatpush1.bf16.msra.mxu0 0
  %286 = vmatprep.subr.bf16.mxu0 0
  %287 = vmatpush1.bf16.msra.mxu0 0
  %288 = vmatprep.subr.bf16.mxu0 0
  %289 = vmatpush1.bf16.msra.mxu0 %v273
  %290 = vmatprep.subr.bf16.mxu0 0
  %291 = vmatpush1.bf16.msra.mxu0 %v272
  %292 = vmatprep.subr.bf16.mxu0 0
  %293 = vmatpush2.bf16.msra.mxu0 0
  %294 = vmatprep.subr.bf16.mxu0 0
  %295 = vmatpush2.bf16.msra.mxu0 0
  %296 = vmatprep.subr.bf16.mxu0 0
  %297 = vmatpush2.bf16.msra.mxu0 0
  %298 = vmatprep.subr.bf16.mxu0 0
  %299 = vmatpush2.bf16.msra.mxu0 0
  %300 = vmatprep.subr.bf16.mxu0 0
  %301 = vmatpush2.bf16.msra.mxu0 0
  %302 = vmatprep.subr.bf16.mxu0 0
  %303 = vmatpush2.bf16.msra.mxu0 0
  %304 = vmatprep.subr.bf16.mxu0 0
  %305 = vmatpush2.bf16.msra.mxu0 0
  %306 = vmatprep.subr.bf16.mxu0 0
  %307 = vmatpush2.bf16.msra.mxu0 0
  %308 = vmatprep.mubr.bf16.mxu0 0
  %309 = vmatmul.mubr.bf16.gmra.mxu0 %v130
  %v310 = vpop.f32.mrf.mxu0
  %v311 = vadd.f32 %v262, %v310
  %v312 = vpop.f32.mrf.mxu0
  %v313 = vpop.f32.mrf.mxu0
  %v314 = vadd.f32 %v262, %v313
  %v315 = vpop.f32.mrf.mxu0
  %316 = vdwg.mxu0
  %v317 = vmax.f32 %v311, 0.0
  %v318 = vmax.f32 %v314, 0.0
  %v319 = vadd.f32 %v251, %v317
  %v320 = vadd.f32 %v252, %v318
  %321 = vst.msk [vmem:[#allocation4] sm:$0xff] %vm67, %v319
  %322 = vst.msk [vmem:[#allocation4 + $0x8] sm:$0xff] %vm67, %v320
  // Predicated region
  $region58: #{dca_transformer_forward.6} parent=0 // pred_check
    %p323 = pneg %p48
  $region59: #{dca_transformer_forward.6} parent=0 // pred_check_branch
    %325 = sbr.rel (%p323) target = $region61
  $region60: #{dca_transformer_forward.6} parent=0 // pred_region
    %v326 = vld [vmem:[#allocation5] sm:$0xff]
    %v327 = vld [vmem:[#allocation5 + $0x8] sm:$0xff]
    %v328 = vld [vmem:[#allocation2] sm:$0xff]
    %v329 = vld [vmem:[#allocation2 + $0x8] sm:$0xff]
    %v330 = vld [vmem:[%s3] sm:$0x1]
    %v332 = vlaneseq
    %v333 = vshrl.u32 %v332, 7
    %v334 = vsub.s32 0, %v333
    %v335 = vrot.slane %v330, %v334
    %v337 = vmul.f32 %v326, %v335
    %v338 = vmul.f32 %v327, %v335
    %v339 = vadd.f32 %v328, %v337
    %v340 = vadd.f32 %v329, %v338
    %v341 = vld [vmem:[%s4] sm:$0x1]
    %v343 = vlaneseq
    %v344 = vshrl.u32 %v343, 7
    %v345 = vsub.s32 0, %v344
    %v346 = vrot.slane %v341, %v345
    %v348 = vadd.f32 %v339, %v346
    %v349 = vadd.f32 %v340, %v346
    %v350 = vpack.c.bf16 %v349, %v348
    %v352 = vunpack.c.l.b16 %v350
    %v353 = vunpack.c.h.b16 %v350
    %v354 = vpack.c.b16 %v352, %v352
    %v355 = vpack.c.b16 %v353, %v353
    %vm358 = vcmask 257024
    %359 = vst.msk [vmem:[%s13] sm:$0xf] %vm358, %v354
    %360 = vst.msk [vmem:[%s13 + $0x4] sm:$0xf] %vm358, %v355
    %v361 = vld [vmem:[#allocation3] sm:$0xff]
    %v362 = vld [vmem:[#allocation3 + $0x8] sm:$0xff]
    %v363 = vld [vmem:[%s7] sm:$0x1]
    %v365 = vlaneseq
    %v366 = vshrl.u32 %v365, 7
    %v367 = vsub.s32 0, %v366
    %v368 = vrot.slane %v363, %v367
    %v370 = vmul.f32 %v326, %v368
    %v371 = vmul.f32 %v327, %v368
    %v372 = vadd.f32 %v361, %v370
    %v373 = vadd.f32 %v362, %v371
    %v374 = vld [vmem:[%s8] sm:$0x1]
    %v376 = vlaneseq
    %v377 = vshrl.u32 %v376, 7
    %v378 = vsub.s32 0, %v377
    %v379 = vrot.slane %v374, %v378
    %v381 = vadd.f32 %v372, %v379
    %v382 = vadd.f32 %v373, %v379
    %v383 = vpack.c.bf16 %v382, %v381
    %v385 = vunpack.c.l.b16 %v383
    %v386 = vunpack.c.h.b16 %v383
    %v387 = vpack.c.b16 %v385, %v385
    %v388 = vpack.c.b16 %v386, %v386
    %391 = vst.msk [vmem:[%s14] sm:$0xf] %vm358, %v387
    %392 = vst.msk [vmem:[%s14 + $0x4] sm:$0xf] %vm358, %v388
    %v393 = vld [vmem:[#allocation4] sm:$0xff]
    %v394 = vld [vmem:[#allocation4 + $0x8] sm:$0xff]
    %v395 = vld [vmem:[%s11] sm:$0x1]
    %v397 = vlaneseq
    %v398 = vshrl.u32 %v397, 7
    %v399 = vsub.s32 0, %v398
    %v400 = vrot.slane %v395, %v399
    %v402 = vmul.f32 %v326, %v400
    %v403 = vmul.f32 %v327, %v400
    %v404 = vadd.f32 %v393, %v402
    %v405 = vadd.f32 %v394, %v403
    %v406 = vld [vmem:[%s12] sm:$0x1]
    %v408 = vlaneseq
    %v409 = vshrl.u32 %v408, 7
    %v410 = vsub.s32 0, %v409
    %v411 = vrot.slane %v406, %v410
    %v413 = vadd.f32 %v404, %v411
    %v414 = vadd.f32 %v405, %v411
    %v415 = vpack.c.bf16 %v414, %v413
    %v417 = vunpack.c.l.b16 %v415
    %v418 = vunpack.c.h.b16 %v415
    %v419 = vpack.c.b16 %v417, %v417
    %v420 = vpack.c.b16 %v418, %v418
    %423 = vst.msk [vmem:[%s15] sm:$0xf] %vm358, %v419
    %424 = vst.msk [vmem:[%s15 + $0x4] sm:$0xf] %vm358, %v420
  $region61: #{dca_transformer_forward.6} parent=0 // pred_fallthru
    _
  // Predicated region
  $region62: #{dca_transformer_forward.6} parent=0 // pred_check
    _
  $region63: #{dca_transformer_forward.6} parent=0 // pred_check_branch
    %426 = sbr.rel (0) target = $region65
  $region64: #{dca_transformer_forward.6} parent=0 // pred_region
    _
  $region65: #{dca_transformer_forward.6} parent=0 // pred_fallthru
    _
  // Predicated region
  $region66: #{dca_transformer_forward.6} parent=0 // pred_check
    _
  $region67: #{dca_transformer_forward.6} parent=0 // pred_check_branch
    %428 = sbr.rel (0) target = $region69
  $region68: #{dca_transformer_forward.6} parent=0 // pred_region
    _
  $region69: #{dca_transformer_forward.6} parent=0 // pred_fallthru
    _
  // Predicated region
  $region70: #{dca_transformer_forward.6} parent=0 // pred_check
    _
  $region71: #{dca_transformer_forward.6} parent=0 // pred_check_branch
    %430 = sbr.rel (0) target = $region73
  $region72: #{dca_transformer_forward.6} parent=0 // pred_region
    _
  $region73: #{dca_transformer_forward.6} parent=0 // pred_fallthru
    _
  // Predicated region
  $region74: #{dca_transformer_forward.6} parent=0 // pred_check
    _
  $region75: #{dca_transformer_forward.6} parent=0 // pred_check_branch
    %432 = sbr.rel (0) target = $region77
  $region76: #{dca_transformer_forward.6} parent=0 // pred_region
    _
  $region77: #{dca_transformer_forward.6} parent=0 // pred_fallthru
    _
  // Predicated region
  $region78: #{dca_transformer_forward.6} parent=0 // pred_check
    _
  $region79: #{dca_transformer_forward.6} parent=0 // pred_check_branch
    %434 = sbr.rel (0) target = $region81
  $region80: #{dca_transformer_forward.6} parent=0 // pred_region
    _
  $region81: #{dca_transformer_forward.6} parent=0 // pred_fallthru
    _
  // Predicated region
  $region82: #{dca_transformer_forward.6} parent=0 // pred_check
    _
  $region83: #{dca_transformer_forward.6} parent=0 // pred_check_branch
    %436 = sbr.rel (0) target = $region85
  $region84: #{dca_transformer_forward.6} parent=0 // pred_region
    _
  $region85: #{dca_transformer_forward.6} parent=0 // pred_fallthru
    _

// kernel: dca_transformer_forward.7
$region0: #{dca_transformer_forward.7}
  #allocation0 [shape = 'u32[]', space=smem, size = 0x4, offset = 0x4, fixed_abs, tag = 'smem constant byte address 0x4 - core index']
  #allocation1 [shape = 'u32[144,128]{1,0:T(1,128)}', space=vmem, size = 0x12000, scoped, tag = 'internal scratch']
  %s0 = inlined_call_operand.vmem [shape: bf16[2,8,32], index: 0, kind: input, shape index: {}]
  %s1 = inlined_call_operand.vmem [shape: bf16[2,8,32], index: 1, kind: input, shape index: {}]
  %s2 = inlined_call_operand.vmem [shape: bf16[2,8,32], index: 2, kind: input, shape index: {}]
  %s3 = inlined_call_operand.vmem [shape: bf16[2,8,32], index: 3, kind: output, shape index: {}]
  %s4 = sld [smem:[#allocation0]]
  $region45: #{dca_transformer_forward.7} parent=0
    _
  %s6 = ssub.s32 1, %s4
  %s7 = scalar_select 0, %s6, %s4
  loop: start=0, step=1, limit=4
  $region2: #{dca_transformer_forward.7} parent=0 // loop_pre_header
    _
  $region3: #{dca_transformer_forward.7} parent=0 // loop_header
    %s9 = sphi 0, %s13
    %p10 = scmp.ge.s32.totalorder %s9, 4
    %s16 = sphi 0, %s28
    %s17 = sphi 0, %s24
    %s18 = sphi 0, %s16
    %s19 = sphi 0, %s17
    %s20 = sphi 0, %s18
    %s21 = sphi 0, %s19
    %s33 = sphi 0, %s35
    %s36 = sphi 0, %s33
    %s37 = sphi 0, %s36
    %s53 = sphi 0, %s37
    %s61 = sphi 0, %s63
    %s64 = sphi 0, %s61
    %s65 = sphi 0, %s64
    %s81 = sphi 0, %s65
    %s89 = sphi 0, %s91
    %s92 = sphi 0, %s89
    %s93 = sphi 0, %s92
    %s109 = sphi 0, %s93
    %s117 = sphi 0, %s119
    %s120 = sphi 0, %s117
    %s121 = sphi 0, %s120
    %s137 = sphi 0, %s121
  $region4: #{dca_transformer_forward.7} parent=0 // loop_header_branch
    %12 = sbr.rel (%p10) target = $region8
  $region5: #{dca_transformer_forward.7} parent=0 // loop_body
    %s14 = ssub.s32 %s9, 1
    %s15 = ssub.s32 %s9, 2
    %s22 = sadd.s32 1, %s17
    %p23 = scmp.ge.s32.totalorder %s22, 1
    %s24 = scalar_select %p23, 0, %s22
    %s25 = sadd.s32 1, %s16
    %s26 = scalar_select %p23, %s25, %s16
    %p27 = scmp.ge.s32.totalorder %s26, 2
    %s28 = scalar_select %p27, 0, %s26
    %s29 = ssub.s32 %s16, %s28
    %s30 = ssub.s32 %s17, %s24
    %s31 = sor.u32 %s29, %s30
    %p32 = scmp.eq.s32.totalorder %s31, 0
    %s34 = sadd.s32 %s33, 1
    %s35 = scalar_select %p32, %s33, %s34
    %p38 = pneg %p32
    %p39 = scmp.eq.s32.totalorder %s9, 1
    %p40 = por %p38, %p39
    %p41 = scmp.ne.s32.totalorder %s33, %s36
    %p42 = scmp.eq.s32.totalorder %s9, 0
    %p43 = por %p41, %p42
    %p44 = scmp.ne.s32.totalorder %s33, %s36
    %p45 = scmp.eq.s32.totalorder %s14, 1
    %p46 = por %p44, %p45
    %p47 = scmp.ne.s32.totalorder %s36, %s37
    %p48 = scmp.eq.s32.totalorder %s14, 0
    %p49 = por %p47, %p48
    %p50 = scmp.ne.s32.totalorder %s36, %s37
    %p51 = scmp.eq.s32.totalorder %s15, 1
    %p52 = por %p50, %p51
    %p54 = scmp.ne.s32.totalorder %s37, %s53
    %p55 = scmp.eq.s32.totalorder %s15, 0
    %p56 = por %p54, %p55
    %s57 = ssub.s32 %s16, %s28
    %s58 = ssub.s32 %s17, %s24
    %s59 = sor.u32 %s57, %s58
    %p60 = scmp.eq.s32.totalorder %s59, 0
    %s62 = sadd.s32 %s61, 1
    %s63 = scalar_select %p60, %s61, %s62
    %p66 = pneg %p60
    %p67 = scmp.eq.s32.totalorder %s9, 1
    %p68 = por %p66, %p67
    %p69 = scmp.ne.s32.totalorder %s61, %s64
    %p70 = scmp.eq.s32.totalorder %s9, 0
    %p71 = por %p69, %p70
    %p72 = scmp.ne.s32.totalorder %s61, %s64
    %p73 = scmp.eq.s32.totalorder %s14, 1
    %p74 = por %p72, %p73
    %p75 = scmp.ne.s32.totalorder %s64, %s65
    %p76 = scmp.eq.s32.totalorder %s14, 0
    %p77 = por %p75, %p76
    %p78 = scmp.ne.s32.totalorder %s64, %s65
    %p79 = scmp.eq.s32.totalorder %s15, 1
    %p80 = por %p78, %p79
    %p82 = scmp.ne.s32.totalorder %s65, %s81
    %p83 = scmp.eq.s32.totalorder %s15, 0
    %p84 = por %p82, %p83
    %s85 = ssub.s32 %s16, %s28
    %s86 = ssub.s32 %s17, %s24
    %s87 = sor.u32 %s85, %s86
    %p88 = scmp.eq.s32.totalorder %s87, 0
    %s90 = sadd.s32 %s89, 1
    %s91 = scalar_select %p88, %s89, %s90
    %p94 = pneg %p88
    %p95 = scmp.eq.s32.totalorder %s9, 1
    %p96 = por %p94, %p95
    %p97 = scmp.ne.s32.totalorder %s89, %s92
    %p98 = scmp.eq.s32.totalorder %s9, 0
    %p99 = por %p97, %p98
    %p100 = scmp.ne.s32.totalorder %s89, %s92
    %p101 = scmp.eq.s32.totalorder %s14, 1
    %p102 = por %p100, %p101
    %p103 = scmp.ne.s32.totalorder %s92, %s93
    %p104 = scmp.eq.s32.totalorder %s14, 0
    %p105 = por %p103, %p104
    %p106 = scmp.ne.s32.totalorder %s92, %s93
    %p107 = scmp.eq.s32.totalorder %s15, 1
    %p108 = por %p106, %p107
    %p110 = scmp.ne.s32.totalorder %s93, %s109
    %p111 = scmp.eq.s32.totalorder %s15, 0
    %p112 = por %p110, %p111
    %s113 = ssub.s32 %s16, %s28
    %s114 = ssub.s32 %s17, %s24
    %s115 = sor.u32 %s113, %s114
    %p116 = scmp.eq.s32.totalorder %s115, 0
    %s118 = sadd.s32 %s117, 1
    %s119 = scalar_select %p116, %s117, %s118
    %p122 = pneg %p116
    %p123 = scmp.eq.s32.totalorder %s9, 1
    %p124 = por %p122, %p123
    %p125 = scmp.ne.s32.totalorder %s117, %s120
    %p126 = scmp.eq.s32.totalorder %s9, 0
    %p127 = por %p125, %p126
    %p128 = scmp.ne.s32.totalorder %s117, %s120
    %p129 = scmp.eq.s32.totalorder %s14, 1
    %p130 = por %p128, %p129
    %p131 = scmp.ne.s32.totalorder %s120, %s121
    %p132 = scmp.eq.s32.totalorder %s14, 0
    %p133 = por %p131, %p132
    %p134 = scmp.ne.s32.totalorder %s120, %s121
    %p135 = scmp.eq.s32.totalorder %s15, 1
    %p136 = por %p134, %p135
    %p138 = scmp.ne.s32.totalorder %s121, %s137
    %p139 = scmp.eq.s32.totalorder %s15, 0
    %p140 = por %p138, %p139
    %p141 = scmp.le.s32.totalorder 1, %s9
    %p142 = scmp.lt.s32.totalorder %s9, 3
    %p143 = pnand %p141, %p142
    %p144 = pneg %p143
    // Predicated region
    $region9: #{dca_transformer_forward.7} parent=5 // pred_check
      _
    $region10: #{dca_transformer_forward.7} parent=5 // pred_check_branch
      %146 = sbr.rel (%p143) target = $region12
    $region11: #{dca_transformer_forward.7} parent=5 // pred_region
      %s147 = ssub.s32 %s9, 1
    $region12: #{dca_transformer_forward.7} parent=5 // pred_fallthru
      _
    %p148 = scmp.lt.s32.totalorder %s9, 2
    // Predicated region
    $region13: #{dca_transformer_forward.7} parent=5 // pred_check
      %p149 = pneg %p148
    $region14: #{dca_transformer_forward.7} parent=5 // pred_check_branch
      %151 = sbr.rel (%p149) target = $region16
    $region15: #{dca_transformer_forward.7} parent=5 // pred_region
      // Predicated region
      $region17: #{dca_transformer_forward.7} parent=15 // pred_check
        %p152 = pneg %p43
      $region18: #{dca_transformer_forward.7} parent=15 // pred_check_branch
        %154 = sbr.rel (%p152) target = $region20
      $region19: #{dca_transformer_forward.7} parent=15 // pred_region
        %p155 = scmp.lt.s32.totalorder %s16, 1
        %s156 = scalar_select %p155, %s16, 1
        %p157 = scmp.lt.s32.totalorder %s17, 0
        %s158 = scalar_select %p157, %s17, 0
        %s159 = sadd.s32 %s158, %s156
        %s160 = smul.addr %s159, 4
        %s161 = scalar_lea.vmem %s0, %s160
      $region20: #{dca_transformer_forward.7} parent=15 // pred_fallthru
        _
      // Predicated region
      $region21: #{dca_transformer_forward.7} parent=15 // pred_check
        %p162 = pneg %p71
      $region22: #{dca_transformer_forward.7} parent=15 // pred_check_branch
        %164 = sbr.rel (%p162) target = $region24
      $region23: #{dca_transformer_forward.7} parent=15 // pred_region
        %p165 = scmp.lt.s32.totalorder %s16, 1
        %s166 = scalar_select %p165, %s16, 1
        %p167 = scmp.lt.s32.totalorder %s17, 0
        %s168 = scalar_select %p167, %s17, 0
        %s169 = sadd.s32 %s168, %s166
        %s170 = smul.addr %s169, 4
        %s171 = scalar_lea.vmem %s1, %s170
      $region24: #{dca_transformer_forward.7} parent=15 // pred_fallthru
        _
      // Predicated region
      $region25: #{dca_transformer_forward.7} parent=15 // pred_check
        %p172 = pneg %p99
      $region26: #{dca_transformer_forward.7} parent=15 // pred_check_branch
        %174 = sbr.rel (%p172) target = $region28
      $region27: #{dca_transformer_forward.7} parent=15 // pred_region
        %p175 = scmp.lt.s32.totalorder %s16, 1
        %s176 = scalar_select %p175, %s16, 1
        %p177 = scmp.lt.s32.totalorder %s17, 0
        %s178 = scalar_select %p177, %s17, 0
        %s179 = sadd.s32 %s178, %s176
        %s180 = smul.addr %s179, 4
        %s181 = scalar_lea.vmem %s2, %s180
      $region28: #{dca_transformer_forward.7} parent=15 // pred_fallthru
        _
    $region16: #{dca_transformer_forward.7} parent=5 // pred_fallthru
      _
    %p182 = scmp.le.s32.totalorder 1, %s9
    %p183 = scmp.lt.s32.totalorder %s9, 3
    %p184 = pnand %p182, %p183
    %p185 = pneg %p184
    // Predicated region
    $region29: #{dca_transformer_forward.7} parent=5 // pred_check
      _
    $region30: #{dca_transformer_forward.7} parent=5 // pred_check_branch
      %187 = sbr.rel (%p184) target = $region32
    $region31: #{dca_transformer_forward.7} parent=5 // pred_region
      %s188 = ssub.s32 %s9, 1
      %p189 = scmp.lt.s32.totalorder %s18, 1
      %s190 = scalar_select %p189, %s18, 1
      %p191 = scmp.lt.s32.totalorder %s19, 0
      %s192 = scalar_select %p191, %s19, 0
      %s193 = sadd.s32 %s192, %s190
      %s194 = smul.addr %s193, 4
      %s195 = scalar_lea.vmem %s0, %s194
      %p196 = pneg %p49
      %p197 = pneg %p46
      %p198 = scmp.lt.s32.totalorder %s18, 1
      %s199 = scalar_select %p198, %s18, 1
      %p200 = scmp.lt.s32.totalorder %s19, 0
      %s201 = scalar_select %p200, %s19, 0
      %s202 = sadd.s32 %s201, %s199
      %s203 = smul.addr %s202, 4
      %s204 = scalar_lea.vmem %s1, %s203
      %p205 = pneg %p77
      %p206 = pneg %p74
      %p207 = scmp.lt.s32.totalorder %s18, 1
      %s208 = scalar_select %p207, %s18, 1
      %p209 = scmp.lt.s32.totalorder %s19, 0
      %s210 = scalar_select %p209, %s19, 0
      %s211 = sadd.s32 %s210, %s208
      %s212 = smul.addr %s211, 4
      %s213 = scalar_lea.vmem %s2, %s212
      %p214 = pneg %p105
      %p215 = pneg %p102
      %p216 = pneg %p133
      %p217 = pneg %p130
      %p218 = scmp.lt.s32.totalorder %s18, 1
      %s219 = scalar_select %p218, %s18, 1
      %p220 = scmp.lt.s32.totalorder %s19, 0
      %s221 = scalar_select %p220, %s19, 0
      %s222 = sadd.s32 %s221, %s219
      %s223 = smul.addr %s222, 4
      %s224 = scalar_lea.vmem %s3, %s223
      %p225 = scmp.lt.s32.totalorder %s18, 1
      %s226 = scalar_select %p225, %s18, 1
      %p227 = scmp.lt.s32.totalorder %s19, 0
      %s228 = scalar_select %p227, %s19, 0
      %s229 = sadd.s32 %s228, %s226
      %s230 = smul.addr %s229, 4
      %s231 = scalar_lea.vmem %s0, %s230
      %p232 = scmp.lt.s32.totalorder %s18, 1
      %s233 = scalar_select %p232, %s18, 1
      %p234 = scmp.lt.s32.totalorder %s19, 0
      %s235 = scalar_select %p234, %s19, 0
      %s236 = sadd.s32 %s235, %s233
      %s237 = smul.addr %s236, 4
      %s238 = scalar_lea.vmem %s1, %s237
      %p239 = scmp.lt.s32.totalorder %s18, 1
      %s240 = scalar_select %p239, %s18, 1
      %p241 = scmp.lt.s32.totalorder %s19, 0
      %s242 = scalar_select %p241, %s19, 0
      %s243 = sadd.s32 %s242, %s240
      %s244 = smul.addr %s243, 4
      %s245 = scalar_lea.vmem %s2, %s244
      %p246 = scmp.lt.s32.totalorder %s18, 1
      %s247 = scalar_select %p246, %s18, 1
      %p248 = scmp.lt.s32.totalorder %s19, 0
      %s249 = scalar_select %p248, %s19, 0
      %s250 = sadd.s32 %s249, %s247
      %s251 = smul.addr %s250, 4
      %s252 = scalar_lea.vmem %s3, %s251
      %v254 = vld [vmem:[%s231] sm:$0xf]
      %v255 = vld [vmem:[%s238] sm:$0xf]
      %v256 = vld [vmem:[%s245] sm:$0xf]
      %vm257 = vcmask 31744
      %v259 = vsel %vm257, %v254, 0
      %v262 = vsel %vm257, %v255, 0
      %264 = vmatprep.subr.bf16.mxu0 0
      %265 = vmatpush1.bf16.xpose.msra.mxu0 0
      %266 = vmatprep.subr.bf16.mxu0 0
      %267 = vmatpush1.bf16.xpose.msra.mxu0 0
      %268 = vmatprep.subr.bf16.mxu0 0
      %269 = vmatpush1.bf16.xpose.msra.mxu0 0
      %270 = vmatprep.subr.bf16.mxu0 0
      %271 = vmatpush1.bf16.xpose.msra.mxu0 0
      %272 = vmatprep.subr.bf16.mxu0 0
      %273 = vmatpush1.bf16.xpose.msra.mxu0 0
      %274 = vmatprep.subr.bf16.mxu0 0
      %275 = vmatpush1.bf16.xpose.msra.mxu0 0
      %276 = vmatprep.subr.bf16.mxu0 0
      %277 = vmatpush1.bf16.xpose.msra.mxu0 0
      %278 = vmatprep.subr.bf16.mxu0 0
      %279 = vmatpush1.bf16.xpose.msra.mxu0 %v262
      %280 = vmatprep.subr.bf16.mxu0 0
      %281 = vmatpush2.bf16.xpose.msra.mxu0 0
      %282 = vmatprep.subr.bf16.mxu0 0
      %283 = vmatpush2.bf16.xpose.msra.mxu0 0
      %284 = vmatprep.subr.bf16.mxu0 0
      %285 = vmatpush2.bf16.xpose.msra.mxu0 0
      %286 = vmatprep.subr.bf16.mxu0 0
      %287 = vmatpush2.bf16.xpose.msra.mxu0 0
      %288 = vmatprep.subr.bf16.mxu0 0
      %289 = vmatpush2.bf16.xpose.msra.mxu0 0
      %290 = vmatprep.subr.bf16.mxu0 0
      %291 = vmatpush2.bf16.xpose.msra.mxu0 0
      %292 = vmatprep.subr.bf16.mxu0 0
      %293 = vmatpush2.bf16.xpose.msra.mxu0 0
      %294 = vmatprep.subr.bf16.mxu0 0
      %295 = vmatpush2.bf16.xpose.msra.mxu0 0
      %296 = vmatprep.mubr.bf16.mxu0 0
      %297 = vmatmul.mubr.bf16.gmra.mxu0 %v259
      %v298 = vpop.f32.mrf.mxu0
      %v299 = vadd.f32 0.0, %v298
      %v300 = vpop.f32.mrf.mxu0
      %v301 = vpop.f32.mrf.mxu0
      %v302 = vpop.f32.mrf.mxu0
      %303 = vdwg.mxu0
      %v304 = vmul.f32 %v299, 0.5
      %vm305 = vcmask 64512
      %v306 = vsel %vm305, %v304, -inf
      %307 = vmax.xlane.f32.xlu0 %v306
      %v308 = vpop.xlane.xlu0 %307
      %v309 = vsub.f32 %v304, %v308
      %v310 = vmul.f32 %v309, 1.442695
      %v311 = vpow.pop %v310
      %v312 = vsel %vm305, %v311, 0.0
      %313 = vadd.xlane.f32.xlu0 %v312
      %v314 = vpop.xlane.xlu0 %313
      %v315 = vrcp.pop %v314
      %v316 = vmul.f32 %v311, %v315
      %v317 = vpack.c.bf16 %v316, %v316
      %v319 = vsel %vm305, %v317, 0
      %vm321 = vcmask 1043456
      %v323 = vsel %vm321, %v256, 0
      %325 = vmatprep.subr.bf16.mxu0 0
      %326 = vmatpush1.bf16.msra.mxu0 0
      %327 = vmatprep.subr.bf16.mxu0 0
      %328 = vmatpush1.bf16.msra.mxu0 0
      %329 = vmatprep.subr.bf16.mxu0 0
      %330 = vmatpush1.bf16.msra.mxu0 0
      %331 = vmatprep.subr.bf16.mxu0 0
      %332 = vmatpush1.bf16.msra.mxu0 0
      %333 = vmatprep.subr.bf16.mxu0 0
      %334 = vmatpush1.bf16.msra.mxu0 0
      %335 = vmatprep.subr.bf16.mxu0 0
      %336 = vmatpush1.bf16.msra.mxu0 0
      %337 = vmatprep.subr.bf16.mxu0 0
      %338 = vmatpush1.bf16.msra.mxu0 0
      %339 = vmatprep.subr.bf16.mxu0 0
      %340 = vmatpush1.bf16.msra.mxu0 %v323
      %341 = vmatprep.subr.bf16.mxu0 0
      %342 = vmatpush2.bf16.msra.mxu0 0
      %343 = vmatprep.subr.bf16.mxu0 0
      %344 = vmatpush2.bf16.msra.mxu0 0
      %345 = vmatprep.subr.bf16.mxu0 0
      %346 = vmatpush2.bf16.msra.mxu0 0
      %347 = vmatprep.subr.bf16.mxu0 0
      %348 = vmatpush2.bf16.msra.mxu0 0
      %349 = vmatprep.subr.bf16.mxu0 0
      %350 = vmatpush2.bf16.msra.mxu0 0
      %351 = vmatprep.subr.bf16.mxu0 0
      %352 = vmatpush2.bf16.msra.mxu0 0
      %353 = vmatprep.subr.bf16.mxu0 0
      %354 = vmatpush2.bf16.msra.mxu0 0
      %355 = vmatprep.subr.bf16.mxu0 0
      %356 = vmatpush2.bf16.msra.mxu0 0
      %357 = vmatprep.mubr.bf16.mxu0 0
      %358 = vmatmul.mubr.bf16.gmra.mxu0 %v319
      %v359 = vpop.f32.mrf.mxu0
      %v360 = vadd.f32 0.0, %v359
      %v361 = vpop.f32.mrf.mxu0
      %v362 = vpop.f32.mrf.mxu0
      %v363 = vpop.f32.mrf.mxu0
      %364 = vdwg.mxu0
      %v366 = vunpack.c.l.b16 %v254
      %v367 = vpack.c.b16 %v366, %v366
      %368 = vrot.lane.b32.xlu0 %v367, 124
      %v369 = vpop.permute.xlu0 %368
      %v371 = vunpack.c.l.b16 %v255
      %v372 = vpack.c.b16 %v371, %v371
      %373 = vrot.lane.b32.xlu0 %v372, 124
      %v374 = vpop.permute.xlu0 %373
      %v376 = vsel %vm257, %v369, 0
      %v379 = vsel %vm257, %v374, 0
      %381 = vmatprep.subr.bf16.mxu0 0
      %382 = vmatpush1.bf16.xpose.msra.mxu0 0
      %383 = vmatprep.subr.bf16.mxu0 0
      %384 = vmatpush1.bf16.xpose.msra.mxu0 0
      %385 = vmatprep.subr.bf16.mxu0 0
      %386 = vmatpush1.bf16.xpose.msra.mxu0 0
      %387 = vmatprep.subr.bf16.mxu0 0
      %388 = vmatpush1.bf16.xpose.msra.mxu0 0
      %389 = vmatprep.subr.bf16.mxu0 0
      %390 = vmatpush1.bf16.xpose.msra.mxu0 0
      %391 = vmatprep.subr.bf16.mxu0 0
      %392 = vmatpush1.bf16.xpose.msra.mxu0 0
      %393 = vmatprep.subr.bf16.mxu0 0
      %394 = vmatpush1.bf16.xpose.msra.mxu0 0
      %395 = vmatprep.subr.bf16.mxu0 0
      %396 = vmatpush1.bf16.xpose.msra.mxu0 %v379
      %397 = vmatprep.subr.bf16.mxu0 0
      %398 = vmatpush2.bf16.xpose.msra.mxu0 0
      %399 = vmatprep.subr.bf16.mxu0 0
      %400 = vmatpush2.bf16.xpose.msra.mxu0 0
      %401 = vmatprep.subr.bf16.mxu0 0
      %402 = vmatpush2.bf16.xpose.msra.mxu0 0
      %403 = vmatprep.subr.bf16.mxu0 0
      %404 = vmatpush2.bf16.xpose.msra.mxu0 0
      %405 = vmatprep.subr.bf16.mxu0 0
      %406 = vmatpush2.bf16.xpose.msra.mxu0 0
      %407 = vmatprep.subr.bf16.mxu0 0
      %408 = vmatpush2.bf16.xpose.msra.mxu0 0
      %409 = vmatprep.subr.bf16.mxu0 0
      %410 = vmatpush2.bf16.xpose.msra.mxu0 0
      %411 = vmatprep.subr.bf16.mxu0 0
      %412 = vmatpush2.bf16.xpose.msra.mxu0 0
      %413 = vmatprep.mubr.bf16.mxu0 0
      %414 = vmatmul.mubr.bf16.gmra.mxu0 %v376
      %v415 = vpop.f32.mrf.mxu0
      %v416 = vadd.f32 0.0, %v415
      %v417 = vpop.f32.mrf.mxu0
      %v418 = vpop.f32.mrf.mxu0
      %v419 = vpop.f32.mrf.mxu0
      %420 = vdwg.mxu0
      %v421 = vmul.f32 %v416, 0.5
      %v422 = vsel %vm305, %v421, -inf
      %423 = vmax.xlane.f32.xlu0 %v422
      %v424 = vpop.xlane.xlu0 %423
      %v425 = vsub.f32 %v421, %v424
      %v426 = vmul.f32 %v425, 1.442695
      %v427 = vpow.pop %v426
      %v428 = vsel %vm305, %v427, 0.0
      %429 = vadd.xlane.f32.xlu0 %v428
      %v430 = vpop.xlane.xlu0 %429
      %v431 = vrcp.pop %v430
      %v432 = vmul.f32 %v427, %v431
      %v433 = vpack.c.bf16 %v432, %v432
      %v435 = vunpack.c.l.b16 %v256
      %v436 = vpack.c.b16 %v435, %v435
      %437 = vrot.lane.b32.xlu0 %v436, 124
      %v438 = vpop.permute.xlu0 %437
      %v440 = vsel %vm305, %v433, 0
      %v443 = vsel %vm321, %v438, 0
      %445 = vmatprep.subr.bf16.mxu0 0
      %446 = vmatpush1.bf16.msra.mxu0 0
      %447 = vmatprep.subr.bf16.mxu0 0
      %448 = vmatpush1.bf16.msra.mxu0 0
      %449 = vmatprep.subr.bf16.mxu0 0
      %450 = vmatpush1.bf16.msra.mxu0 0
      %451 = vmatprep.subr.bf16.mxu0 0
      %452 = vmatpush1.bf16.msra.mxu0 0
      %453 = vmatprep.subr.bf16.mxu0 0
      %454 = vmatpush1.bf16.msra.mxu0 0
      %455 = vmatprep.subr.bf16.mxu0 0
      %456 = vmatpush1.bf16.msra.mxu0 0
      %457 = vmatprep.subr.bf16.mxu0 0
      %458 = vmatpush1.bf16.msra.mxu0 0
      %459 = vmatprep.subr.bf16.mxu0 0
      %460 = vmatpush1.bf16.msra.mxu0 %v443
      %461 = vmatprep.subr.bf16.mxu0 0
      %462 = vmatpush2.bf16.msra.mxu0 0
      %463 = vmatprep.subr.bf16.mxu0 0
      %464 = vmatpush2.bf16.msra.mxu0 0
      %465 = vmatprep.subr.bf16.mxu0 0
      %466 = vmatpush2.bf16.msra.mxu0 0
      %467 = vmatprep.subr.bf16.mxu0 0
      %468 = vmatpush2.bf16.msra.mxu0 0
      %469 = vmatprep.subr.bf16.mxu0 0
      %470 = vmatpush2.bf16.msra.mxu0 0
      %471 = vmatprep.subr.bf16.mxu0 0
      %472 = vmatpush2.bf16.msra.mxu0 0
      %473 = vmatprep.subr.bf16.mxu0 0
      %474 = vmatpush2.bf16.msra.mxu0 0
      %475 = vmatprep.subr.bf16.mxu0 0
      %476 = vmatpush2.bf16.msra.mxu0 0
      %477 = vmatprep.mubr.bf16.mxu0 0
      %478 = vmatmul.mubr.bf16.gmra.mxu0 %v440
      %v479 = vpop.f32.mrf.mxu0
      %v480 = vadd.f32 0.0, %v479
      %v481 = vpop.f32.mrf.mxu0
      %v482 = vpop.f32.mrf.mxu0
      %v483 = vpop.f32.mrf.mxu0
      %484 = vdwg.mxu0
      %485 = vrot.lane.b32.xlu0 %v367, 120
      %v486 = vpop.permute.xlu0 %485
      %487 = vrot.lane.b32.xlu0 %v372, 120
      %v488 = vpop.permute.xlu0 %487
      %v490 = vsel %vm257, %v486, 0
      %v493 = vsel %vm257, %v488, 0
      %495 = vmatprep.subr.bf16.mxu0 0
      %496 = vmatpush1.bf16.xpose.msra.mxu0 0
      %497 = vmatprep.subr.bf16.mxu0 0
      %498 = vmatpush1.bf16.xpose.msra.mxu0 0
      %499 = vmatprep.subr.bf16.mxu0 0
      %500 = vmatpush1.bf16.xpose.msra.mxu0 0
      %501 = vmatprep.subr.bf16.mxu0 0
      %502 = vmatpush1.bf16.xpose.msra.mxu0 0
      %503 = vmatprep.subr.bf16.mxu0 0
      %504 = vmatpush1.bf16.xpose.msra.mxu0 0
      %505 = vmatprep.subr.bf16.mxu0 0
      %506 = vmatpush1.bf16.xpose.msra.mxu0 0
      %507 = vmatprep.subr.bf16.mxu0 0
      %508 = vmatpush1.bf16.xpose.msra.mxu0 0
      %509 = vmatprep.subr.bf16.mxu0 0
      %510 = vmatpush1.bf16.xpose.msra.mxu0 %v493
      %511 = vmatprep.subr.bf16.mxu0 0
      %512 = vmatpush2.bf16.xpose.msra.mxu0 0
      %513 = vmatprep.subr.bf16.mxu0 0
      %514 = vmatpush2.bf16.xpose.msra.mxu0 0
      %515 = vmatprep.subr.bf16.mxu0 0
      %516 = vmatpush2.bf16.xpose.msra.mxu0 0
      %517 = vmatprep.subr.bf16.mxu0 0
      %518 = vmatpush2.bf16.xpose.msra.mxu0 0
      %519 = vmatprep.subr.bf16.mxu0 0
      %520 = vmatpush2.bf16.xpose.msra.mxu0 0
      %521 = vmatprep.subr.bf16.mxu0 0
      %522 = vmatpush2.bf16.xpose.msra.mxu0 0
      %523 = vmatprep.subr.bf16.mxu0 0
      %524 = vmatpush2.bf16.xpose.msra.mxu0 0
      %525 = vmatprep.subr.bf16.mxu0 0
      %526 = vmatpush2.bf16.xpose.msra.mxu0 0
      %527 = vmatprep.mubr.bf16.mxu0 0
      %528 = vmatmul.mubr.bf16.gmra.mxu0 %v490
      %v529 = vpop.f32.mrf.mxu0
      %v530 = vadd.f32 0.0, %v529
      %v531 = vpop.f32.mrf.mxu0
      %v532 = vpop.f32.mrf.mxu0
      %v533 = vpop.f32.mrf.mxu0
      %534 = vdwg.mxu0
      %v535 = vmul.f32 %v530, 0.5
      %v536 = vsel %vm305, %v535, -inf
      %537 = vmax.xlane.f32.xlu0 %v536
      %v538 = vpop.xlane.xlu0 %537
      %v539 = vsub.f32 %v535, %v538
      %v540 = vmul.f32 %v539, 1.442695
      %v541 = vpow.pop %v540
      %v542 = vsel %vm305, %v541, 0.0
      %543 = vadd.xlane.f32.xlu0 %v542
      %v544 = vpop.xlane.xlu0 %543
      %v545 = vrcp.pop %v544
      %v546 = vmul.f32 %v541, %v545
      %v547 = vpack.c.bf16 %v546, %v546
      %548 = vrot.lane.b32.xlu0 %v436, 120
      %v549 = vpop.permute.xlu0 %548
      %v551 = vsel %vm305, %v547, 0
      %v554 = vsel %vm321, %v549, 0
      %556 = vmatprep.subr.bf16.mxu0 0
      %557 = vmatpush1.bf16.msra.mxu0 0
      %558 = vmatprep.subr.bf16.mxu0 0
      %559 = vmatpush1.bf16.msra.mxu0 0
      %560 = vmatprep.subr.bf16.mxu0 0
      %561 = vmatpush1.bf16.msra.mxu0 0
      %562 = vmatprep.subr.bf16.mxu0 0
      %563 = vmatpush1.bf16.msra.mxu0 0
      %564 = vmatprep.subr.bf16.mxu0 0
      %565 = vmatpush1.bf16.msra.mxu0 0
      %566 = vmatprep.subr.bf16.mxu0 0
      %567 = vmatpush1.bf16.msra.mxu0 0
      %568 = vmatprep.subr.bf16.mxu0 0
      %569 = vmatpush1.bf16.msra.mxu0 0
      %570 = vmatprep.subr.bf16.mxu0 0
      %571 = vmatpush1.bf16.msra.mxu0 %v554
      %572 = vmatprep.subr.bf16.mxu0 0
      %573 = vmatpush2.bf16.msra.mxu0 0
      %574 = vmatprep.subr.bf16.mxu0 0
      %575 = vmatpush2.bf16.msra.mxu0 0
      %576 = vmatprep.subr.bf16.mxu0 0
      %577 = vmatpush2.bf16.msra.mxu0 0
      %578 = vmatprep.subr.bf16.mxu0 0
      %579 = vmatpush2.bf16.msra.mxu0 0
      %580 = vmatprep.subr.bf16.mxu0 0
      %581 = vmatpush2.bf16.msra.mxu0 0
      %582 = vmatprep.subr.bf16.mxu0 0
      %583 = vmatpush2.bf16.msra.mxu0 0
      %584 = vmatprep.subr.bf16.mxu0 0
      %585 = vmatpush2.bf16.msra.mxu0 0
      %586 = vmatprep.subr.bf16.mxu0 0
      %587 = vmatpush2.bf16.msra.mxu0 0
      %588 = vmatprep.mubr.bf16.mxu0 0
      %589 = vmatmul.mubr.bf16.gmra.mxu0 %v551
      %v590 = vpop.f32.mrf.mxu0
      %v591 = vadd.f32 0.0, %v590
      %v592 = vpop.f32.mrf.mxu0
      %v593 = vpop.f32.mrf.mxu0
      %v594 = vpop.f32.mrf.mxu0
      %595 = vdwg.mxu0
      %596 = vrot.lane.b32.xlu0 %v367, 116
      %v597 = vpop.permute.xlu0 %596
      %598 = vrot.lane.b32.xlu0 %v372, 116
      %v599 = vpop.permute.xlu0 %598
      %v601 = vsel %vm257, %v597, 0
      %v604 = vsel %vm257, %v599, 0
      %606 = vmatprep.subr.bf16.mxu0 0
      %607 = vmatpush1.bf16.xpose.msra.mxu0 0
      %608 = vmatprep.subr.bf16.mxu0 0
      %609 = vmatpush1.bf16.xpose.msra.mxu0 0
      %610 = vmatprep.subr.bf16.mxu0 0
      %611 = vmatpush1.bf16.xpose.msra.mxu0 0
      %612 = vmatprep.subr.bf16.mxu0 0
      %613 = vmatpush1.bf16.xpose.msra.mxu0 0
      %614 = vmatprep.subr.bf16.mxu0 0
      %615 = vmatpush1.bf16.xpose.msra.mxu0 0
      %616 = vmatprep.subr.bf16.mxu0 0
      %617 = vmatpush1.bf16.xpose.msra.mxu0 0
      %618 = vmatprep.subr.bf16.mxu0 0
      %619 = vmatpush1.bf16.xpose.msra.mxu0 0
      %620 = vmatprep.subr.bf16.mxu0 0
      %621 = vmatpush1.bf16.xpose.msra.mxu0 %v604
      %622 = vmatprep.subr.bf16.mxu0 0
      %623 = vmatpush2.bf16.xpose.msra.mxu0 0
      %624 = vmatprep.subr.bf16.mxu0 0
      %625 = vmatpush2.bf16.xpose.msra.mxu0 0
      %626 = vmatprep.subr.bf16.mxu0 0
      %627 = vmatpush2.bf16.xpose.msra.mxu0 0
      %628 = vmatprep.subr.bf16.mxu0 0
      %629 = vmatpush2.bf16.xpose.msra.mxu0 0
      %630 = vmatprep.subr.bf16.mxu0 0
      %631 = vmatpush2.bf16.xpose.msra.mxu0 0
      %632 = vmatprep.subr.bf16.mxu0 0
      %633 = vmatpush2.bf16.xpose.msra.mxu0 0
      %634 = vmatprep.subr.bf16.mxu0 0
      %635 = vmatpush2.bf16.xpose.msra.mxu0 0
      %636 = vmatprep.subr.bf16.mxu0 0
      %637 = vmatpush2.bf16.xpose.msra.mxu0 0
      %638 = vmatprep.mubr.bf16.mxu0 0
      %639 = vmatmul.mubr.bf16.gmra.mxu0 %v601
      %v640 = vpop.f32.mrf.mxu0
      %v641 = vadd.f32 0.0, %v640
      %v642 = vpop.f32.mrf.mxu0
      %v643 = vpop.f32.mrf.mxu0
      %v644 = vpop.f32.mrf.mxu0
      %645 = vdwg.mxu0
      %v646 = vmul.f32 %v641, 0.5
      %v647 = vsel %vm305, %v646, -inf
      %648 = vmax.xlane.f32.xlu0 %v647
      %v649 = vpop.xlane.xlu0 %648
      %v650 = vsub.f32 %v646, %v649
      %v651 = vmul.f32 %v650, 1.442695
      %v652 = vpow.pop %v651
      %v653 = vsel %vm305, %v652, 0.0
      %654 = vadd.xlane.f32.xlu0 %v653
      %v655 = vpop.xlane.xlu0 %654
      %v656 = vrcp.pop %v655
      %v657 = vmul.f32 %v652, %v656
      %v658 = vpack.c.bf16 %v657, %v657
      %659 = vrot.lane.b32.xlu0 %v436, 116
      %v660 = vpop.permute.xlu0 %659
      %v662 = vsel %vm305, %v658, 0
      %v665 = vsel %vm321, %v660, 0
      %667 = vmatprep.subr.bf16.mxu0 0
      %668 = vmatpush1.bf16.msra.mxu0 0
      %669 = vmatprep.subr.bf16.mxu0 0
      %670 = vmatpush1.bf16.msra.mxu0 0
      %671 = vmatprep.subr.bf16.mxu0 0
      %672 = vmatpush1.bf16.msra.mxu0 0
      %673 = vmatprep.subr.bf16.mxu0 0
      %674 = vmatpush1.bf16.msra.mxu0 0
      %675 = vmatprep.subr.bf16.mxu0 0
      %676 = vmatpush1.bf16.msra.mxu0 0
      %677 = vmatprep.subr.bf16.mxu0 0
      %678 = vmatpush1.bf16.msra.mxu0 0
      %679 = vmatprep.subr.bf16.mxu0 0
      %680 = vmatpush1.bf16.msra.mxu0 0
      %681 = vmatprep.subr.bf16.mxu0 0
      %682 = vmatpush1.bf16.msra.mxu0 %v665
      %683 = vmatprep.subr.bf16.mxu0 0
      %684 = vmatpush2.bf16.msra.mxu0 0
      %685 = vmatprep.subr.bf16.mxu0 0
      %686 = vmatpush2.bf16.msra.mxu0 0
      %687 = vmatprep.subr.bf16.mxu0 0
      %688 = vmatpush2.bf16.msra.mxu0 0
      %689 = vmatprep.subr.bf16.mxu0 0
      %690 = vmatpush2.bf16.msra.mxu0 0
      %691 = vmatprep.subr.bf16.mxu0 0
      %692 = vmatpush2.bf16.msra.mxu0 0
      %693 = vmatprep.subr.bf16.mxu0 0
      %694 = vmatpush2.bf16.msra.mxu0 0
      %695 = vmatprep.subr.bf16.mxu0 0
      %696 = vmatpush2.bf16.msra.mxu0 0
      %697 = vmatprep.subr.bf16.mxu0 0
      %698 = vmatpush2.bf16.msra.mxu0 0
      %699 = vmatprep.mubr.bf16.mxu0 0
      %700 = vmatmul.mubr.bf16.gmra.mxu0 %v662
      %v701 = vpop.f32.mrf.mxu0
      %v702 = vadd.f32 0.0, %v701
      %v703 = vpop.f32.mrf.mxu0
      %v704 = vpop.f32.mrf.mxu0
      %v705 = vpop.f32.mrf.mxu0
      %706 = vdwg.mxu0
      %707 = vrot.lane.b32.xlu0 %v367, 112
      %v708 = vpop.permute.xlu0 %707
      %709 = vrot.lane.b32.xlu0 %v372, 112
      %v710 = vpop.permute.xlu0 %709
      %v712 = vsel %vm257, %v708, 0
      %v715 = vsel %vm257, %v710, 0
      %717 = vmatprep.subr.bf16.mxu0 0
      %718 = vmatpush1.bf16.xpose.msra.mxu0 0
      %719 = vmatprep.subr.bf16.mxu0 0
      %720 = vmatpush1.bf16.xpose.msra.mxu0 0
      %721 = vmatprep.subr.bf16.mxu0 0
      %722 = vmatpush1.bf16.xpose.msra.mxu0 0
      %723 = vmatprep.subr.bf16.mxu0 0
      %724 = vmatpush1.bf16.xpose.msra.mxu0 0
      %725 = vmatprep.subr.bf16.mxu0 0
      %726 = vmatpush1.bf16.xpose.msra.mxu0 0
      %727 = vmatprep.subr.bf16.mxu0 0
      %728 = vmatpush1.bf16.xpose.msra.mxu0 0
      %729 = vmatprep.subr.bf16.mxu0 0
      %730 = vmatpush1.bf16.xpose.msra.mxu0 0
      %731 = vmatprep.subr.bf16.mxu0 0
      %732 = vmatpush1.bf16.xpose.msra.mxu0 %v715
      %733 = vmatprep.subr.bf16.mxu0 0
      %734 = vmatpush2.bf16.xpose.msra.mxu0 0
      %735 = vmatprep.subr.bf16.mxu0 0
      %736 = vmatpush2.bf16.xpose.msra.mxu0 0
      %737 = vmatprep.subr.bf16.mxu0 0
      %738 = vmatpush2.bf16.xpose.msra.mxu0 0
      %739 = vmatprep.subr.bf16.mxu0 0
      %740 = vmatpush2.bf16.xpose.msra.mxu0 0
      %741 = vmatprep.subr.bf16.mxu0 0
      %742 = vmatpush2.bf16.xpose.msra.mxu0 0
      %743 = vmatprep.subr.bf16.mxu0 0
      %744 = vmatpush2.bf16.xpose.msra.mxu0 0
      %745 = vmatprep.subr.bf16.mxu0 0
      %746 = vmatpush2.bf16.xpose.msra.mxu0 0
      %747 = vmatprep.subr.bf16.mxu0 0
      %748 = vmatpush2.bf16.xpose.msra.mxu0 0
      %749 = vmatprep.mubr.bf16.mxu0 0
      %750 = vmatmul.mubr.bf16.gmra.mxu0 %v712
      %v751 = vpop.f32.mrf.mxu0
      %v752 = vadd.f32 0.0, %v751
      %v753 = vpop.f32.mrf.mxu0
      %v754 = vpop.f32.mrf.mxu0
      %v755 = vpop.f32.mrf.mxu0
      %756 = vdwg.mxu0
      %v757 = vmul.f32 %v752, 0.5
      %v758 = vsel %vm305, %v757, -inf
      %759 = vmax.xlane.f32.xlu0 %v758
      %v760 = vpop.xlane.xlu0 %759
      %v761 = vsub.f32 %v757, %v760
      %v762 = vmul.f32 %v761, 1.442695
      %v763 = vpow.pop %v762
      %v764 = vsel %vm305, %v763, 0.0
      %765 = vadd.xlane.f32.xlu0 %v764
      %v766 = vpop.xlane.xlu0 %765
      %v767 = vrcp.pop %v766
      %v768 = vmul.f32 %v763, %v767
      %v769 = vpack.c.bf16 %v768, %v768
      %770 = vrot.lane.b32.xlu0 %v436, 112
      %v771 = vpop.permute.xlu0 %770
      %v773 = vsel %vm305, %v769, 0
      %v776 = vsel %vm321, %v771, 0
      %778 = vmatprep.subr.bf16.mxu0 0
      %779 = vmatpush1.bf16.msra.mxu0 0
      %780 = vmatprep.subr.bf16.mxu0 0
      %781 = vmatpush1.bf16.msra.mxu0 0
      %782 = vmatprep.subr.bf16.mxu0 0
      %783 = vmatpush1.bf16.msra.mxu0 0
      %784 = vmatprep.subr.bf16.mxu0 0
      %785 = vmatpush1.bf16.msra.mxu0 0
      %786 = vmatprep.subr.bf16.mxu0 0
      %787 = vmatpush1.bf16.msra.mxu0 0
      %788 = vmatprep.subr.bf16.mxu0 0
      %789 = vmatpush1.bf16.msra.mxu0 0
      %790 = vmatprep.subr.bf16.mxu0 0
      %791 = vmatpush1.bf16.msra.mxu0 0
      %792 = vmatprep.subr.bf16.mxu0 0
      %793 = vmatpush1.bf16.msra.mxu0 %v776
      %794 = vmatprep.subr.bf16.mxu0 0
      %795 = vmatpush2.bf16.msra.mxu0 0
      %796 = vmatprep.subr.bf16.mxu0 0
      %797 = vmatpush2.bf16.msra.mxu0 0
      %798 = vmatprep.subr.bf16.mxu0 0
      %799 = vmatpush2.bf16.msra.mxu0 0
      %800 = vmatprep.subr.bf16.mxu0 0
      %801 = vmatpush2.bf16.msra.mxu0 0
      %802 = vmatprep.subr.bf16.mxu0 0
      %803 = vmatpush2.bf16.msra.mxu0 0
      %804 = vmatprep.subr.bf16.mxu0 0
      %805 = vmatpush2.bf16.msra.mxu0 0
      %806 = vmatprep.subr.bf16.mxu0 0
      %807 = vmatpush2.bf16.msra.mxu0 0
      %808 = vmatprep.subr.bf16.mxu0 0
      %809 = vmatpush2.bf16.msra.mxu0 0
      %810 = vmatprep.mubr.bf16.mxu0 0
      %811 = vmatmul.mubr.bf16.gmra.mxu0 %v773
      %v812 = vpop.f32.mrf.mxu0
      %v813 = vadd.f32 0.0, %v812
      %v814 = vpop.f32.mrf.mxu0
      %v815 = vpop.f32.mrf.mxu0
      %v816 = vpop.f32.mrf.mxu0
      %817 = vdwg.mxu0
      %818 = vrot.lane.b32.xlu0 %v367, 108
      %v819 = vpop.permute.xlu0 %818
      %820 = vrot.lane.b32.xlu0 %v372, 108
      %v821 = vpop.permute.xlu0 %820
      %v823 = vsel %vm257, %v819, 0
      %v826 = vsel %vm257, %v821, 0
      %828 = vmatprep.subr.bf16.mxu0 0
      %829 = vmatpush1.bf16.xpose.msra.mxu0 0
      %830 = vmatprep.subr.bf16.mxu0 0
      %831 = vmatpush1.bf16.xpose.msra.mxu0 0
      %832 = vmatprep.subr.bf16.mxu0 0
      %833 = vmatpush1.bf16.xpose.msra.mxu0 0
      %834 = vmatprep.subr.bf16.mxu0 0
      %835 = vmatpush1.bf16.xpose.msra.mxu0 0
      %836 = vmatprep.subr.bf16.mxu0 0
      %837 = vmatpush1.bf16.xpose.msra.mxu0 0
      %838 = vmatprep.subr.bf16.mxu0 0
      %839 = vmatpush1.bf16.xpose.msra.mxu0 0
      %840 = vmatprep.subr.bf16.mxu0 0
      %841 = vmatpush1.bf16.xpose.msra.mxu0 0
      %842 = vmatprep.subr.bf16.mxu0 0
      %843 = vmatpush1.bf16.xpose.msra.mxu0 %v826
      %844 = vmatprep.subr.bf16.mxu0 0
      %845 = vmatpush2.bf16.xpose.msra.mxu0 0
      %846 = vmatprep.subr.bf16.mxu0 0
      %847 = vmatpush2.bf16.xpose.msra.mxu0 0
      %848 = vmatprep.subr.bf16.mxu0 0
      %849 = vmatpush2.bf16.xpose.msra.mxu0 0
      %850 = vmatprep.subr.bf16.mxu0 0
      %851 = vmatpush2.bf16.xpose.msra.mxu0 0
      %852 = vmatprep.subr.bf16.mxu0 0
      %853 = vmatpush2.bf16.xpose.msra.mxu0 0
      %854 = vmatprep.subr.bf16.mxu0 0
      %855 = vmatpush2.bf16.xpose.msra.mxu0 0
      %856 = vmatprep.subr.bf16.mxu0 0
      %857 = vmatpush2.bf16.xpose.msra.mxu0 0
      %858 = vmatprep.subr.bf16.mxu0 0
      %859 = vmatpush2.bf16.xpose.msra.mxu0 0
      %860 = vmatprep.mubr.bf16.mxu0 0
      %861 = vmatmul.mubr.bf16.gmra.mxu0 %v823
      %v862 = vpop.f32.mrf.mxu0
      %v863 = vadd.f32 0.0, %v862
      %v864 = vpop.f32.mrf.mxu0
      %v865 = vpop.f32.mrf.mxu0
      %v866 = vpop.f32.mrf.mxu0
      %867 = vdwg.mxu0
      %v868 = vmul.f32 %v863, 0.5
      %v869 = vsel %vm305, %v868, -inf
      %870 = vmax.xlane.f32.xlu0 %v869
      %v871 = vpop.xlane.xlu0 %870
      %v872 = vsub.f32 %v868, %v871
      %v873 = vmul.f32 %v872, 1.442695
      %v874 = vpow.pop %v873
      %v875 = vsel %vm305, %v874, 0.0
      %876 = vadd.xlane.f32.xlu0 %v875
      %v877 = vpop.xlane.xlu0 %876
      %v878 = vrcp.pop %v877
      %v879 = vmul.f32 %v874, %v878
      %v880 = vpack.c.bf16 %v879, %v879
      %881 = vrot.lane.b32.xlu0 %v436, 108
      %v882 = vpop.permute.xlu0 %881
      %v884 = vsel %vm305, %v880, 0
      %v887 = vsel %vm321, %v882, 0
      %889 = vmatprep.subr.bf16.mxu0 0
      %890 = vmatpush1.bf16.msra.mxu0 0
      %891 = vmatprep.subr.bf16.mxu0 0
      %892 = vmatpush1.bf16.msra.mxu0 0
      %893 = vmatprep.subr.bf16.mxu0 0
      %894 = vmatpush1.bf16.msra.mxu0 0
      %895 = vmatprep.subr.bf16.mxu0 0
      %896 = vmatpush1.bf16.msra.mxu0 0
      %897 = vmatprep.subr.bf16.mxu0 0
      %898 = vmatpush1.bf16.msra.mxu0 0
      %899 = vmatprep.subr.bf16.mxu0 0
      %900 = vmatpush1.bf16.msra.mxu0 0
      %901 = vmatprep.subr.bf16.mxu0 0
      %902 = vmatpush1.bf16.msra.mxu0 0
      %903 = vmatprep.subr.bf16.mxu0 0
      %904 = vmatpush1.bf16.msra.mxu0 %v887
      %905 = vmatprep.subr.bf16.mxu0 0
      %906 = vmatpush2.bf16.msra.mxu0 0
      %907 = vmatprep.subr.bf16.mxu0 0
      %908 = vmatpush2.bf16.msra.mxu0 0
      %909 = vmatprep.subr.bf16.mxu0 0
      %910 = vmatpush2.bf16.msra.mxu0 0
      %911 = vmatprep.subr.bf16.mxu0 0
      %912 = vmatpush2.bf16.msra.mxu0 0
      %913 = vmatprep.subr.bf16.mxu0 0
      %914 = vmatpush2.bf16.msra.mxu0 0
      %915 = vmatprep.subr.bf16.mxu0 0
      %916 = vmatpush2.bf16.msra.mxu0 0
      %917 = vmatprep.subr.bf16.mxu0 0
      %918 = vmatpush2.bf16.msra.mxu0 0
      %919 = vmatprep.subr.bf16.mxu0 0
      %920 = vmatpush2.bf16.msra.mxu0 0
      %921 = vmatprep.mubr.bf16.mxu0 0
      %922 = vmatmul.mubr.bf16.gmra.mxu0 %v884
      %v923 = vpop.f32.mrf.mxu0
      %v924 = vadd.f32 0.0, %v923
      %v925 = vpop.f32.mrf.mxu0
      %v926 = vpop.f32.mrf.mxu0
      %v927 = vpop.f32.mrf.mxu0
      %928 = vdwg.mxu0
      %929 = vrot.lane.b32.xlu0 %v367, 104
      %v930 = vpop.permute.xlu0 %929
      %931 = vrot.lane.b32.xlu0 %v372, 104
      %v932 = vpop.permute.xlu0 %931
      %v934 = vsel %vm257, %v930, 0
      %v937 = vsel %vm257, %v932, 0
      %939 = vmatprep.subr.bf16.mxu0 0
      %940 = vmatpush1.bf16.xpose.msra.mxu0 0
      %941 = vmatprep.subr.bf16.mxu0 0
      %942 = vmatpush1.bf16.xpose.msra.mxu0 0
      %943 = vmatprep.subr.bf16.mxu0 0
      %944 = vmatpush1.bf16.xpose.msra.mxu0 0
      %945 = vmatprep.subr.bf16.mxu0 0
      %946 = vmatpush1.bf16.xpose.msra.mxu0 0
      %947 = vmatprep.subr.bf16.mxu0 0
      %948 = vmatpush1.bf16.xpose.msra.mxu0 0
      %949 = vmatprep.subr.bf16.mxu0 0
      %950 = vmatpush1.bf16.xpose.msra.mxu0 0
      %951 = vmatprep.subr.bf16.mxu0 0
      %952 = vmatpush1.bf16.xpose.msra.mxu0 0
      %953 = vmatprep.subr.bf16.mxu0 0
      %954 = vmatpush1.bf16.xpose.msra.mxu0 %v937
      %955 = vmatprep.subr.bf16.mxu0 0
      %956 = vmatpush2.bf16.xpose.msra.mxu0 0
      %957 = vmatprep.subr.bf16.mxu0 0
      %958 = vmatpush2.bf16.xpose.msra.mxu0 0
      %959 = vmatprep.subr.bf16.mxu0 0
      %960 = vmatpush2.bf16.xpose.msra.mxu0 0
      %961 = vmatprep.subr.bf16.mxu0 0
      %962 = vmatpush2.bf16.xpose.msra.mxu0 0
      %963 = vmatprep.subr.bf16.mxu0 0
      %964 = vmatpush2.bf16.xpose.msra.mxu0 0
      %965 = vmatprep.subr.bf16.mxu0 0
      %966 = vmatpush2.bf16.xpose.msra.mxu0 0
      %967 = vmatprep.subr.bf16.mxu0 0
      %968 = vmatpush2.bf16.xpose.msra.mxu0 0
      %969 = vmatprep.subr.bf16.mxu0 0
      %970 = vmatpush2.bf16.xpose.msra.mxu0 0
      %971 = vmatprep.mubr.bf16.mxu0 0
      %972 = vmatmul.mubr.bf16.gmra.mxu0 %v934
      %v973 = vpop.f32.mrf.mxu0
      %v974 = vadd.f32 0.0, %v973
      %v975 = vpop.f32.mrf.mxu0
      %v976 = vpop.f32.mrf.mxu0
      %v977 = vpop.f32.mrf.mxu0
      %978 = vdwg.mxu0
      %v979 = vmul.f32 %v974, 0.5
      %v980 = vsel %vm305, %v979, -inf
      %981 = vmax.xlane.f32.xlu0 %v980
      %v982 = vpop.xlane.xlu0 %981
      %v983 = vsub.f32 %v979, %v982
      %v984 = vmul.f32 %v983, 1.442695
      %v985 = vpow.pop %v984
      %v986 = vsel %vm305, %v985, 0.0
      %987 = vadd.xlane.f32.xlu0 %v986
      %v988 = vpop.xlane.xlu0 %987
      %v989 = vrcp.pop %v988
      %v990 = vmul.f32 %v985, %v989
      %v991 = vpack.c.bf16 %v990, %v990
      %992 = vrot.lane.b32.xlu0 %v436, 104
      %v993 = vpop.permute.xlu0 %992
      %v995 = vsel %vm305, %v991, 0
      %v998 = vsel %vm321, %v993, 0
      %1000 = vmatprep.subr.bf16.mxu0 0
      %1001 = vmatpush1.bf16.msra.mxu0 0
      %1002 = vmatprep.subr.bf16.mxu0 0
      %1003 = vmatpush1.bf16.msra.mxu0 0
      %1004 = vmatprep.subr.bf16.mxu0 0
      %1005 = vmatpush1.bf16.msra.mxu0 0
      %1006 = vmatprep.subr.bf16.mxu0 0
      %1007 = vmatpush1.bf16.msra.mxu0 0
      %1008 = vmatprep.subr.bf16.mxu0 0
      %1009 = vmatpush1.bf16.msra.mxu0 0
      %1010 = vmatprep.subr.bf16.mxu0 0
      %1011 = vmatpush1.bf16.msra.mxu0 0
      %1012 = vmatprep.subr.bf16.mxu0 0
      %1013 = vmatpush1.bf16.msra.mxu0 0
      %1014 = vmatprep.subr.bf16.mxu0 0
      %1015 = vmatpush1.bf16.msra.mxu0 %v998
      %1016 = vmatprep.subr.bf16.mxu0 0
      %1017 = vmatpush2.bf16.msra.mxu0 0
      %1018 = vmatprep.subr.bf16.mxu0 0
      %1019 = vmatpush2.bf16.msra.mxu0 0
      %1020 = vmatprep.subr.bf16.mxu0 0
      %1021 = vmatpush2.bf16.msra.mxu0 0
      %1022 = vmatprep.subr.bf16.mxu0 0
      %1023 = vmatpush2.bf16.msra.mxu0 0
      %1024 = vmatprep.subr.bf16.mxu0 0
      %1025 = vmatpush2.bf16.msra.mxu0 0
      %1026 = vmatprep.subr.bf16.mxu0 0
      %1027 = vmatpush2.bf16.msra.mxu0 0
      %1028 = vmatprep.subr.bf16.mxu0 0
      %1029 = vmatpush2.bf16.msra.mxu0 0
      %1030 = vmatprep.subr.bf16.mxu0 0
      %1031 = vmatpush2.bf16.msra.mxu0 0
      %1032 = vmatprep.mubr.bf16.mxu0 0
      %1033 = vmatmul.mubr.bf16.gmra.mxu0 %v995
      %v1034 = vpop.f32.mrf.mxu0
      %v1035 = vadd.f32 0.0, %v1034
      %v1036 = vpop.f32.mrf.mxu0
      %v1037 = vpop.f32.mrf.mxu0
      %v1038 = vpop.f32.mrf.mxu0
      %1039 = vdwg.mxu0
      %1040 = vrot.lane.b32.xlu0 %v367, 100
      %v1041 = vpop.permute.xlu0 %1040
      %1042 = vrot.lane.b32.xlu0 %v372, 100
      %v1043 = vpop.permute.xlu0 %1042
      %v1045 = vsel %vm257, %v1041, 0
      %v1048 = vsel %vm257, %v1043, 0
      %1050 = vmatprep.subr.bf16.mxu0 0
      %1051 = vmatpush1.bf16.xpose.msra.mxu0 0
      %1052 = vmatprep.subr.bf16.mxu0 0
      %1053 = vmatpush1.bf16.xpose.msra.mxu0 0
      %1054 = vmatprep.subr.bf16.mxu0 0
      %1055 = vmatpush1.bf16.xpose.msra.mxu0 0
      %1056 = vmatprep.subr.bf16.mxu0 0
      %1057 = vmatpush1.bf16.xpose.msra.mxu0 0
      %1058 = vmatprep.subr.bf16.mxu0 0
      %1059 = vmatpush1.bf16.xpose.msra.mxu0 0
      %1060 = vmatprep.subr.bf16.mxu0 0
      %1061 = vmatpush1.bf16.xpose.msra.mxu0 0
      %1062 = vmatprep.subr.bf16.mxu0 0
      %1063 = vmatpush1.bf16.xpose.msra.mxu0 0
      %1064 = vmatprep.subr.bf16.mxu0 0
      %1065 = vmatpush1.bf16.xpose.msra.mxu0 %v1048
      %1066 = vmatprep.subr.bf16.mxu0 0
      %1067 = vmatpush2.bf16.xpose.msra.mxu0 0
      %1068 = vmatprep.subr.bf16.mxu0 0
      %1069 = vmatpush2.bf16.xpose.msra.mxu0 0
      %1070 = vmatprep.subr.bf16.mxu0 0
      %1071 = vmatpush2.bf16.xpose.msra.mxu0 0
      %1072 = vmatprep.subr.bf16.mxu0 0
      %1073 = vmatpush2.bf16.xpose.msra.mxu0 0
      %1074 = vmatprep.subr.bf16.mxu0 0
      %1075 = vmatpush2.bf16.xpose.msra.mxu0 0
      %1076 = vmatprep.subr.bf16.mxu0 0
      %1077 = vmatpush2.bf16.xpose.msra.mxu0 0
      %1078 = vmatprep.subr.bf16.mxu0 0
      %1079 = vmatpush2.bf16.xpose.msra.mxu0 0
      %1080 = vmatprep.subr.bf16.mxu0 0
      %1081 = vmatpush2.bf16.xpose.msra.mxu0 0
      %1082 = vmatprep.mubr.bf16.mxu0 0
      %1083 = vmatmul.mubr.bf16.gmra.mxu0 %v1045
      %v1084 = vpop.f32.mrf.mxu0
      %v1085 = vadd.f32 0.0, %v1084
      %v1086 = vpop.f32.mrf.mxu0
      %v1087 = vpop.f32.mrf.mxu0
      %v1088 = vpop.f32.mrf.mxu0
      %1089 = vdwg.mxu0
      %v1090 = vmul.f32 %v1085, 0.5
      %v1091 = vsel %vm305, %v1090, -inf
      %1092 = vmax.xlane.f32.xlu0 %v1091
      %v1093 = vpop.xlane.xlu0 %1092
      %v1094 = vsub.f32 %v1090, %v1093
      %v1095 = vmul.f32 %v1094, 1.442695
      %v1096 = vpow.pop %v1095
      %v1097 = vsel %vm305, %v1096, 0.0
      %1098 = vadd.xlane.f32.xlu0 %v1097
      %v1099 = vpop.xlane.xlu0 %1098
      %v1100 = vrcp.pop %v1099
      %v1101 = vmul.f32 %v1096, %v1100
      %v1102 = vpack.c.bf16 %v1101, %v1101
      %1103 = vrot.lane.b32.xlu0 %v436, 100
      %v1104 = vpop.permute.xlu0 %1103
      %v1106 = vsel %vm305, %v1102, 0
      %v1109 = vsel %vm321, %v1104, 0
      %1111 = vmatprep.subr.bf16.mxu0 0
      %1112 = vmatpush1.bf16.msra.mxu0 0
      %1113 = vmatprep.subr.bf16.mxu0 0
      %1114 = vmatpush1.bf16.msra.mxu0 0
      %1115 = vmatprep.subr.bf16.mxu0 0
      %1116 = vmatpush1.bf16.msra.mxu0 0
      %1117 = vmatprep.subr.bf16.mxu0 0
      %1118 = vmatpush1.bf16.msra.mxu0 0
      %1119 = vmatprep.subr.bf16.mxu0 0
      %1120 = vmatpush1.bf16.msra.mxu0 0
      %1121 = vmatprep.subr.bf16.mxu0 0
      %1122 = vmatpush1.bf16.msra.mxu0 0
      %1123 = vmatprep.subr.bf16.mxu0 0
      %1124 = vmatpush1.bf16.msra.mxu0 0
      %1125 = vmatprep.subr.bf16.mxu0 0
      %1126 = vmatpush1.bf16.msra.mxu0 %v1109
      %1127 = vmatprep.subr.bf16.mxu0 0
      %1128 = vmatpush2.bf16.msra.mxu0 0
      %1129 = vmatprep.subr.bf16.mxu0 0
      %1130 = vmatpush2.bf16.msra.mxu0 0
      %1131 = vmatprep.subr.bf16.mxu0 0
      %1132 = vmatpush2.bf16.msra.mxu0 0
      %1133 = vmatprep.subr.bf16.mxu0 0
      %1134 = vmatpush2.bf16.msra.mxu0 0
      %1135 = vmatprep.subr.bf16.mxu0 0
      %1136 = vmatpush2.bf16.msra.mxu0 0
      %1137 = vmatprep.subr.bf16.mxu0 0
      %1138 = vmatpush2.bf16.msra.mxu0 0
      %1139 = vmatprep.subr.bf16.mxu0 0
      %1140 = vmatpush2.bf16.msra.mxu0 0
      %1141 = vmatprep.subr.bf16.mxu0 0
      %1142 = vmatpush2.bf16.msra.mxu0 0
      %1143 = vmatprep.mubr.bf16.mxu0 0
      %1144 = vmatmul.mubr.bf16.gmra.mxu0 %v1106
      %v1145 = vpop.f32.mrf.mxu0
      %v1146 = vadd.f32 0.0, %v1145
      %v1147 = vpop.f32.mrf.mxu0
      %v1148 = vpop.f32.mrf.mxu0
      %v1149 = vpop.f32.mrf.mxu0
      %1150 = vdwg.mxu0
      %1152 = vrot.lane.b32.xlu0 %v480, 4
      %v1153 = vpop.permute.xlu0 %1152
      %1156 = vrot.lane.b32.xlu0 %v591, 8
      %v1157 = vpop.permute.xlu0 %1156
      %1160 = vrot.lane.b32.xlu0 %v702, 12
      %v1161 = vpop.permute.xlu0 %1160
      %1164 = vrot.lane.b32.xlu0 %v813, 16
      %v1165 = vpop.permute.xlu0 %1164
      %1168 = vrot.lane.b32.xlu0 %v924, 20
      %v1169 = vpop.permute.xlu0 %1168
      %1172 = vrot.lane.b32.xlu0 %v1035, 24
      %v1173 = vpop.permute.xlu0 %1172
      %1176 = vrot.lane.b32.xlu0 %v1146, 28
      %v1177 = vpop.permute.xlu0 %1176
      %v1179 = vsel %vm257, %v360, %v1153
      %v1180 = vsel %vm305, %v1179, %v1157
      %vm1181 = vcmask 97280
      %v1182 = vsel %vm1181, %v1180, %v1161
      %vm1183 = vcmask 130048
      %v1184 = vsel %vm1183, %v1182, %v1165
      %vm1185 = vcmask 162816
      %v1186 = vsel %vm1185, %v1184, %v1169
      %vm1187 = vcmask 195584
      %v1188 = vsel %vm1187, %v1186, %v1173
      %vm1189 = vcmask 228352
      %v1190 = vsel %vm1189, %v1188, %v1177
      %v1191 = vpack.c.bf16 %v1190, %v1190
      %vm1192 = vcmask 257024
      %1193 = vst.msk [vmem:[%s252] sm:$0xf] %vm1192, %v1191
      %p1194 = scmp.lt.s32.totalorder %s18, 1
      %s1195 = scalar_select %p1194, %s18, 1
      %p1196 = scmp.lt.s32.totalorder %s19, 0
      %s1197 = scalar_select %p1196, %s19, 0
      %s1198 = sadd.s32 %s1197, %s1195
      %s1199 = smul.addr %s1198, 4
      %s1200 = scalar_lea.vmem %s3, %s1199
      // Predicated region
      $region33: #{dca_transformer_forward.7} parent=31 // pred_check
        %p1201 = pneg %p130
      $region34: #{dca_transformer_forward.7} parent=31 // pred_check_branch
        %1203 = sbr.rel (%p1201) target = $region36
      $region35: #{dca_transformer_forward.7} parent=31 // pred_region
        _
      $region36: #{dca_transformer_forward.7} parent=31 // pred_fallthru
        _
    $region32: #{dca_transformer_forward.7} parent=5 // pred_fallthru
      _
    %p1204 = scmp.le.s32.totalorder 2, %s9
    // Predicated region
    $region37: #{dca_transformer_forward.7} parent=5 // pred_check
      %p1205 = pneg %p1204
    $region38: #{dca_transformer_forward.7} parent=5 // pred_check_branch
      %1207 = sbr.rel (%p1205) target = $region40
    $region39: #{dca_transformer_forward.7} parent=5 // pred_region
      %s1208 = ssub.s32 %s9, 2
      // Predicated region
      $region41: #{dca_transformer_forward.7} parent=39 // pred_check
        %p1209 = pneg %p136
      $region42: #{dca_transformer_forward.7} parent=39 // pred_check_branch
        %1211 = sbr.rel (%p1209) target = $region44
      $region43: #{dca_transformer_forward.7} parent=39 // pred_region
        %p1212 = scmp.lt.s32.totalorder %s20, 1
        %s1213 = scalar_select %p1212, %s20, 1
        %p1214 = scmp.lt.s32.totalorder %s21, 0
        %s1215 = scalar_select %p1214, %s21, 0
        %s1216 = sadd.s32 %s1215, %s1213
        %s1217 = smul.addr %s1216, 4
        %s1218 = scalar_lea.vmem %s3, %s1217
      $region44: #{dca_transformer_forward.7} parent=39 // pred_fallthru
        _
    $region40: #{dca_transformer_forward.7} parent=5 // pred_fallthru
      _
  $region6: #{dca_transformer_forward.7} parent=0 // loop_footer
    %s13 = sadd.s32 1, %s9
  $region7: #{dca_transformer_forward.7} parent=0 // loop_footer_branch
    %8 = sbr.rel target = $region3
  $region8: #{dca_transformer_forward.7} parent=0 // loop_exit
    _

// kernel: dca_transformer_forward.8
$region0: #{dca_transformer_forward.8}
  #allocation0 [shape = 'u32[]', space=smem, size = 0x4, offset = 0x4, fixed_abs, tag = 'smem constant byte address 0x4 - core index']
  #allocation1 [shape = 'u32[144,128]{1,0:T(1,128)}', space=vmem, size = 0x12000, scoped, tag = 'internal scratch']
  %s0 = inlined_call_operand.vmem [shape: f32[16,32], index: 0, kind: input, shape index: {}]
  %s1 = inlined_call_operand.vmem [shape: bf16[16,32], index: 1, kind: input, shape index: {}]
  %s2 = inlined_call_operand.vmem [shape: bf16[32,32], index: 2, kind: input, shape index: {}]
  %s3 = inlined_call_operand.vmem [shape: f32[1,32], index: 3, kind: input, shape index: {}]
  %s4 = inlined_call_operand.vmem [shape: f32[1,32], index: 4, kind: input, shape index: {}]
  %s5 = inlined_call_operand.vmem [shape: f32[1,32], index: 5, kind: input, shape index: {}]
  %s6 = inlined_call_operand.vmem [shape: bf16[32,128], index: 6, kind: input, shape index: {}]
  %s7 = inlined_call_operand.vmem [shape: f32[1,128], index: 7, kind: input, shape index: {}]
  %s8 = inlined_call_operand.vmem [shape: bf16[128,32], index: 8, kind: input, shape index: {}]
  %s9 = inlined_call_operand.vmem [shape: f32[1,32], index: 9, kind: input, shape index: {}]
  %s10 = inlined_call_operand.vmem [shape: f32[1,32], index: 10, kind: input, shape index: {}]
  %s11 = inlined_call_operand.vmem [shape: f32[1,32], index: 11, kind: input, shape index: {}]
  %s12 = inlined_call_operand.vmem [shape: f32[16,32], index: 12, kind: output, shape index: {}]
  %s13 = sld [smem:[#allocation0]]
  $region58: #{dca_transformer_forward.8} parent=0
    _
  %s15 = ssub.s32 1, %s13
  %s16 = scalar_select 0, %s15, %s13
  // Predicated region
  $region2: #{dca_transformer_forward.8} parent=0 // pred_check
    _
  $region3: #{dca_transformer_forward.8} parent=0 // pred_check_branch
    %18 = sbr.rel (0) target = $region5
  $region4: #{dca_transformer_forward.8} parent=0 // pred_region
    _
  $region5: #{dca_transformer_forward.8} parent=0 // pred_fallthru
    _
  // Predicated region
  $region6: #{dca_transformer_forward.8} parent=0 // pred_check
    _
  $region7: #{dca_transformer_forward.8} parent=0 // pred_check_branch
    %20 = sbr.rel (0) target = $region9
  $region8: #{dca_transformer_forward.8} parent=0 // pred_region
    _
  $region9: #{dca_transformer_forward.8} parent=0 // pred_fallthru
    _
  // Predicated region
  $region10: #{dca_transformer_forward.8} parent=0 // pred_check
    _
  $region11: #{dca_transformer_forward.8} parent=0 // pred_check_branch
    %22 = sbr.rel (0) target = $region13
  $region12: #{dca_transformer_forward.8} parent=0 // pred_region
    _
  $region13: #{dca_transformer_forward.8} parent=0 // pred_fallthru
    _
  // Predicated region
  $region14: #{dca_transformer_forward.8} parent=0 // pred_check
    _
  $region15: #{dca_transformer_forward.8} parent=0 // pred_check_branch
    %24 = sbr.rel (0) target = $region17
  $region16: #{dca_transformer_forward.8} parent=0 // pred_region
    _
  $region17: #{dca_transformer_forward.8} parent=0 // pred_fallthru
    _
  // Predicated region
  $region18: #{dca_transformer_forward.8} parent=0 // pred_check
    _
  $region19: #{dca_transformer_forward.8} parent=0 // pred_check_branch
    %26 = sbr.rel (0) target = $region21
  $region20: #{dca_transformer_forward.8} parent=0 // pred_region
    _
  $region21: #{dca_transformer_forward.8} parent=0 // pred_fallthru
    _
  // Predicated region
  $region22: #{dca_transformer_forward.8} parent=0 // pred_check
    _
  $region23: #{dca_transformer_forward.8} parent=0 // pred_check_branch
    %28 = sbr.rel (0) target = $region25
  $region24: #{dca_transformer_forward.8} parent=0 // pred_region
    _
  $region25: #{dca_transformer_forward.8} parent=0 // pred_fallthru
    _
  // Predicated region
  $region26: #{dca_transformer_forward.8} parent=0 // pred_check
    _
  $region27: #{dca_transformer_forward.8} parent=0 // pred_check_branch
    %30 = sbr.rel (0) target = $region29
  $region28: #{dca_transformer_forward.8} parent=0 // pred_region
    _
  $region29: #{dca_transformer_forward.8} parent=0 // pred_fallthru
    _
  // Predicated region
  $region30: #{dca_transformer_forward.8} parent=0 // pred_check
    _
  $region31: #{dca_transformer_forward.8} parent=0 // pred_check_branch
    %32 = sbr.rel (0) target = $region33
  $region32: #{dca_transformer_forward.8} parent=0 // pred_region
    _
  $region33: #{dca_transformer_forward.8} parent=0 // pred_fallthru
    _
  // Predicated region
  $region34: #{dca_transformer_forward.8} parent=0 // pred_check
    _
  $region35: #{dca_transformer_forward.8} parent=0 // pred_check_branch
    %34 = sbr.rel (0) target = $region37
  $region36: #{dca_transformer_forward.8} parent=0 // pred_region
    _
  $region37: #{dca_transformer_forward.8} parent=0 // pred_fallthru
    _
  // Predicated region
  $region38: #{dca_transformer_forward.8} parent=0 // pred_check
    _
  $region39: #{dca_transformer_forward.8} parent=0 // pred_check_branch
    %36 = sbr.rel (0) target = $region41
  $region40: #{dca_transformer_forward.8} parent=0 // pred_region
    _
  $region41: #{dca_transformer_forward.8} parent=0 // pred_fallthru
    _
  // Predicated region
  $region42: #{dca_transformer_forward.8} parent=0 // pred_check
    _
  $region43: #{dca_transformer_forward.8} parent=0 // pred_check_branch
    %38 = sbr.rel (0) target = $region45
  $region44: #{dca_transformer_forward.8} parent=0 // pred_region
    _
  $region45: #{dca_transformer_forward.8} parent=0 // pred_fallthru
    _
  // Predicated region
  $region46: #{dca_transformer_forward.8} parent=0 // pred_check
    _
  $region47: #{dca_transformer_forward.8} parent=0 // pred_check_branch
    %40 = sbr.rel (0) target = $region49
  $region48: #{dca_transformer_forward.8} parent=0 // pred_region
    _
  $region49: #{dca_transformer_forward.8} parent=0 // pred_fallthru
    _
  %v42 = vld [vmem:[%s0] sm:$0xff]
  %v43 = vld [vmem:[%s0 + $0x8] sm:$0xff]
  %v44 = vld [vmem:[%s1] sm:$0xf]
  %v45 = vld [vmem:[%s1 + $0x4] sm:$0xf]
  %v46 = vld [vmem:[%s2] sm:$0xf]
  %v47 = vld [vmem:[%s2 + $0x4] sm:$0xf]
  %v48 = vld [vmem:[%s2 + $0x8] sm:$0xf]
  %v49 = vld [vmem:[%s2 + $0xc] sm:$0xf]
  %v50 = vld [vmem:[%s3] sm:$0x1]
  %v52 = vlaneseq
  %v53 = vshrl.u32 %v52, 7
  %v54 = vsub.s32 0, %v53
  %v55 = vrot.slane %v50, %v54
  %v59 = vunpack.c.l.b16 %v44
  %v60 = vunpack.c.l.b16 %v45
  %v61 = vpack.c.b16 %v60, %v59
  %v66 = vunpack.c.l.b16 %v46
  %v67 = vunpack.c.l.b16 %v47
  %v68 = vunpack.c.l.b16 %v48
  %v69 = vunpack.c.l.b16 %v49
  %v70 = vpack.c.b16 %v67, %v66
  %v71 = vpack.c.b16 %v69, %v68
  %vm74 = vcmask 261120
  %v76 = vsel %vm74, %v61, 0
  %78 = vmatprep.subr.bf16.mxu0 0
  %79 = vmatpush1.bf16.msra.mxu0 0
  %80 = vmatprep.subr.bf16.mxu0 0
  %81 = vmatpush1.bf16.msra.mxu0 0
  %82 = vmatprep.subr.bf16.mxu0 0
  %83 = vmatpush1.bf16.msra.mxu0 0
  %84 = vmatprep.subr.bf16.mxu0 0
  %85 = vmatpush1.bf16.msra.mxu0 0
  %86 = vmatprep.subr.bf16.mxu0 0
  %87 = vmatpush1.bf16.msra.mxu0 0
  %88 = vmatprep.subr.bf16.mxu0 0
  %89 = vmatpush1.bf16.msra.mxu0 0
  %90 = vmatprep.subr.bf16.mxu0 0
  %91 = vmatpush1.bf16.msra.mxu0 %v71
  %92 = vmatprep.subr.bf16.mxu0 0
  %93 = vmatpush1.bf16.msra.mxu0 %v70
  %94 = vmatprep.subr.bf16.mxu0 0
  %95 = vmatpush2.bf16.msra.mxu0 0
  %96 = vmatprep.subr.bf16.mxu0 0
  %97 = vmatpush2.bf16.msra.mxu0 0
  %98 = vmatprep.subr.bf16.mxu0 0
  %99 = vmatpush2.bf16.msra.mxu0 0
  %100 = vmatprep.subr.bf16.mxu0 0
  %101 = vmatpush2.bf16.msra.mxu0 0
  %102 = vmatprep.subr.bf16.mxu0 0
  %103 = vmatpush2.bf16.msra.mxu0 0
  %104 = vmatprep.subr.bf16.mxu0 0
  %105 = vmatpush2.bf16.msra.mxu0 0
  %106 = vmatprep.subr.bf16.mxu0 0
  %107 = vmatpush2.bf16.msra.mxu0 0
  %108 = vmatprep.subr.bf16.mxu0 0
  %109 = vmatpush2.bf16.msra.mxu0 0
  %110 = vmatprep.mubr.bf16.mxu0 0
  %111 = vmatmul.mubr.bf16.gmra.mxu0 %v76
  %v112 = vpop.f32.mrf.mxu0
  %v113 = vadd.f32 %v55, %v112
  %v114 = vpop.f32.mrf.mxu0
  %v115 = vpop.f32.mrf.mxu0
  %v116 = vadd.f32 %v55, %v115
  %v117 = vpop.f32.mrf.mxu0
  %118 = vdwg.mxu0
  %v119 = vsel %vm74, %v113, 0.0
  %120 = vadd.xlane.f32.xlu0 %v119
  %v121 = vpop.xlane.xlu0 %120
  %v122 = vsel %vm74, %v116, 0.0
  %123 = vadd.xlane.f32.xlu0 %v122
  %v124 = vpop.xlane.xlu0 %123
  %v125 = vrcp.pop 32.0
  %v126 = vmul.f32 %v121, %v125
  %v127 = vmul.f32 %v124, %v125
  %v128 = vsub.f32 %v113, %v126
  %v129 = vsub.f32 %v116, %v127
  %v130 = vmul.f32 %v128, %v128
  %v131 = vmul.f32 %v129, %v129
  %v132 = vsel %vm74, %v130, 0.0
  %133 = vadd.xlane.f32.xlu0 %v132
  %v134 = vpop.xlane.xlu0 %133
  %v135 = vsel %vm74, %v131, 0.0
  %136 = vadd.xlane.f32.xlu0 %v135
  %v137 = vpop.xlane.xlu0 %136
  %v138 = vmul.f32 %v134, %v125
  %v139 = vmul.f32 %v137, %v125
  %v140 = vadd.f32 %v138, 1e-05
  %v141 = vadd.f32 %v139, 1e-05
  %v142 = vrsqrt.pop %v140
  %v143 = vrsqrt.pop %v141
  %v144 = vmul.f32 %v128, %v142
  %v145 = vmul.f32 %v129, %v143
  %v146 = vld [vmem:[%s4] sm:$0x1]
  %v148 = vlaneseq
  %v149 = vshrl.u32 %v148, 7
  %v150 = vsub.s32 0, %v149
  %v151 = vrot.slane %v146, %v150
  %v153 = vmul.f32 %v144, %v151
  %v154 = vmul.f32 %v145, %v151
  %v155 = vadd.f32 %v42, %v153
  %v156 = vadd.f32 %v43, %v154
  %v157 = vld [vmem:[%s5] sm:$0x1]
  %v159 = vlaneseq
  %v160 = vshrl.u32 %v159, 7
  %v161 = vsub.s32 0, %v160
  %v162 = vrot.slane %v157, %v161
  %v164 = vadd.f32 %v155, %v162
  %v165 = vadd.f32 %v156, %v162
  %v166 = vpack.c.bf16 %v165, %v164
  %v167 = vld [vmem:[%s6] sm:$0xf]
  %v168 = vld [vmem:[%s6 + $0x4] sm:$0xf]
  %v169 = vld [vmem:[%s6 + $0x8] sm:$0xf]
  %v170 = vld [vmem:[%s6 + $0xc] sm:$0xf]
  %v171 = vld [vmem:[%s7] sm:$0x1]
  %v173 = vlaneseq
  %v174 = vshrl.u32 %v173, 7
  %v175 = vsub.s32 0, %v174
  %v176 = vrot.slane %v171, %v175
  %v182 = vunpack.c.l.b16 %v167
  %v183 = vunpack.c.l.b16 %v168
  %v184 = vunpack.c.l.b16 %v169
  %v185 = vunpack.c.l.b16 %v170
  %v186 = vpack.c.b16 %v183, %v182
  %v187 = vpack.c.b16 %v185, %v184
  %v191 = vsel %vm74, %v166, 0
  %193 = vmatprep.subr.bf16.mxu0 0
  %194 = vmatpush1.bf16.msra.mxu0 0
  %195 = vmatprep.subr.bf16.mxu0 0
  %196 = vmatpush1.bf16.msra.mxu0 0
  %197 = vmatprep.subr.bf16.mxu0 0
  %198 = vmatpush1.bf16.msra.mxu0 0
  %199 = vmatprep.subr.bf16.mxu0 0
  %200 = vmatpush1.bf16.msra.mxu0 0
  %201 = vmatprep.subr.bf16.mxu0 0
  %202 = vmatpush1.bf16.msra.mxu0 0
  %203 = vmatprep.subr.bf16.mxu0 0
  %204 = vmatpush1.bf16.msra.mxu0 0
  %205 = vmatprep.subr.bf16.mxu0 0
  %206 = vmatpush1.bf16.msra.mxu0 %v187
  %207 = vmatprep.subr.bf16.mxu0 0
  %208 = vmatpush1.bf16.msra.mxu0 %v186
  %209 = vmatprep.subr.bf16.mxu0 0
  %210 = vmatpush2.bf16.msra.mxu0 0
  %211 = vmatprep.subr.bf16.mxu0 0
  %212 = vmatpush2.bf16.msra.mxu0 0
  %213 = vmatprep.subr.bf16.mxu0 0
  %214 = vmatpush2.bf16.msra.mxu0 0
  %215 = vmatprep.subr.bf16.mxu0 0
  %216 = vmatpush2.bf16.msra.mxu0 0
  %217 = vmatprep.subr.bf16.mxu0 0
  %218 = vmatpush2.bf16.msra.mxu0 0
  %219 = vmatprep.subr.bf16.mxu0 0
  %220 = vmatpush2.bf16.msra.mxu0 0
  %221 = vmatprep.subr.bf16.mxu0 0
  %222 = vmatpush2.bf16.msra.mxu0 0
  %223 = vmatprep.subr.bf16.mxu0 0
  %224 = vmatpush2.bf16.msra.mxu0 0
  %225 = vmatprep.mubr.bf16.mxu0 0
  %226 = vmatmul.mubr.bf16.gmra.mxu0 %v191
  %v227 = vpop.f32.mrf.mxu0
  %v228 = vadd.f32 %v176, %v227
  %v229 = vpop.f32.mrf.mxu0
  %v230 = vpop.f32.mrf.mxu0
  %v231 = vadd.f32 %v176, %v230
  %v232 = vpop.f32.mrf.mxu0
  %233 = vdwg.mxu0
  %v234 = vmul.f32 %v228, 0.5
  %v235 = vmul.f32 %v231, 0.5
  %v236 = vmul.f32 %v228, 0.70710677
  %v237 = vmul.f32 %v231, 0.70710677
  %v238 = verf.f32.pop %v236
  %v239 = verf.f32.pop %v237
  %v240 = vadd.f32 %v238, 1.0
  %v241 = vadd.f32 %v239, 1.0
  %v242 = vmul.f32 %v234, %v240
  %v243 = vmul.f32 %v235, %v241
  %v244 = vpack.c.bf16 %v243, %v242
  %v245 = vld [vmem:[%s8] sm:$0xf]
  %v246 = vld [vmem:[%s8 + $0x4] sm:$0xf]
  %v247 = vld [vmem:[%s8 + $0x8] sm:$0xf]
  %v248 = vld [vmem:[%s8 + $0xc] sm:$0xf]
  %v249 = vld [vmem:[%s8 + $0x10] sm:$0xf]
  %v250 = vld [vmem:[%s8 + $0x14] sm:$0xf]
  %v251 = vld [vmem:[%s8 + $0x18] sm:$0xf]
  %v252 = vld [vmem:[%s8 + $0x1c] sm:$0xf]
  %v253 = vld [vmem:[%s8 + $0x20] sm:$0xf]
  %v254 = vld [vmem:[%s8 + $0x24] sm:$0xf]
  %v255 = vld [vmem:[%s8 + $0x28] sm:$0xf]
  %v256 = vld [vmem:[%s8 + $0x2c] sm:$0xf]
  %v257 = vld [vmem:[%s8 + $0x30] sm:$0xf]
  %v258 = vld [vmem:[%s8 + $0x34] sm:$0xf]
  %v259 = vld [vmem:[%s8 + $0x38] sm:$0xf]
  %v260 = vld [vmem:[%s8 + $0x3c] sm:$0xf]
  %v261 = vld [vmem:[%s9] sm:$0x1]
  %v263 = vlaneseq
  %v264 = vshrl.u32 %v263, 7
  %v265 = vsub.s32 0, %v264
  %v266 = vrot.slane %v261, %v265
  %v284 = vunpack.c.l.b16 %v245
  %v285 = vunpack.c.l.b16 %v246
  %v286 = vunpack.c.l.b16 %v247
  %v287 = vunpack.c.l.b16 %v248
  %v288 = vunpack.c.l.b16 %v249
  %v289 = vunpack.c.l.b16 %v250
  %v290 = vunpack.c.l.b16 %v251
  %v291 = vunpack.c.l.b16 %v252
  %v292 = vunpack.c.l.b16 %v253
  %v293 = vunpack.c.l.b16 %v254
  %v294 = vunpack.c.l.b16 %v255
  %v295 = vunpack.c.l.b16 %v256
  %v296 = vunpack.c.l.b16 %v257
  %v297 = vunpack.c.l.b16 %v258
  %v298 = vunpack.c.l.b16 %v259
  %v299 = vunpack.c.l.b16 %v260
  %v300 = vpack.c.b16 %v285, %v284
  %v301 = vpack.c.b16 %v287, %v286
  %v302 = vpack.c.b16 %v289, %v288
  %v303 = vpack.c.b16 %v291, %v290
  %v304 = vpack.c.b16 %v293, %v292
  %v305 = vpack.c.b16 %v295, %v294
  %v306 = vpack.c.b16 %v297, %v296
  %v307 = vpack.c.b16 %v299, %v298
  %316 = vmatprep.subr.bf16.mxu0 0
  %317 = vmatpush1.bf16.msra.mxu0 %v307
  %318 = vmatprep.subr.bf16.mxu0 0
  %319 = vmatpush1.bf16.msra.mxu0 %v306
  %320 = vmatprep.subr.bf16.mxu0 0
  %321 = vmatpush1.bf16.msra.mxu0 %v305
  %322 = vmatprep.subr.bf16.mxu0 0
  %323 = vmatpush1.bf16.msra.mxu0 %v304
  %324 = vmatprep.subr.bf16.mxu0 0
  %325 = vmatpush1.bf16.msra.mxu0 %v303
  %326 = vmatprep.subr.bf16.mxu0 0
  %327 = vmatpush1.bf16.msra.mxu0 %v302
  %328 = vmatprep.subr.bf16.mxu0 0
  %329 = vmatpush1.bf16.msra.mxu0 %v301
  %330 = vmatprep.subr.bf16.mxu0 0
  %331 = vmatpush1.bf16.msra.mxu0 %v300
  %332 = vmatprep.subr.bf16.mxu0 0
  %333 = vmatpush2.bf16.msra.mxu0 0
  %334 = vmatprep.subr.bf16.mxu0 0
  %335 = vmatpush2.bf16.msra.mxu0 0
  %336 = vmatprep.subr.bf16.mxu0 0
  %337 = vmatpush2.bf16.msra.mxu0 0
  %338 = vmatprep.subr.bf16.mxu0 0
  %339 = vmatpush2.bf16.msra.mxu0 0
  %340 = vmatprep.subr.bf16.mxu0 0
  %341 = vmatpush2.bf16.msra.mxu0 0
  %342 = vmatprep.subr.bf16.mxu0 0
  %343 = vmatpush2.bf16.msra.mxu0 0
  %344 = vmatprep.subr.bf16.mxu0 0
  %345 = vmatpush2.bf16.msra.mxu0 0
  %346 = vmatprep.subr.bf16.mxu0 0
  %347 = vmatpush2.bf16.msra.mxu0 0
  %348 = vmatprep.mubr.bf16.mxu0 0
  %349 = vmatmul.mubr.bf16.gmra.mxu0 %v244
  %v350 = vpop.f32.mrf.mxu0
  %v351 = vadd.f32 %v266, %v350
  %v352 = vpop.f32.mrf.mxu0
  %v353 = vpop.f32.mrf.mxu0
  %v354 = vadd.f32 %v266, %v353
  %v355 = vpop.f32.mrf.mxu0
  %356 = vdwg.mxu0
  %v357 = vsel %vm74, %v351, 0.0
  %358 = vadd.xlane.f32.xlu0 %v357
  %v359 = vpop.xlane.xlu0 %358
  %v360 = vsel %vm74, %v354, 0.0
  %361 = vadd.xlane.f32.xlu0 %v360
  %v362 = vpop.xlane.xlu0 %361
  %v363 = vmul.f32 %v359, %v125
  %v364 = vmul.f32 %v362, %v125
  %v365 = vsub.f32 %v351, %v363
  %v366 = vsub.f32 %v354, %v364
  %v367 = vmul.f32 %v365, %v365
  %v368 = vmul.f32 %v366, %v366
  %v369 = vsel %vm74, %v367, 0.0
  %370 = vadd.xlane.f32.xlu0 %v369
  %v371 = vpop.xlane.xlu0 %370
  %v372 = vsel %vm74, %v368, 0.0
  %373 = vadd.xlane.f32.xlu0 %v372
  %v374 = vpop.xlane.xlu0 %373
  %v375 = vmul.f32 %v371, %v125
  %v376 = vmul.f32 %v374, %v125
  %v377 = vadd.f32 %v375, 1e-05
  %v378 = vadd.f32 %v376, 1e-05
  %v379 = vrsqrt.pop %v377
  %v380 = vrsqrt.pop %v378
  %v381 = vmul.f32 %v365, %v379
  %v382 = vmul.f32 %v366, %v380
  %v383 = vld [vmem:[%s10] sm:$0x1]
  %v385 = vlaneseq
  %v386 = vshrl.u32 %v385, 7
  %v387 = vsub.s32 0, %v386
  %v388 = vrot.slane %v383, %v387
  %v390 = vmul.f32 %v381, %v388
  %v391 = vmul.f32 %v382, %v388
  %v392 = vadd.f32 %v164, %v390
  %v393 = vadd.f32 %v165, %v391
  %v394 = vld [vmem:[%s11] sm:$0x1]
  %v396 = vlaneseq
  %v397 = vshrl.u32 %v396, 7
  %v398 = vsub.s32 0, %v397
  %v399 = vrot.slane %v394, %v398
  %v401 = vadd.f32 %v392, %v399
  %v402 = vadd.f32 %v393, %v399
  %403 = vst.msk [vmem:[%s12] sm:$0xff] %vm74, %v401
  %404 = vst.msk [vmem:[%s12 + $0x8] sm:$0xff] %vm74, %v402
  // Predicated region
  $region50: #{dca_transformer_forward.8} parent=0 // pred_check
    _
  $region51: #{dca_transformer_forward.8} parent=0 // pred_check_branch
    %406 = sbr.rel (0) target = $region53
  $region52: #{dca_transformer_forward.8} parent=0 // pred_region
    _
  $region53: #{dca_transformer_forward.8} parent=0 // pred_fallthru
    _
  // Predicated region
  $region54: #{dca_transformer_forward.8} parent=0 // pred_check
    _
  $region55: #{dca_transformer_forward.8} parent=0 // pred_check_branch
    %408 = sbr.rel (0) target = $region57
  $region56: #{dca_transformer_forward.8} parent=0 // pred_region
    _
  $region57: #{dca_transformer_forward.8} parent=0 // pred_fallthru
    _

// kernel: dca_transformer_forward.9
$region0: #{dca_transformer_forward.9}
  #allocation0 [shape = 'u32[]', space=smem, size = 0x4, offset = 0x4, fixed_abs, tag = 'smem constant byte address 0x4 - core index']
  #allocation1 [shape = 'u32[144,128]{1,0:T(1,128)}', space=vmem, size = 0x12000, scoped, tag = 'internal scratch']
  #allocation2 [shape = 'f32[16,32]{1,0:T(8,128)}', space=vmem, size = 0x2000, scoped, tag = 'scratch operand']
  #allocation3 [shape = 'f32[16,32]{1,0:T(8,128)}', space=vmem, size = 0x2000, scoped, tag = 'scratch operand']
  #allocation4 [shape = 'f32[16,32]{1,0:T(8,128)}', space=vmem, size = 0x2000, scoped, tag = 'scratch operand']
  #allocation5 [shape = 'f32[16,32]{1,0:T(8,128)}', space=vmem, size = 0x2000, scoped, tag = 'scratch operand']
  %s0 = inlined_call_operand.vmem [shape: bf16[3,16,32], index: 0, kind: input, shape index: {}]
  %s1 = inlined_call_operand.vmem [shape: bf16[32,32], index: 1, kind: input, shape index: {}]
  %s2 = inlined_call_operand.vmem [shape: f32[1,32], index: 2, kind: input, shape index: {}]
  %s3 = inlined_call_operand.vmem [shape: f32[1,32], index: 3, kind: input, shape index: {}]
  %s4 = inlined_call_operand.vmem [shape: f32[1,32], index: 4, kind: input, shape index: {}]
  %s5 = inlined_call_operand.vmem [shape: bf16[32,32], index: 5, kind: input, shape index: {}]
  %s6 = inlined_call_operand.vmem [shape: f32[1,32], index: 6, kind: input, shape index: {}]
  %s7 = inlined_call_operand.vmem [shape: f32[1,32], index: 7, kind: input, shape index: {}]
  %s8 = inlined_call_operand.vmem [shape: f32[1,32], index: 8, kind: input, shape index: {}]
  %s9 = inlined_call_operand.vmem [shape: bf16[32,32], index: 9, kind: input, shape index: {}]
  %s10 = inlined_call_operand.vmem [shape: f32[1,32], index: 10, kind: input, shape index: {}]
  %s11 = inlined_call_operand.vmem [shape: f32[1,32], index: 11, kind: input, shape index: {}]
  %s12 = inlined_call_operand.vmem [shape: f32[1,32], index: 12, kind: input, shape index: {}]
  %s13 = inlined_call_operand.vmem [shape: bf16[16,32], index: 13, kind: output, shape index: {0}]
  %s14 = inlined_call_operand.vmem [shape: bf16[16,32], index: 14, kind: output, shape index: {1}]
  %s15 = inlined_call_operand.vmem [shape: bf16[16,32], index: 15, kind: output, shape index: {2}]
  %16 = xla_tuple %s13, %s14, %s15
  %s17 = sld [smem:[#allocation0]]
  $region109: #{dca_transformer_forward.9} parent=0
    _
  %s19 = ssub.s32 1, %s17
  %s20 = scalar_select 0, %s19, %s17
  loop: start=0, step=1, limit=4
  $region2: #{dca_transformer_forward.9} parent=0 // loop_pre_header
    _
  $region3: #{dca_transformer_forward.9} parent=0 // loop_header
    %s22 = sphi 0, %s26
    %p23 = scmp.ge.s32.totalorder %s22, 4
    %s29 = sphi 0, %s41
    %s30 = sphi 0, %s37
    %s31 = sphi 0, %s29
    %s32 = sphi 0, %s30
    %s33 = sphi 0, %s31
    %s34 = sphi 0, %s32
    %s46 = sphi 0, %s48
    %s49 = sphi 0, %s46
    %s50 = sphi 0, %s49
    %s66 = sphi 0, %s50
    %s70 = sphi 0, %s70
    %s72 = sphi 0, %s70
    %s73 = sphi 0, %s72
    %s87 = sphi 0, %s73
    %s91 = sphi 0, %s91
    %s93 = sphi 0, %s91
    %s94 = sphi 0, %s93
    %s108 = sphi 0, %s94
    %s112 = sphi 0, %s112
    %s114 = sphi 0, %s112
    %s115 = sphi 0, %s114
    %s129 = sphi 0, %s115
    %s133 = sphi 0, %s133
    %s135 = sphi 0, %s133
    %s136 = sphi 0, %s135
    %s150 = sphi 0, %s136
    %s154 = sphi 0, %s154
    %s156 = sphi 0, %s154
    %s157 = sphi 0, %s156
    %s171 = sphi 0, %s157
    %s175 = sphi 0, %s175
    %s177 = sphi 0, %s175
    %s178 = sphi 0, %s177
    %s192 = sphi 0, %s178
    %s196 = sphi 0, %s196
    %s198 = sphi 0, %s196
    %s199 = sphi 0, %s198
    %s213 = sphi 0, %s199
    %s217 = sphi 0, %s217
    %s219 = sphi 0, %s217
    %s220 = sphi 0, %s219
    %s234 = sphi 0, %s220
    %s238 = sphi 0, %s238
    %s240 = sphi 0, %s238
    %s241 = sphi 0, %s240
    %s255 = sphi 0, %s241
    %s259 = sphi 0, %s259
    %s261 = sphi 0, %s259
    %s262 = sphi 0, %s261
    %s276 = sphi 0, %s262
    %s280 = sphi 0, %s280
    %s282 = sphi 0, %s280
    %s283 = sphi 0, %s282
    %s297 = sphi 0, %s283
    %s301 = sphi 0, %s301
    %s303 = sphi 0, %s301
    %s304 = sphi 0, %s303
    %s318 = sphi 0, %s304
    %s324 = sphi 0, %s326
    %s327 = sphi 0, %s324
    %s328 = sphi 0, %s327
    %s344 = sphi 0, %s328
    %s350 = sphi 0, %s352
    %s353 = sphi 0, %s350
    %s354 = sphi 0, %s353
    %s370 = sphi 0, %s354
    %s376 = sphi 0, %s378
    %s379 = sphi 0, %s376
    %s380 = sphi 0, %s379
    %s396 = sphi 0, %s380
  $region4: #{dca_transformer_forward.9} parent=0 // loop_header_branch
    %25 = sbr.rel (%p23) target = $region8
  $region5: #{dca_transformer_forward.9} parent=0 // loop_body
    %s27 = ssub.s32 %s22, 1
    %s28 = ssub.s32 %s22, 2
    %s35 = sadd.s32 1, %s30
    %p36 = scmp.ge.s32.totalorder %s35, 2
    %s37 = scalar_select %p36, 0, %s35
    %s38 = sadd.s32 1, %s29
    %s39 = scalar_select %p36, %s38, %s29
    %p40 = scmp.ge.s32.totalorder %s39, 1
    %s41 = scalar_select %p40, 0, %s39
    %s42 = ssub.s32 %s30, %s37
    %s43 = ssub.s32 %s29, %s41
    %s44 = sor.u32 %s42, %s43
    %p45 = scmp.eq.s32.totalorder %s44, 0
    %s47 = sadd.s32 %s46, 1
    %s48 = scalar_select %p45, %s46, %s47
    %p51 = pneg %p45
    %p52 = scmp.eq.s32.totalorder %s22, 1
    %p53 = por %p51, %p52
    %p54 = scmp.ne.s32.totalorder %s46, %s49
    %p55 = scmp.eq.s32.totalorder %s22, 0
    %p56 = por %p54, %p55
    %p57 = scmp.ne.s32.totalorder %s46, %s49
    %p58 = scmp.eq.s32.totalorder %s27, 1
    %p59 = por %p57, %p58
    %p60 = scmp.ne.s32.totalorder %s49, %s50
    %p61 = scmp.eq.s32.totalorder %s27, 0
    %p62 = por %p60, %p61
    %p63 = scmp.ne.s32.totalorder %s49, %s50
    %p64 = scmp.eq.s32.totalorder %s28, 1
    %p65 = por %p63, %p64
    %p67 = scmp.ne.s32.totalorder %s50, %s66
    %p68 = scmp.eq.s32.totalorder %s28, 0
    %p69 = por %p67, %p68
    %s71 = sadd.s32 %s70, 1
    %p74 = scmp.eq.s32.totalorder %s22, 1
    %p75 = scmp.ne.s32.totalorder %s70, %s72
    %p76 = scmp.eq.s32.totalorder %s22, 0
    %p77 = por %p75, %p76
    %p78 = scmp.ne.s32.totalorder %s70, %s72
    %p79 = scmp.eq.s32.totalorder %s27, 1
    %p80 = por %p78, %p79
    %p81 = scmp.ne.s32.totalorder %s72, %s73
    %p82 = scmp.eq.s32.totalorder %s27, 0
    %p83 = por %p81, %p82
    %p84 = scmp.ne.s32.totalorder %s72, %s73
    %p85 = scmp.eq.s32.totalorder %s28, 1
    %p86 = por %p84, %p85
    %p88 = scmp.ne.s32.totalorder %s73, %s87
    %p89 = scmp.eq.s32.totalorder %s28, 0
    %p90 = por %p88, %p89
    %s92 = sadd.s32 %s91, 1
    %p95 = scmp.eq.s32.totalorder %s22, 1
    %p96 = scmp.ne.s32.totalorder %s91, %s93
    %p97 = scmp.eq.s32.totalorder %s22, 0
    %p98 = por %p96, %p97
    %p99 = scmp.ne.s32.totalorder %s91, %s93
    %p100 = scmp.eq.s32.totalorder %s27, 1
    %p101 = por %p99, %p100
    %p102 = scmp.ne.s32.totalorder %s93, %s94
    %p103 = scmp.eq.s32.totalorder %s27, 0
    %p104 = por %p102, %p103
    %p105 = scmp.ne.s32.totalorder %s93, %s94
    %p106 = scmp.eq.s32.totalorder %s28, 1
    %p107 = por %p105, %p106
    %p109 = scmp.ne.s32.totalorder %s94, %s108
    %p110 = scmp.eq.s32.totalorder %s28, 0
    %p111 = por %p109, %p110
    %s113 = sadd.s32 %s112, 1
    %p116 = scmp.eq.s32.totalorder %s22, 1
    %p117 = scmp.ne.s32.totalorder %s112, %s114
    %p118 = scmp.eq.s32.totalorder %s22, 0
    %p119 = por %p117, %p118
    %p120 = scmp.ne.s32.totalorder %s112, %s114
    %p121 = scmp.eq.s32.totalorder %s27, 1
    %p122 = por %p120, %p121
    %p123 = scmp.ne.s32.totalorder %s114, %s115
    %p124 = scmp.eq.s32.totalorder %s27, 0
    %p125 = por %p123, %p124
    %p126 = scmp.ne.s32.totalorder %s114, %s115
    %p127 = scmp.eq.s32.totalorder %s28, 1
    %p128 = por %p126, %p127
    %p130 = scmp.ne.s32.totalorder %s115, %s129
    %p131 = scmp.eq.s32.totalorder %s28, 0
    %p132 = por %p130, %p131
    %s134 = sadd.s32 %s133, 1
    %p137 = scmp.eq.s32.totalorder %s22, 1
    %p138 = scmp.ne.s32.totalorder %s133, %s135
    %p139 = scmp.eq.s32.totalorder %s22, 0
    %p140 = por %p138, %p139
    %p141 = scmp.ne.s32.totalorder %s133, %s135
    %p142 = scmp.eq.s32.totalorder %s27, 1
    %p143 = por %p141, %p142
    %p144 = scmp.ne.s32.totalorder %s135, %s136
    %p145 = scmp.eq.s32.totalorder %s27, 0
    %p146 = por %p144, %p145
    %p147 = scmp.ne.s32.totalorder %s135, %s136
    %p148 = scmp.eq.s32.totalorder %s28, 1
    %p149 = por %p147, %p148
    %p151 = scmp.ne.s32.totalorder %s136, %s150
    %p152 = scmp.eq.s32.totalorder %s28, 0
    %p153 = por %p151, %p152
    %s155 = sadd.s32 %s154, 1
    %p158 = scmp.eq.s32.totalorder %s22, 1
    %p159 = scmp.ne.s32.totalorder %s154, %s156
    %p160 = scmp.eq.s32.totalorder %s22, 0
    %p161 = por %p159, %p160
    %p162 = scmp.ne.s32.totalorder %s154, %s156
    %p163 = scmp.eq.s32.totalorder %s27, 1
    %p164 = por %p162, %p163
    %p165 = scmp.ne.s32.totalorder %s156, %s157
    %p166 = scmp.eq.s32.totalorder %s27, 0
    %p167 = por %p165, %p166
    %p168 = scmp.ne.s32.totalorder %s156, %s157
    %p169 = scmp.eq.s32.totalorder %s28, 1
    %p170 = por %p168, %p169
    %p172 = scmp.ne.s32.totalorder %s157, %s171
    %p173 = scmp.eq.s32.totalorder %s28, 0
    %p174 = por %p172, %p173
    %s176 = sadd.s32 %s175, 1
    %p179 = scmp.eq.s32.totalorder %s22, 1
    %p180 = scmp.ne.s32.totalorder %s175, %s177
    %p181 = scmp.eq.s32.totalorder %s22, 0
    %p182 = por %p180, %p181
    %p183 = scmp.ne.s32.totalorder %s175, %s177
    %p184 = scmp.eq.s32.totalorder %s27, 1
    %p185 = por %p183, %p184
    %p186 = scmp.ne.s32.totalorder %s177, %s178
    %p187 = scmp.eq.s32.totalorder %s27, 0
    %p188 = por %p186, %p187
    %p189 = scmp.ne.s32.totalorder %s177, %s178
    %p190 = scmp.eq.s32.totalorder %s28, 1
    %p191 = por %p189, %p190
    %p193 = scmp.ne.s32.totalorder %s178, %s192
    %p194 = scmp.eq.s32.totalorder %s28, 0
    %p195 = por %p193, %p194
    %s197 = sadd.s32 %s196, 1
    %p200 = scmp.eq.s32.totalorder %s22, 1
    %p201 = scmp.ne.s32.totalorder %s196, %s198
    %p202 = scmp.eq.s32.totalorder %s22, 0
    %p203 = por %p201, %p202
    %p204 = scmp.ne.s32.totalorder %s196, %s198
    %p205 = scmp.eq.s32.totalorder %s27, 1
    %p206 = por %p204, %p205
    %p207 = scmp.ne.s32.totalorder %s198, %s199
    %p208 = scmp.eq.s32.totalorder %s27, 0
    %p209 = por %p207, %p208
    %p210 = scmp.ne.s32.totalorder %s198, %s199
    %p211 = scmp.eq.s32.totalorder %s28, 1
    %p212 = por %p210, %p211
    %p214 = scmp.ne.s32.totalorder %s199, %s213
    %p215 = scmp.eq.s32.totalorder %s28, 0
    %p216 = por %p214, %p215
    %s218 = sadd.s32 %s217, 1
    %p221 = scmp.eq.s32.totalorder %s22, 1
    %p222 = scmp.ne.s32.totalorder %s217, %s219
    %p223 = scmp.eq.s32.totalorder %s22, 0
    %p224 = por %p222, %p223
    %p225 = scmp.ne.s32.totalorder %s217, %s219
    %p226 = scmp.eq.s32.totalorder %s27, 1
    %p227 = por %p225, %p226
    %p228 = scmp.ne.s32.totalorder %s219, %s220
    %p229 = scmp.eq.s32.totalorder %s27, 0
    %p230 = por %p228, %p229
    %p231 = scmp.ne.s32.totalorder %s219, %s220
    %p232 = scmp.eq.s32.totalorder %s28, 1
    %p233 = por %p231, %p232
    %p235 = scmp.ne.s32.totalorder %s220, %s234
    %p236 = scmp.eq.s32.totalorder %s28, 0
    %p237 = por %p235, %p236
    %s239 = sadd.s32 %s238, 1
    %p242 = scmp.eq.s32.totalorder %s22, 1
    %p243 = scmp.ne.s32.totalorder %s238, %s240
    %p244 = scmp.eq.s32.totalorder %s22, 0
    %p245 = por %p243, %p244
    %p246 = scmp.ne.s32.totalorder %s238, %s240
    %p247 = scmp.eq.s32.totalorder %s27, 1
    %p248 = por %p246, %p247
    %p249 = scmp.ne.s32.totalorder %s240, %s241
    %p250 = scmp.eq.s32.totalorder %s27, 0
    %p251 = por %p249, %p250
    %p252 = scmp.ne.s32.totalorder %s240, %s241
    %p253 = scmp.eq.s32.totalorder %s28, 1
    %p254 = por %p252, %p253
    %p256 = scmp.ne.s32.totalorder %s241, %s255
    %p257 = scmp.eq.s32.totalorder %s28, 0
    %p258 = por %p256, %p257
    %s260 = sadd.s32 %s259, 1
    %p263 = scmp.eq.s32.totalorder %s22, 1
    %p264 = scmp.ne.s32.totalorder %s259, %s261
    %p265 = scmp.eq.s32.totalorder %s22, 0
    %p266 = por %p264, %p265
    %p267 = scmp.ne.s32.totalorder %s259, %s261
    %p268 = scmp.eq.s32.totalorder %s27, 1
    %p269 = por %p267, %p268
    %p270 = scmp.ne.s32.totalorder %s261, %s262
    %p271 = scmp.eq.s32.totalorder %s27, 0
    %p272 = por %p270, %p271
    %p273 = scmp.ne.s32.totalorder %s261, %s262
    %p274 = scmp.eq.s32.totalorder %s28, 1
    %p275 = por %p273, %p274
    %p277 = scmp.ne.s32.totalorder %s262, %s276
    %p278 = scmp.eq.s32.totalorder %s28, 0
    %p279 = por %p277, %p278
    %s281 = sadd.s32 %s280, 1
    %p284 = scmp.eq.s32.totalorder %s22, 1
    %p285 = scmp.ne.s32.totalorder %s280, %s282
    %p286 = scmp.eq.s32.totalorder %s22, 0
    %p287 = por %p285, %p286
    %p288 = scmp.ne.s32.totalorder %s280, %s282
    %p289 = scmp.eq.s32.totalorder %s27, 1
    %p290 = por %p288, %p289
    %p291 = scmp.ne.s32.totalorder %s282, %s283
    %p292 = scmp.eq.s32.totalorder %s27, 0
    %p293 = por %p291, %p292
    %p294 = scmp.ne.s32.totalorder %s282, %s283
    %p295 = scmp.eq.s32.totalorder %s28, 1
    %p296 = por %p294, %p295
    %p298 = scmp.ne.s32.totalorder %s283, %s297
    %p299 = scmp.eq.s32.totalorder %s28, 0
    %p300 = por %p298, %p299
    %s302 = sadd.s32 %s301, 1
    %p305 = scmp.eq.s32.totalorder %s22, 1
    %p306 = scmp.ne.s32.totalorder %s301, %s303
    %p307 = scmp.eq.s32.totalorder %s22, 0
    %p308 = por %p306, %p307
    %p309 = scmp.ne.s32.totalorder %s301, %s303
    %p310 = scmp.eq.s32.totalorder %s27, 1
    %p311 = por %p309, %p310
    %p312 = scmp.ne.s32.totalorder %s303, %s304
    %p313 = scmp.eq.s32.totalorder %s27, 0
    %p314 = por %p312, %p313
    %p315 = scmp.ne.s32.totalorder %s303, %s304
    %p316 = scmp.eq.s32.totalorder %s28, 1
    %p317 = por %p315, %p316
    %p319 = scmp.ne.s32.totalorder %s304, %s318
    %p320 = scmp.eq.s32.totalorder %s28, 0
    %p321 = por %p319, %p320
    %s322 = ssub.s32 %s29, %s41
    %p323 = scmp.eq.s32.totalorder %s322, 0
    %s325 = sadd.s32 %s324, 1
    %s326 = scalar_select %p323, %s324, %s325
    %p329 = pneg %p323
    %p330 = scmp.eq.s32.totalorder %s22, 1
    %p331 = por %p329, %p330
    %p332 = scmp.ne.s32.totalorder %s324, %s327
    %p333 = scmp.eq.s32.totalorder %s22, 0
    %p334 = por %p332, %p333
    %p335 = scmp.ne.s32.totalorder %s324, %s327
    %p336 = scmp.eq.s32.totalorder %s27, 1
    %p337 = por %p335, %p336
    %p338 = scmp.ne.s32.totalorder %s327, %s328
    %p339 = scmp.eq.s32.totalorder %s27, 0
    %p340 = por %p338, %p339
    %p341 = scmp.ne.s32.totalorder %s327, %s328
    %p342 = scmp.eq.s32.totalorder %s28, 1
    %p343 = por %p341, %p342
    %p345 = scmp.ne.s32.totalorder %s328, %s344
    %p346 = scmp.eq.s32.totalorder %s28, 0
    %p347 = por %p345, %p346
    %s348 = ssub.s32 %s29, %s41
    %p349 = scmp.eq.s32.totalorder %s348, 0
    %s351 = sadd.s32 %s350, 1
    %s352 = scalar_select %p349, %s350, %s351
    %p355 = pneg %p349
    %p356 = scmp.eq.s32.totalorder %s22, 1
    %p357 = por %p355, %p356
    %p358 = scmp.ne.s32.totalorder %s350, %s353
    %p359 = scmp.eq.s32.totalorder %s22, 0
    %p360 = por %p358, %p359
    %p361 = scmp.ne.s32.totalorder %s350, %s353
    %p362 = scmp.eq.s32.totalorder %s27, 1
    %p363 = por %p361, %p362
    %p364 = scmp.ne.s32.totalorder %s353, %s354
    %p365 = scmp.eq.s32.totalorder %s27, 0
    %p366 = por %p364, %p365
    %p367 = scmp.ne.s32.totalorder %s353, %s354
    %p368 = scmp.eq.s32.totalorder %s28, 1
    %p369 = por %p367, %p368
    %p371 = scmp.ne.s32.totalorder %s354, %s370
    %p372 = scmp.eq.s32.totalorder %s28, 0
    %p373 = por %p371, %p372
    %s374 = ssub.s32 %s29, %s41
    %p375 = scmp.eq.s32.totalorder %s374, 0
    %s377 = sadd.s32 %s376, 1
    %s378 = scalar_select %p375, %s376, %s377
    %p381 = pneg %p375
    %p382 = scmp.eq.s32.totalorder %s22, 1
    %p383 = por %p381, %p382
    %p384 = scmp.ne.s32.totalorder %s376, %s379
    %p385 = scmp.eq.s32.totalorder %s22, 0
    %p386 = por %p384, %p385
    %p387 = scmp.ne.s32.totalorder %s376, %s379
    %p388 = scmp.eq.s32.totalorder %s27, 1
    %p389 = por %p387, %p388
    %p390 = scmp.ne.s32.totalorder %s379, %s380
    %p391 = scmp.eq.s32.totalorder %s27, 0
    %p392 = por %p390, %p391
    %p393 = scmp.ne.s32.totalorder %s379, %s380
    %p394 = scmp.eq.s32.totalorder %s28, 1
    %p395 = por %p393, %p394
    %p397 = scmp.ne.s32.totalorder %s380, %s396
    %p398 = scmp.eq.s32.totalorder %s28, 0
    %p399 = por %p397, %p398
    %p400 = scmp.le.s32.totalorder 1, %s22
    %p401 = scmp.lt.s32.totalorder %s22, 3
    %p402 = pnand %p400, %p401
    %p403 = pneg %p402
    // Predicated region
    $region9: #{dca_transformer_forward.9} parent=5 // pred_check
      _
    $region10: #{dca_transformer_forward.9} parent=5 // pred_check_branch
      %405 = sbr.rel (%p402) target = $region12
    $region11: #{dca_transformer_forward.9} parent=5 // pred_region
      %s406 = ssub.s32 %s22, 1
      // Predicated region
      $region13: #{dca_transformer_forward.9} parent=11 // pred_check
        %p407 = pneg %p83
      $region14: #{dca_transformer_forward.9} parent=11 // pred_check_branch
        %409 = sbr.rel (%p407) target = $region16
      $region15: #{dca_transformer_forward.9} parent=11 // pred_region
        _
      $region16: #{dca_transformer_forward.9} parent=11 // pred_fallthru
        _
      // Predicated region
      $region17: #{dca_transformer_forward.9} parent=11 // pred_check
        %p410 = pneg %p104
      $region18: #{dca_transformer_forward.9} parent=11 // pred_check_branch
        %412 = sbr.rel (%p410) target = $region20
      $region19: #{dca_transformer_forward.9} parent=11 // pred_region
        _
      $region20: #{dca_transformer_forward.9} parent=11 // pred_fallthru
        _
      // Predicated region
      $region21: #{dca_transformer_forward.9} parent=11 // pred_check
        %p413 = pneg %p125
      $region22: #{dca_transformer_forward.9} parent=11 // pred_check_branch
        %415 = sbr.rel (%p413) target = $region24
      $region23: #{dca_transformer_forward.9} parent=11 // pred_region
        _
      $region24: #{dca_transformer_forward.9} parent=11 // pred_fallthru
        _
      // Predicated region
      $region25: #{dca_transformer_forward.9} parent=11 // pred_check
        %p416 = pneg %p146
      $region26: #{dca_transformer_forward.9} parent=11 // pred_check_branch
        %418 = sbr.rel (%p416) target = $region28
      $region27: #{dca_transformer_forward.9} parent=11 // pred_region
        _
      $region28: #{dca_transformer_forward.9} parent=11 // pred_fallthru
        _
      // Predicated region
      $region29: #{dca_transformer_forward.9} parent=11 // pred_check
        %p419 = pneg %p167
      $region30: #{dca_transformer_forward.9} parent=11 // pred_check_branch
        %421 = sbr.rel (%p419) target = $region32
      $region31: #{dca_transformer_forward.9} parent=11 // pred_region
        _
      $region32: #{dca_transformer_forward.9} parent=11 // pred_fallthru
        _
      // Predicated region
      $region33: #{dca_transformer_forward.9} parent=11 // pred_check
        %p422 = pneg %p188
      $region34: #{dca_transformer_forward.9} parent=11 // pred_check_branch
        %424 = sbr.rel (%p422) target = $region36
      $region35: #{dca_transformer_forward.9} parent=11 // pred_region
        _
      $region36: #{dca_transformer_forward.9} parent=11 // pred_fallthru
        _
      // Predicated region
      $region37: #{dca_transformer_forward.9} parent=11 // pred_check
        %p425 = pneg %p209
      $region38: #{dca_transformer_forward.9} parent=11 // pred_check_branch
        %427 = sbr.rel (%p425) target = $region40
      $region39: #{dca_transformer_forward.9} parent=11 // pred_region
        _
      $region40: #{dca_transformer_forward.9} parent=11 // pred_fallthru
        _
      // Predicated region
      $region41: #{dca_transformer_forward.9} parent=11 // pred_check
        %p428 = pneg %p230
      $region42: #{dca_transformer_forward.9} parent=11 // pred_check_branch
        %430 = sbr.rel (%p428) target = $region44
      $region43: #{dca_transformer_forward.9} parent=11 // pred_region
        _
      $region44: #{dca_transformer_forward.9} parent=11 // pred_fallthru
        _
      // Predicated region
      $region45: #{dca_transformer_forward.9} parent=11 // pred_check
        %p431 = pneg %p251
      $region46: #{dca_transformer_forward.9} parent=11 // pred_check_branch
        %433 = sbr.rel (%p431) target = $region48
      $region47: #{dca_transformer_forward.9} parent=11 // pred_region
        _
      $region48: #{dca_transformer_forward.9} parent=11 // pred_fallthru
        _
      // Predicated region
      $region49: #{dca_transformer_forward.9} parent=11 // pred_check
        %p434 = pneg %p272
      $region50: #{dca_transformer_forward.9} parent=11 // pred_check_branch
        %436 = sbr.rel (%p434) target = $region52
      $region51: #{dca_transformer_forward.9} parent=11 // pred_region
        _
      $region52: #{dca_transformer_forward.9} parent=11 // pred_fallthru
        _
      // Predicated region
      $region53: #{dca_transformer_forward.9} parent=11 // pred_check
        %p437 = pneg %p293
      $region54: #{dca_transformer_forward.9} parent=11 // pred_check_branch
        %439 = sbr.rel (%p437) target = $region56
      $region55: #{dca_transformer_forward.9} parent=11 // pred_region
        _
      $region56: #{dca_transformer_forward.9} parent=11 // pred_fallthru
        _
      // Predicated region
      $region57: #{dca_transformer_forward.9} parent=11 // pred_check
        %p440 = pneg %p314
      $region58: #{dca_transformer_forward.9} parent=11 // pred_check_branch
        %442 = sbr.rel (%p440) target = $region60
      $region59: #{dca_transformer_forward.9} parent=11 // pred_region
        _
      $region60: #{dca_transformer_forward.9} parent=11 // pred_fallthru
        _
    $region12: #{dca_transformer_forward.9} parent=5 // pred_fallthru
      _
    %p443 = scmp.lt.s32.totalorder %s22, 2
    // Predicated region
    $region61: #{dca_transformer_forward.9} parent=5 // pred_check
      %p444 = pneg %p443
    $region62: #{dca_transformer_forward.9} parent=5 // pred_check_branch
      %446 = sbr.rel (%p444) target = $region64
    $region63: #{dca_transformer_forward.9} parent=5 // pred_region
      // Predicated region
      $region65: #{dca_transformer_forward.9} parent=63 // pred_check
        %p447 = pneg %p56
      $region66: #{dca_transformer_forward.9} parent=63 // pred_check_branch
        %449 = sbr.rel (%p447) target = $region68
      $region67: #{dca_transformer_forward.9} parent=63 // pred_region
        %s450 = smul.u32 2, %s29
        %p451 = scmp.lt.s32.totalorder %s30, 2
        %s452 = scalar_select %p451, %s30, 2
        %p453 = scmp.lt.s32.totalorder %s450, 1
        %s454 = scalar_select %p453, %s450, 1
        %s455 = smul.addr %s452, 2
        %s456 = sadd.s32 %s454, %s455
        %s457 = smul.addr %s456, 4
        %s458 = scalar_lea.vmem %s0, %s457
        %s459 = smul.u32 2, %s29
      $region68: #{dca_transformer_forward.9} parent=63 // pred_fallthru
        _
    $region64: #{dca_transformer_forward.9} parent=5 // pred_fallthru
      _
    %p460 = scmp.le.s32.totalorder 1, %s22
    %p461 = scmp.lt.s32.totalorder %s22, 3
    %p462 = pnand %p460, %p461
    %p463 = pneg %p462
    // Predicated region
    $region69: #{dca_transformer_forward.9} parent=5 // pred_check
      _
    $region70: #{dca_transformer_forward.9} parent=5 // pred_check_branch
      %465 = sbr.rel (%p462) target = $region72
    $region71: #{dca_transformer_forward.9} parent=5 // pred_region
      %s466 = ssub.s32 %s22, 1
      %s467 = smul.u32 2, %s31
      %p468 = scmp.lt.s32.totalorder %s32, 2
      %s469 = scalar_select %p468, %s32, 2
      %p470 = scmp.lt.s32.totalorder %s467, 1
      %s471 = scalar_select %p470, %s467, 1
      %s472 = smul.addr %s469, 2
      %s473 = sadd.s32 %s471, %s472
      %s474 = smul.addr %s473, 4
      %s475 = scalar_lea.vmem %s0, %s474
      %p476 = pneg %p62
      %p477 = pneg %p59
      %p478 = pneg %p83
      %p479 = pneg %p80
      %p480 = pneg %p104
      %p481 = pneg %p101
      %p482 = pneg %p125
      %p483 = pneg %p122
      %p484 = pneg %p146
      %p485 = pneg %p143
      %p486 = pneg %p167
      %p487 = pneg %p164
      %p488 = pneg %p188
      %p489 = pneg %p185
      %p490 = pneg %p209
      %p491 = pneg %p206
      %p492 = pneg %p230
      %p493 = pneg %p227
      %p494 = pneg %p251
      %p495 = pneg %p248
      %p496 = pneg %p272
      %p497 = pneg %p269
      %p498 = pneg %p293
      %p499 = pneg %p290
      %p500 = pneg %p314
      %p501 = pneg %p311
      %p502 = pneg %p340
      %p503 = pneg %p337
      %s504 = smul.u32 2, %s31
      %p505 = scmp.lt.s32.totalorder %s504, 1
      %s506 = scalar_select %p505, %s504, 1
      %s507 = smul.addr %s506, 4
      %s508 = scalar_lea.vmem %s13, %s507
      %p509 = pneg %p366
      %p510 = pneg %p363
      %s511 = smul.u32 2, %s31
      %p512 = scmp.lt.s32.totalorder %s511, 1
      %s513 = scalar_select %p512, %s511, 1
      %s514 = smul.addr %s513, 4
      %s515 = scalar_lea.vmem %s14, %s514
      %p516 = pneg %p392
      %p517 = pneg %p389
      %s518 = smul.u32 2, %s31
      %p519 = scmp.lt.s32.totalorder %s518, 1
      %s520 = scalar_select %p519, %s518, 1
      %s521 = smul.addr %s520, 4
      %s522 = scalar_lea.vmem %s15, %s521
      %s523 = smul.u32 2, %s31
      %p524 = scmp.lt.s32.totalorder %s32, 2
      %s525 = scalar_select %p524, %s32, 2
      %p526 = scmp.lt.s32.totalorder %s523, 1
      %s527 = scalar_select %p526, %s523, 1
      %s528 = smul.addr %s525, 2
      %s529 = sadd.s32 %s527, %s528
      %s530 = smul.addr %s529, 4
      %s531 = scalar_lea.vmem %s0, %s530
      %s532 = smul.u32 2, %s31
      %s533 = smul.u32 2, %s31
      %p534 = scmp.lt.s32.totalorder %s533, 1
      %s535 = scalar_select %p534, %s533, 1
      %s536 = smul.addr %s535, 4
      %s537 = scalar_lea.vmem %s13, %s536
      %s538 = smul.u32 2, %s31
      %s539 = smul.u32 2, %s31
      %p540 = scmp.lt.s32.totalorder %s539, 1
      %s541 = scalar_select %p540, %s539, 1
      %s542 = smul.addr %s541, 4
      %s543 = scalar_lea.vmem %s14, %s542
      %s544 = smul.u32 2, %s31
      %s545 = smul.u32 2, %s31
      %p546 = scmp.lt.s32.totalorder %s545, 1
      %s547 = scalar_select %p546, %s545, 1
      %s548 = smul.addr %s547, 4
      %s549 = scalar_lea.vmem %s15, %s548
      %s550 = smul.u32 2, %s31
      %p552 = scmp.eq.s32.totalorder %s32, 0
      // Predicated region
      $region73: #{dca_transformer_forward.9} parent=71 // pred_check
        %p553 = pneg %p552
      $region74: #{dca_transformer_forward.9} parent=71 // pred_check_branch
        %555 = sbr.rel (%p553) target = $region76
      $region75: #{dca_transformer_forward.9} parent=71 // pred_region
        %vm556 = vcmask 261120
        %557 = vst.msk [vmem:[#allocation2] sm:$0xff] %vm556, 0.0
        %558 = vst.msk [vmem:[#allocation2 + $0x8] sm:$0xff] %vm556, 0.0
        %559 = vst.msk [vmem:[#allocation3] sm:$0xff] %vm556, 0.0
        %560 = vst.msk [vmem:[#allocation3 + $0x8] sm:$0xff] %vm556, 0.0
        %561 = vst.msk [vmem:[#allocation4] sm:$0xff] %vm556, 0.0
        %562 = vst.msk [vmem:[#allocation4 + $0x8] sm:$0xff] %vm556, 0.0
        %563 = vst.msk [vmem:[#allocation5] sm:$0xff] %vm556, 0.0
        %564 = vst.msk [vmem:[#allocation5 + $0x8] sm:$0xff] %vm556, 0.0
      $region76: #{dca_transformer_forward.9} parent=71 // pred_fallthru
        _
      %v565 = vld [vmem:[%s531] sm:$0xf]
      %v566 = vld [vmem:[%s531 + $0x4] sm:$0xf]
      %v567 = vunpack.c.l.bf16 %v565
      %v568 = vunpack.c.l.bf16 %v566
      %v569 = vld [vmem:[#allocation5] sm:$0xff]
      %v570 = vld [vmem:[#allocation5 + $0x8] sm:$0xff]
      %vm571 = vcmask 261120
      %v572 = vsel %vm571, %v567, 0.0
      %573 = vadd.xlane.f32.xlu0 %v572
      %v574 = vpop.xlane.xlu0 %573
      %v575 = vsel %vm571, %v568, 0.0
      %576 = vadd.xlane.f32.xlu0 %v575
      %v577 = vpop.xlane.xlu0 %576
      %v578 = vrcp.pop 32.0
      %v579 = vmul.f32 %v574, %v578
      %v580 = vmul.f32 %v577, %v578
      %v581 = vsub.f32 %v567, %v579
      %v582 = vsub.f32 %v568, %v580
      %v583 = vmul.f32 %v581, %v581
      %v584 = vmul.f32 %v582, %v582
      %v585 = vsel %vm571, %v583, 0.0
      %586 = vadd.xlane.f32.xlu0 %v585
      %v587 = vpop.xlane.xlu0 %586
      %v588 = vsel %vm571, %v584, 0.0
      %589 = vadd.xlane.f32.xlu0 %v588
      %v590 = vpop.xlane.xlu0 %589
      %v591 = vmul.f32 %v587, %v578
      %v592 = vmul.f32 %v590, %v578
      %v593 = vadd.f32 %v591, 1e-05
      %v594 = vadd.f32 %v592, 1e-05
      %v595 = vrsqrt.pop %v593
      %v596 = vrsqrt.pop %v594
      %v597 = vmul.f32 %v581, %v595
      %v598 = vmul.f32 %v582, %v596
      %v599 = vadd.f32 %v569, %v597
      %v600 = vadd.f32 %v570, %v598
      %601 = vst.msk [vmem:[#allocation5] sm:$0xff] %vm571, %v599
      %602 = vst.msk [vmem:[#allocation5 + $0x8] sm:$0xff] %vm571, %v600
      %v603 = vld [vmem:[#allocation2] sm:$0xff]
      %v604 = vld [vmem:[#allocation2 + $0x8] sm:$0xff]
      %v605 = vld [vmem:[%s1] sm:$0xf]
      %v606 = vld [vmem:[%s1 + $0x4] sm:$0xf]
      %v607 = vld [vmem:[%s1 + $0x8] sm:$0xf]
      %v608 = vld [vmem:[%s1 + $0xc] sm:$0xf]
      %v609 = vld [vmem:[%s2] sm:$0x1]
      %v611 = vlaneseq
      %v612 = vshrl.u32 %v611, 7
      %v613 = vsub.s32 0, %v612
      %v614 = vrot.slane %v609, %v613
      %v618 = vunpack.c.l.b16 %v565
      %v619 = vunpack.c.l.b16 %v566
      %v620 = vpack.c.b16 %v619, %v618
      %v625 = vunpack.c.l.b16 %v605
      %v626 = vunpack.c.l.b16 %v606
      %v627 = vunpack.c.l.b16 %v607
      %v628 = vunpack.c.l.b16 %v608
      %v629 = vpack.c.b16 %v626, %v625
      %v630 = vpack.c.b16 %v628, %v627
      %v634 = vsel %vm571, %v620, 0
      %636 = vmatprep.subr.bf16.mxu0 0
      %637 = vmatpush1.bf16.msra.mxu0 0
      %638 = vmatprep.subr.bf16.mxu0 0
      %639 = vmatpush1.bf16.msra.mxu0 0
      %640 = vmatprep.subr.bf16.mxu0 0
      %641 = vmatpush1.bf16.msra.mxu0 0
      %642 = vmatprep.subr.bf16.mxu0 0
      %643 = vmatpush1.bf16.msra.mxu0 0
      %644 = vmatprep.subr.bf16.mxu0 0
      %645 = vmatpush1.bf16.msra.mxu0 0
      %646 = vmatprep.subr.bf16.mxu0 0
      %647 = vmatpush1.bf16.msra.mxu0 0
      %648 = vmatprep.subr.bf16.mxu0 0
      %649 = vmatpush1.bf16.msra.mxu0 %v630
      %650 = vmatprep.subr.bf16.mxu0 0
      %651 = vmatpush1.bf16.msra.mxu0 %v629
      %652 = vmatprep.subr.bf16.mxu0 0
      %653 = vmatpush2.bf16.msra.mxu0 0
      %654 = vmatprep.subr.bf16.mxu0 0
      %655 = vmatpush2.bf16.msra.mxu0 0
      %656 = vmatprep.subr.bf16.mxu0 0
      %657 = vmatpush2.bf16.msra.mxu0 0
      %658 = vmatprep.subr.bf16.mxu0 0
      %659 = vmatpush2.bf16.msra.mxu0 0
      %660 = vmatprep.subr.bf16.mxu0 0
      %661 = vmatpush2.bf16.msra.mxu0 0
      %662 = vmatprep.subr.bf16.mxu0 0
      %663 = vmatpush2.bf16.msra.mxu0 0
      %664 = vmatprep.subr.bf16.mxu0 0
      %665 = vmatpush2.bf16.msra.mxu0 0
      %666 = vmatprep.subr.bf16.mxu0 0
      %667 = vmatpush2.bf16.msra.mxu0 0
      %668 = vmatprep.mubr.bf16.mxu0 0
      %669 = vmatmul.mubr.bf16.gmra.mxu0 %v634
      %v670 = vpop.f32.mrf.mxu0
      %v671 = vadd.f32 %v614, %v670
      %v672 = vpop.f32.mrf.mxu0
      %v673 = vpop.f32.mrf.mxu0
      %v674 = vadd.f32 %v614, %v673
      %v675 = vpop.f32.mrf.mxu0
      %676 = vdwg.mxu0
      %v677 = vmax.f32 %v671, 0.0
      %v678 = vmax.f32 %v674, 0.0
      %v679 = vadd.f32 %v603, %v677
      %v680 = vadd.f32 %v604, %v678
      %681 = vst.msk [vmem:[#allocation2] sm:$0xff] %vm571, %v679
      %682 = vst.msk [vmem:[#allocation2 + $0x8] sm:$0xff] %vm571, %v680
      %v683 = vld [vmem:[#allocation3] sm:$0xff]
      %v684 = vld [vmem:[#allocation3 + $0x8] sm:$0xff]
      %v685 = vld [vmem:[%s5] sm:$0xf]
      %v686 = vld [vmem:[%s5 + $0x4] sm:$0xf]
      %v687 = vld [vmem:[%s5 + $0x8] sm:$0xf]
      %v688 = vld [vmem:[%s5 + $0xc] sm:$0xf]
      %v689 = vld [vmem:[%s6] sm:$0x1]
      %v691 = vlaneseq
      %v692 = vshrl.u32 %v691, 7
      %v693 = vsub.s32 0, %v692
      %v694 = vrot.slane %v689, %v693
      %v700 = vunpack.c.l.b16 %v685
      %v701 = vunpack.c.l.b16 %v686
      %v702 = vunpack.c.l.b16 %v687
      %v703 = vunpack.c.l.b16 %v688
      %v704 = vpack.c.b16 %v701, %v700
      %v705 = vpack.c.b16 %v703, %v702
      %708 = vmatprep.subr.bf16.mxu0 0
      %709 = vmatpush1.bf16.msra.mxu0 0
      %710 = vmatprep.subr.bf16.mxu0 0
      %711 = vmatpush1.bf16.msra.mxu0 0
      %712 = vmatprep.subr.bf16.mxu0 0
      %713 = vmatpush1.bf16.msra.mxu0 0
      %714 = vmatprep.subr.bf16.mxu0 0
      %715 = vmatpush1.bf16.msra.mxu0 0
      %716 = vmatprep.subr.bf16.mxu0 0
      %717 = vmatpush1.bf16.msra.mxu0 0
      %718 = vmatprep.subr.bf16.mxu0 0
      %719 = vmatpush1.bf16.msra.mxu0 0
      %720 = vmatprep.subr.bf16.mxu0 0
      %721 = vmatpush1.bf16.msra.mxu0 %v705
      %722 = vmatprep.subr.bf16.mxu0 0
      %723 = vmatpush1.bf16.msra.mxu0 %v704
      %724 = vmatprep.subr.bf16.mxu0 0
      %725 = vmatpush2.bf16.msra.mxu0 0
      %726 = vmatprep.subr.bf16.mxu0 0
      %727 = vmatpush2.bf16.msra.mxu0 0
      %728 = vmatprep.subr.bf16.mxu0 0
      %729 = vmatpush2.bf16.msra.mxu0 0
      %730 = vmatprep.subr.bf16.mxu0 0
      %731 = vmatpush2.bf16.msra.mxu0 0
      %732 = vmatprep.subr.bf16.mxu0 0
      %733 = vmatpush2.bf16.msra.mxu0 0
      %734 = vmatprep.subr.bf16.mxu0 0
      %735 = vmatpush2.bf16.msra.mxu0 0
      %736 = vmatprep.subr.bf16.mxu0 0
      %737 = vmatpush2.bf16.msra.mxu0 0
      %738 = vmatprep.subr.bf16.mxu0 0
      %739 = vmatpush2.bf16.msra.mxu0 0
      %740 = vmatprep.mubr.bf16.mxu0 0
      %741 = vmatmul.mubr.bf16.gmra.mxu0 %v634
      %v742 = vpop.f32.mrf.mxu0
      %v743 = vadd.f32 %v694, %v742
      %v744 = vpop.f32.mrf.mxu0
      %v745 = vpop.f32.mrf.mxu0
      %v746 = vadd.f32 %v694, %v745
      %v747 = vpop.f32.mrf.mxu0
      %748 = vdwg.mxu0
      %v749 = vmax.f32 %v743, 0.0
      %v750 = vmax.f32 %v746, 0.0
      %v751 = vadd.f32 %v683, %v749
      %v752 = vadd.f32 %v684, %v750
      %753 = vst.msk [vmem:[#allocation3] sm:$0xff] %vm571, %v751
      %754 = vst.msk [vmem:[#allocation3 + $0x8] sm:$0xff] %vm571, %v752
      %v755 = vld [vmem:[#allocation4] sm:$0xff]
      %v756 = vld [vmem:[#allocation4 + $0x8] sm:$0xff]
      %v757 = vld [vmem:[%s9] sm:$0xf]
      %v758 = vld [vmem:[%s9 + $0x4] sm:$0xf]
      %v759 = vld [vmem:[%s9 + $0x8] sm:$0xf]
      %v760 = vld [vmem:[%s9 + $0xc] sm:$0xf]
      %v761 = vld [vmem:[%s10] sm:$0x1]
      %v763 = vlaneseq
      %v764 = vshrl.u32 %v763, 7
      %v765 = vsub.s32 0, %v764
      %v766 = vrot.slane %v761, %v765
      %v772 = vunpack.c.l.b16 %v757
      %v773 = vunpack.c.l.b16 %v758
      %v774 = vunpack.c.l.b16 %v759
      %v775 = vunpack.c.l.b16 %v760
      %v776 = vpack.c.b16 %v773, %v772
      %v777 = vpack.c.b16 %v775, %v774
      %780 = vmatprep.subr.bf16.mxu0 0
      %781 = vmatpush1.bf16.msra.mxu0 0
      %782 = vmatprep.subr.bf16.mxu0 0
      %783 = vmatpush1.bf16.msra.mxu0 0
      %784 = vmatprep.subr.bf16.mxu0 0
      %785 = vmatpush1.bf16.msra.mxu0 0
      %786 = vmatprep.subr.bf16.mxu0 0
      %787 = vmatpush1.bf16.msra.mxu0 0
      %788 = vmatprep.subr.bf16.mxu0 0
      %789 = vmatpush1.bf16.msra.mxu0 0
      %790 = vmatprep.subr.bf16.mxu0 0
      %791 = vmatpush1.bf16.msra.mxu0 0
      %792 = vmatprep.subr.bf16.mxu0 0
      %793 = vmatpush1.bf16.msra.mxu0 %v777
      %794 = vmatprep.subr.bf16.mxu0 0
      %795 = vmatpush1.bf16.msra.mxu0 %v776
      %796 = vmatprep.subr.bf16.mxu0 0
      %797 = vmatpush2.bf16.msra.mxu0 0
      %798 = vmatprep.subr.bf16.mxu0 0
      %799 = vmatpush2.bf16.msra.mxu0 0
      %800 = vmatprep.subr.bf16.mxu0 0
      %801 = vmatpush2.bf16.msra.mxu0 0
      %802 = vmatprep.subr.bf16.mxu0 0
      %803 = vmatpush2.bf16.msra.mxu0 0
      %804 = vmatprep.subr.bf16.mxu0 0
      %805 = vmatpush2.bf16.msra.mxu0 0
      %806 = vmatprep.subr.bf16.mxu0 0
      %807 = vmatpush2.bf16.msra.mxu0 0
      %808 = vmatprep.subr.bf16.mxu0 0
      %809 = vmatpush2.bf16.msra.mxu0 0
      %810 = vmatprep.subr.bf16.mxu0 0
      %811 = vmatpush2.bf16.msra.mxu0 0
      %812 = vmatprep.mubr.bf16.mxu0 0
      %813 = vmatmul.mubr.bf16.gmra.mxu0 %v634
      %v814 = vpop.f32.mrf.mxu0
      %v815 = vadd.f32 %v766, %v814
      %v816 = vpop.f32.mrf.mxu0
      %v817 = vpop.f32.mrf.mxu0
      %v818 = vadd.f32 %v766, %v817
      %v819 = vpop.f32.mrf.mxu0
      %820 = vdwg.mxu0
      %v821 = vmax.f32 %v815, 0.0
      %v822 = vmax.f32 %v818, 0.0
      %v823 = vadd.f32 %v755, %v821
      %v824 = vadd.f32 %v756, %v822
      %825 = vst.msk [vmem:[#allocation4] sm:$0xff] %vm571, %v823
      %826 = vst.msk [vmem:[#allocation4 + $0x8] sm:$0xff] %vm571, %v824
      %p827 = scmp.eq.s32.totalorder %s32, 1
      // Predicated region
      $region77: #{dca_transformer_forward.9} parent=71 // pred_check
        %p828 = pneg %p827
      $region78: #{dca_transformer_forward.9} parent=71 // pred_check_branch
        %830 = sbr.rel (%p828) target = $region80
      $region79: #{dca_transformer_forward.9} parent=71 // pred_region
        %v831 = vld [vmem:[#allocation5] sm:$0xff]
        %v832 = vld [vmem:[#allocation5 + $0x8] sm:$0xff]
        %v833 = vld [vmem:[#allocation2] sm:$0xff]
        %v834 = vld [vmem:[#allocation2 + $0x8] sm:$0xff]
        %v835 = vld [vmem:[%s3] sm:$0x1]
        %v837 = vlaneseq
        %v838 = vshrl.u32 %v837, 7
        %v839 = vsub.s32 0, %v838
        %v840 = vrot.slane %v835, %v839
        %v842 = vmul.f32 %v831, %v840
        %v843 = vmul.f32 %v832, %v840
        %v844 = vadd.f32 %v833, %v842
        %v845 = vadd.f32 %v834, %v843
        %v846 = vld [vmem:[%s4] sm:$0x1]
        %v847 = vmul.f32 %v846, 2.0
        %v849 = vlaneseq
        %v850 = vshrl.u32 %v849, 7
        %v851 = vsub.s32 0, %v850
        %v852 = vrot.slane %v847, %v851
        %v854 = vadd.f32 %v844, %v852
        %v855 = vadd.f32 %v845, %v852
        %v856 = vpack.c.bf16 %v855, %v854
        %v858 = vunpack.c.l.b16 %v856
        %v859 = vunpack.c.h.b16 %v856
        %v860 = vpack.c.b16 %v858, %v858
        %v861 = vpack.c.b16 %v859, %v859
        %vm864 = vcmask 257024
        %865 = vst.msk [vmem:[%s537] sm:$0xf] %vm864, %v860
        %866 = vst.msk [vmem:[%s537 + $0x4] sm:$0xf] %vm864, %v861
        %v867 = vld [vmem:[#allocation3] sm:$0xff]
        %v868 = vld [vmem:[#allocation3 + $0x8] sm:$0xff]
        %v869 = vld [vmem:[%s7] sm:$0x1]
        %v871 = vlaneseq
        %v872 = vshrl.u32 %v871, 7
        %v873 = vsub.s32 0, %v872
        %v874 = vrot.slane %v869, %v873
        %v876 = vmul.f32 %v831, %v874
        %v877 = vmul.f32 %v832, %v874
        %v878 = vadd.f32 %v867, %v876
        %v879 = vadd.f32 %v868, %v877
        %v880 = vld [vmem:[%s8] sm:$0x1]
        %v881 = vmul.f32 %v880, 2.0
        %v883 = vlaneseq
        %v884 = vshrl.u32 %v883, 7
        %v885 = vsub.s32 0, %v884
        %v886 = vrot.slane %v881, %v885
        %v888 = vadd.f32 %v878, %v886
        %v889 = vadd.f32 %v879, %v886
        %v890 = vpack.c.bf16 %v889, %v888
        %v892 = vunpack.c.l.b16 %v890
        %v893 = vunpack.c.h.b16 %v890
        %v894 = vpack.c.b16 %v892, %v892
        %v895 = vpack.c.b16 %v893, %v893
        %898 = vst.msk [vmem:[%s543] sm:$0xf] %vm864, %v894
        %899 = vst.msk [vmem:[%s543 + $0x4] sm:$0xf] %vm864, %v895
        %v900 = vld [vmem:[#allocation4] sm:$0xff]
        %v901 = vld [vmem:[#allocation4 + $0x8] sm:$0xff]
        %v902 = vld [vmem:[%s11] sm:$0x1]
        %v904 = vlaneseq
        %v905 = vshrl.u32 %v904, 7
        %v906 = vsub.s32 0, %v905
        %v907 = vrot.slane %v902, %v906
        %v909 = vmul.f32 %v831, %v907
        %v910 = vmul.f32 %v832, %v907
        %v911 = vadd.f32 %v900, %v909
        %v912 = vadd.f32 %v901, %v910
        %v913 = vld [vmem:[%s12] sm:$0x1]
        %v914 = vmul.f32 %v913, 2.0
        %v916 = vlaneseq
        %v917 = vshrl.u32 %v916, 7
        %v918 = vsub.s32 0, %v917
        %v919 = vrot.slane %v914, %v918
        %v921 = vadd.f32 %v911, %v919
        %v922 = vadd.f32 %v912, %v919
        %v923 = vpack.c.bf16 %v922, %v921
        %v925 = vunpack.c.l.b16 %v923
        %v926 = vunpack.c.h.b16 %v923
        %v927 = vpack.c.b16 %v925, %v925
        %v928 = vpack.c.b16 %v926, %v926
        %931 = vst.msk [vmem:[%s549] sm:$0xf] %vm864, %v927
        %932 = vst.msk [vmem:[%s549 + $0x4] sm:$0xf] %vm864, %v928
      $region80: #{dca_transformer_forward.9} parent=71 // pred_fallthru
        _
      %s933 = smul.u32 2, %s31
      %p934 = scmp.lt.s32.totalorder %s933, 1
      %s935 = scalar_select %p934, %s933, 1
      %s936 = smul.addr %s935, 4
      %s937 = scalar_lea.vmem %s13, %s936
      %s938 = smul.u32 2, %s31
      %p939 = scmp.lt.s32.totalorder %s938, 1
      %s940 = scalar_select %p939, %s938, 1
      %s941 = smul.addr %s940, 4
      %s942 = scalar_lea.vmem %s14, %s941
      %s943 = smul.u32 2, %s31
      %p944 = scmp.lt.s32.totalorder %s943, 1
      %s945 = scalar_select %p944, %s943, 1
      %s946 = smul.addr %s945, 4
      %s947 = scalar_lea.vmem %s15, %s946
      // Predicated region
      $region81: #{dca_transformer_forward.9} parent=71 // pred_check
        %p948 = pneg %p337
      $region82: #{dca_transformer_forward.9} parent=71 // pred_check_branch
        %950 = sbr.rel (%p948) target = $region84
      $region83: #{dca_transformer_forward.9} parent=71 // pred_region
        %s951 = smul.u32 2, %s31
      $region84: #{dca_transformer_forward.9} parent=71 // pred_fallthru
        _
      // Predicated region
      $region85: #{dca_transformer_forward.9} parent=71 // pred_check
        %p952 = pneg %p363
      $region86: #{dca_transformer_forward.9} parent=71 // pred_check_branch
        %954 = sbr.rel (%p952) target = $region88
      $region87: #{dca_transformer_forward.9} parent=71 // pred_region
        %s955 = smul.u32 2, %s31
      $region88: #{dca_transformer_forward.9} parent=71 // pred_fallthru
        _
      // Predicated region
      $region89: #{dca_transformer_forward.9} parent=71 // pred_check
        %p956 = pneg %p389
      $region90: #{dca_transformer_forward.9} parent=71 // pred_check_branch
        %958 = sbr.rel (%p956) target = $region92
      $region91: #{dca_transformer_forward.9} parent=71 // pred_region
        %s959 = smul.u32 2, %s31
      $region92: #{dca_transformer_forward.9} parent=71 // pred_fallthru
        _
      // Predicated region
      $region93: #{dca_transformer_forward.9} parent=71 // pred_check
        %p960 = pneg %p337
      $region94: #{dca_transformer_forward.9} parent=71 // pred_check_branch
        %962 = sbr.rel (%p960) target = $region96
      $region95: #{dca_transformer_forward.9} parent=71 // pred_region
        %s963 = smul.u32 2, %s31
        %p964 = scmp.lt.s32.totalorder %s963, 1
        %s965 = scalar_select %p964, %s963, 1
        %s966 = smul.addr %s965, 4
        %s967 = scalar_lea.vmem %s13, %s966
      $region96: #{dca_transformer_forward.9} parent=71 // pred_fallthru
        _
      // Predicated region
      $region97: #{dca_transformer_forward.9} parent=71 // pred_check
        %p968 = pneg %p363
      $region98: #{dca_transformer_forward.9} parent=71 // pred_check_branch
        %970 = sbr.rel (%p968) target = $region100
      $region99: #{dca_transformer_forward.9} parent=71 // pred_region
        %s971 = smul.u32 2, %s31
        %p972 = scmp.lt.s32.totalorder %s971, 1
        %s973 = scalar_select %p972, %s971, 1
        %s974 = smul.addr %s973, 4
        %s975 = scalar_lea.vmem %s14, %s974
      $region100: #{dca_transformer_forward.9} parent=71 // pred_fallthru
        _
      // Predicated region
      $region101: #{dca_transformer_forward.9} parent=71 // pred_check
        %p976 = pneg %p389
      $region102: #{dca_transformer_forward.9} parent=71 // pred_check_branch
        %978 = sbr.rel (%p976) target = $region104
      $region103: #{dca_transformer_forward.9} parent=71 // pred_region
        %s979 = smul.u32 2, %s31
        %p980 = scmp.lt.s32.totalorder %s979, 1
        %s981 = scalar_select %p980, %s979, 1
        %s982 = smul.addr %s981, 4
        %s983 = scalar_lea.vmem %s15, %s982
      $region104: #{dca_transformer_forward.9} parent=71 // pred_fallthru
        _
    $region72: #{dca_transformer_forward.9} parent=5 // pred_fallthru
      _
    %p984 = scmp.le.s32.totalorder 2, %s22
    // Predicated region
    $region105: #{dca_transformer_forward.9} parent=5 // pred_check
      %p985 = pneg %p984
    $region106: #{dca_transformer_forward.9} parent=5 // pred_check_branch
      %987 = sbr.rel (%p985) target = $region108
    $region107: #{dca_transformer_forward.9} parent=5 // pred_region
      %s988 = ssub.s32 %s22, 2
    $region108: #{dca_transformer_forward.9} parent=5 // pred_fallthru
      _
  $region6: #{dca_transformer_forward.9} parent=0 // loop_footer
    %s26 = sadd.s32 1, %s22
  $region7: #{dca_transformer_forward.9} parent=0 // loop_footer_branch
    %21 = sbr.rel target = $region3
  $region8: #{dca_transformer_forward.9} parent=0 // loop_exit
    _

// kernel: dca_transformer_forward.11
$region0: #{dca_transformer_forward.11}
  #allocation0 [shape = 'u32[]', space=smem, size = 0x4, offset = 0x4, fixed_abs, tag = 'smem constant byte address 0x4 - core index']
  #allocation1 [shape = 'u32[144,128]{1,0:T(1,128)}', space=vmem, size = 0x12000, scoped, tag = 'internal scratch']
  %s0 = inlined_call_operand.vmem [shape: f32[16,32], index: 0, kind: input, shape index: {}]
  %s1 = inlined_call_operand.vmem [shape: bf16[16,32], index: 1, kind: input, shape index: {}]
  %s2 = inlined_call_operand.vmem [shape: bf16[32,32], index: 2, kind: input, shape index: {}]
  %s3 = inlined_call_operand.vmem [shape: f32[1,32], index: 3, kind: input, shape index: {}]
  %s4 = inlined_call_operand.vmem [shape: f32[1,32], index: 4, kind: input, shape index: {}]
  %s5 = inlined_call_operand.vmem [shape: f32[1,32], index: 5, kind: input, shape index: {}]
  %s6 = inlined_call_operand.vmem [shape: bf16[32,128], index: 6, kind: input, shape index: {}]
  %s7 = inlined_call_operand.vmem [shape: f32[1,128], index: 7, kind: input, shape index: {}]
  %s8 = inlined_call_operand.vmem [shape: bf16[128,32], index: 8, kind: input, shape index: {}]
  %s9 = inlined_call_operand.vmem [shape: f32[1,32], index: 9, kind: input, shape index: {}]
  %s10 = inlined_call_operand.vmem [shape: f32[1,32], index: 10, kind: input, shape index: {}]
  %s11 = inlined_call_operand.vmem [shape: f32[1,32], index: 11, kind: input, shape index: {}]
  %s12 = inlined_call_operand.hbm [shape: f32[16,32], index: 12, kind: output, shape index: {}]
  %s13 = sld [smem:[#allocation0]]
  $region58: #{dca_transformer_forward.11} parent=0
    _
  %s15 = ssub.s32 1, %s13
  %s16 = scalar_select 0, %s15, %s13
  $region1: #{dca_transformer_forward.11} parent=0
    #allocation2 [shape = 'u8[8192]{0}', space=vmem, size = 0x2000, scoped, tag = 'output window, operand 0, single buffered']
    #allocation3 [shape = 's32[1]{0}', space=sflag, size = 0x4, scoped, tag = 'scoped memory for dca_transformer_forward.11']
    %17 = vsyncpa [#allocation3], 0
    // Predicated region
    $region2: #{dca_transformer_forward.11} parent=1 // pred_check
      _
    $region3: #{dca_transformer_forward.11} parent=1 // pred_check_branch
      %19 = sbr.rel (0) target = $region5
    $region4: #{dca_transformer_forward.11} parent=1 // pred_region
      _
    $region5: #{dca_transformer_forward.11} parent=1 // pred_fallthru
      _
    // Predicated region
    $region6: #{dca_transformer_forward.11} parent=1 // pred_check
      _
    $region7: #{dca_transformer_forward.11} parent=1 // pred_check_branch
      %21 = sbr.rel (0) target = $region9
    $region8: #{dca_transformer_forward.11} parent=1 // pred_region
      _
    $region9: #{dca_transformer_forward.11} parent=1 // pred_fallthru
      _
    // Predicated region
    $region10: #{dca_transformer_forward.11} parent=1 // pred_check
      _
    $region11: #{dca_transformer_forward.11} parent=1 // pred_check_branch
      %23 = sbr.rel (0) target = $region13
    $region12: #{dca_transformer_forward.11} parent=1 // pred_region
      _
    $region13: #{dca_transformer_forward.11} parent=1 // pred_fallthru
      _
    // Predicated region
    $region14: #{dca_transformer_forward.11} parent=1 // pred_check
      _
    $region15: #{dca_transformer_forward.11} parent=1 // pred_check_branch
      %25 = sbr.rel (0) target = $region17
    $region16: #{dca_transformer_forward.11} parent=1 // pred_region
      _
    $region17: #{dca_transformer_forward.11} parent=1 // pred_fallthru
      _
    // Predicated region
    $region18: #{dca_transformer_forward.11} parent=1 // pred_check
      _
    $region19: #{dca_transformer_forward.11} parent=1 // pred_check_branch
      %27 = sbr.rel (0) target = $region21
    $region20: #{dca_transformer_forward.11} parent=1 // pred_region
      _
    $region21: #{dca_transformer_forward.11} parent=1 // pred_fallthru
      _
    // Predicated region
    $region22: #{dca_transformer_forward.11} parent=1 // pred_check
      _
    $region23: #{dca_transformer_forward.11} parent=1 // pred_check_branch
      %29 = sbr.rel (0) target = $region25
    $region24: #{dca_transformer_forward.11} parent=1 // pred_region
      _
    $region25: #{dca_transformer_forward.11} parent=1 // pred_fallthru
      _
    // Predicated region
    $region26: #{dca_transformer_forward.11} parent=1 // pred_check
      _
    $region27: #{dca_transformer_forward.11} parent=1 // pred_check_branch
      %31 = sbr.rel (0) target = $region29
    $region28: #{dca_transformer_forward.11} parent=1 // pred_region
      _
    $region29: #{dca_transformer_forward.11} parent=1 // pred_fallthru
      _
    // Predicated region
    $region30: #{dca_transformer_forward.11} parent=1 // pred_check
      _
    $region31: #{dca_transformer_forward.11} parent=1 // pred_check_branch
      %33 = sbr.rel (0) target = $region33
    $region32: #{dca_transformer_forward.11} parent=1 // pred_region
      _
    $region33: #{dca_transformer_forward.11} parent=1 // pred_fallthru
      _
    // Predicated region
    $region34: #{dca_transformer_forward.11} parent=1 // pred_check
      _
    $region35: #{dca_transformer_forward.11} parent=1 // pred_check_branch
      %35 = sbr.rel (0) target = $region37
    $region36: #{dca_transformer_forward.11} parent=1 // pred_region
      _
    $region37: #{dca_transformer_forward.11} parent=1 // pred_fallthru
      _
    // Predicated region
    $region38: #{dca_transformer_forward.11} parent=1 // pred_check
      _
    $region39: #{dca_transformer_forward.11} parent=1 // pred_check_branch
      %37 = sbr.rel (0) target = $region41
    $region40: #{dca_transformer_forward.11} parent=1 // pred_region
      _
    $region41: #{dca_transformer_forward.11} parent=1 // pred_fallthru
      _
    // Predicated region
    $region42: #{dca_transformer_forward.11} parent=1 // pred_check
      _
    $region43: #{dca_transformer_forward.11} parent=1 // pred_check_branch
      %39 = sbr.rel (0) target = $region45
    $region44: #{dca_transformer_forward.11} parent=1 // pred_region
      _
    $region45: #{dca_transformer_forward.11} parent=1 // pred_fallthru
      _
    // Predicated region
    $region46: #{dca_transformer_forward.11} parent=1 // pred_check
      _
    $region47: #{dca_transformer_forward.11} parent=1 // pred_check_branch
      %41 = sbr.rel (0) target = $region49
    $region48: #{dca_transformer_forward.11} parent=1 // pred_region
      _
    $region49: #{dca_transformer_forward.11} parent=1 // pred_fallthru
      _
    %v43 = vld [vmem:[%s0] sm:$0xff]
    %v44 = vld [vmem:[%s0 + $0x8] sm:$0xff]
    %v45 = vld [vmem:[%s1] sm:$0xf]
    %v46 = vld [vmem:[%s1 + $0x4] sm:$0xf]
    %v47 = vld [vmem:[%s2] sm:$0xf]
    %v48 = vld [vmem:[%s2 + $0x4] sm:$0xf]
    %v49 = vld [vmem:[%s2 + $0x8] sm:$0xf]
    %v50 = vld [vmem:[%s2 + $0xc] sm:$0xf]
    %v51 = vld [vmem:[%s3] sm:$0x1]
    %v53 = vlaneseq
    %v54 = vshrl.u32 %v53, 7
    %v55 = vsub.s32 0, %v54
    %v56 = vrot.slane %v51, %v55
    %v60 = vunpack.c.l.b16 %v45
    %v61 = vunpack.c.l.b16 %v46
    %v62 = vpack.c.b16 %v61, %v60
    %v67 = vunpack.c.l.b16 %v47
    %v68 = vunpack.c.l.b16 %v48
    %v69 = vunpack.c.l.b16 %v49
    %v70 = vunpack.c.l.b16 %v50
    %v71 = vpack.c.b16 %v68, %v67
    %v72 = vpack.c.b16 %v70, %v69
    %vm75 = vcmask 261120
    %v77 = vsel %vm75, %v62, 0
    %79 = vmatprep.subr.bf16.mxu0 0
    %80 = vmatpush1.bf16.msra.mxu0 0
    %81 = vmatprep.subr.bf16.mxu0 0
    %82 = vmatpush1.bf16.msra.mxu0 0
    %83 = vmatprep.subr.bf16.mxu0 0
    %84 = vmatpush1.bf16.msra.mxu0 0
    %85 = vmatprep.subr.bf16.mxu0 0
    %86 = vmatpush1.bf16.msra.mxu0 0
    %87 = vmatprep.subr.bf16.mxu0 0
    %88 = vmatpush1.bf16.msra.mxu0 0
    %89 = vmatprep.subr.bf16.mxu0 0
    %90 = vmatpush1.bf16.msra.mxu0 0
    %91 = vmatprep.subr.bf16.mxu0 0
    %92 = vmatpush1.bf16.msra.mxu0 %v72
    %93 = vmatprep.subr.bf16.mxu0 0
    %94 = vmatpush1.bf16.msra.mxu0 %v71
    %95 = vmatprep.subr.bf16.mxu0 0
    %96 = vmatpush2.bf16.msra.mxu0 0
    %97 = vmatprep.subr.bf16.mxu0 0
    %98 = vmatpush2.bf16.msra.mxu0 0
    %99 = vmatprep.subr.bf16.mxu0 0
    %100 = vmatpush2.bf16.msra.mxu0 0
    %101 = vmatprep.subr.bf16.mxu0 0
    %102 = vmatpush2.bf16.msra.mxu0 0
    %103 = vmatprep.subr.bf16.mxu0 0
    %104 = vmatpush2.bf16.msra.mxu0 0
    %105 = vmatprep.subr.bf16.mxu0 0
    %106 = vmatpush2.bf16.msra.mxu0 0
    %107 = vmatprep.subr.bf16.mxu0 0
    %108 = vmatpush2.bf16.msra.mxu0 0
    %109 = vmatprep.subr.bf16.mxu0 0
    %110 = vmatpush2.bf16.msra.mxu0 0
    %111 = vmatprep.mubr.bf16.mxu0 0
    %112 = vmatmul.mubr.bf16.gmra.mxu0 %v77
    %v113 = vpop.f32.mrf.mxu0
    %v114 = vadd.f32 %v56, %v113
    %v115 = vpop.f32.mrf.mxu0
    %v116 = vpop.f32.mrf.mxu0
    %v117 = vadd.f32 %v56, %v116
    %v118 = vpop.f32.mrf.mxu0
    %119 = vdwg.mxu0
    %v120 = vsel %vm75, %v114, 0.0
    %121 = vadd.xlane.f32.xlu0 %v120
    %v122 = vpop.xlane.xlu0 %121
    %v123 = vsel %vm75, %v117, 0.0
    %124 = vadd.xlane.f32.xlu0 %v123
    %v125 = vpop.xlane.xlu0 %124
    %v126 = vrcp.pop 32.0
    %v127 = vmul.f32 %v122, %v126
    %v128 = vmul.f32 %v125, %v126
    %v129 = vsub.f32 %v114, %v127
    %v130 = vsub.f32 %v117, %v128
    %v131 = vmul.f32 %v129, %v129
    %v132 = vmul.f32 %v130, %v130
    %v133 = vsel %vm75, %v131, 0.0
    %134 = vadd.xlane.f32.xlu0 %v133
    %v135 = vpop.xlane.xlu0 %134
    %v136 = vsel %vm75, %v132, 0.0
    %137 = vadd.xlane.f32.xlu0 %v136
    %v138 = vpop.xlane.xlu0 %137
    %v139 = vmul.f32 %v135, %v126
    %v140 = vmul.f32 %v138, %v126
    %v141 = vadd.f32 %v139, 1e-05
    %v142 = vadd.f32 %v140, 1e-05
    %v143 = vrsqrt.pop %v141
    %v144 = vrsqrt.pop %v142
    %v145 = vmul.f32 %v129, %v143
    %v146 = vmul.f32 %v130, %v144
    %v147 = vld [vmem:[%s4] sm:$0x1]
    %v149 = vlaneseq
    %v150 = vshrl.u32 %v149, 7
    %v151 = vsub.s32 0, %v150
    %v152 = vrot.slane %v147, %v151
    %v154 = vmul.f32 %v145, %v152
    %v155 = vmul.f32 %v146, %v152
    %v156 = vadd.f32 %v43, %v154
    %v157 = vadd.f32 %v44, %v155
    %v158 = vld [vmem:[%s5] sm:$0x1]
    %v160 = vlaneseq
    %v161 = vshrl.u32 %v160, 7
    %v162 = vsub.s32 0, %v161
    %v163 = vrot.slane %v158, %v162
    %v165 = vadd.f32 %v156, %v163
    %v166 = vadd.f32 %v157, %v163
    %v167 = vpack.c.bf16 %v166, %v165
    %v168 = vld [vmem:[%s6] sm:$0xf]
    %v169 = vld [vmem:[%s6 + $0x4] sm:$0xf]
    %v170 = vld [vmem:[%s6 + $0x8] sm:$0xf]
    %v171 = vld [vmem:[%s6 + $0xc] sm:$0xf]
    %v172 = vld [vmem:[%s7] sm:$0x1]
    %v174 = vlaneseq
    %v175 = vshrl.u32 %v174, 7
    %v176 = vsub.s32 0, %v175
    %v177 = vrot.slane %v172, %v176
    %v183 = vunpack.c.l.b16 %v168
    %v184 = vunpack.c.l.b16 %v169
    %v185 = vunpack.c.l.b16 %v170
    %v186 = vunpack.c.l.b16 %v171
    %v187 = vpack.c.b16 %v184, %v183
    %v188 = vpack.c.b16 %v186, %v185
    %v192 = vsel %vm75, %v167, 0
    %194 = vmatprep.subr.bf16.mxu0 0
    %195 = vmatpush1.bf16.msra.mxu0 0
    %196 = vmatprep.subr.bf16.mxu0 0
    %197 = vmatpush1.bf16.msra.mxu0 0
    %198 = vmatprep.subr.bf16.mxu0 0
    %199 = vmatpush1.bf16.msra.mxu0 0
    %200 = vmatprep.subr.bf16.mxu0 0
    %201 = vmatpush1.bf16.msra.mxu0 0
    %202 = vmatprep.subr.bf16.mxu0 0
    %203 = vmatpush1.bf16.msra.mxu0 0
    %204 = vmatprep.subr.bf16.mxu0 0
    %205 = vmatpush1.bf16.msra.mxu0 0
    %206 = vmatprep.subr.bf16.mxu0 0
    %207 = vmatpush1.bf16.msra.mxu0 %v188
    %208 = vmatprep.subr.bf16.mxu0 0
    %209 = vmatpush1.bf16.msra.mxu0 %v187
    %210 = vmatprep.subr.bf16.mxu0 0
    %211 = vmatpush2.bf16.msra.mxu0 0
    %212 = vmatprep.subr.bf16.mxu0 0
    %213 = vmatpush2.bf16.msra.mxu0 0
    %214 = vmatprep.subr.bf16.mxu0 0
    %215 = vmatpush2.bf16.msra.mxu0 0
    %216 = vmatprep.subr.bf16.mxu0 0
    %217 = vmatpush2.bf16.msra.mxu0 0
    %218 = vmatprep.subr.bf16.mxu0 0
    %219 = vmatpush2.bf16.msra.mxu0 0
    %220 = vmatprep.subr.bf16.mxu0 0
    %221 = vmatpush2.bf16.msra.mxu0 0
    %222 = vmatprep.subr.bf16.mxu0 0
    %223 = vmatpush2.bf16.msra.mxu0 0
    %224 = vmatprep.subr.bf16.mxu0 0
    %225 = vmatpush2.bf16.msra.mxu0 0
    %226 = vmatprep.mubr.bf16.mxu0 0
    %227 = vmatmul.mubr.bf16.gmra.mxu0 %v192
    %v228 = vpop.f32.mrf.mxu0
    %v229 = vadd.f32 %v177, %v228
    %v230 = vpop.f32.mrf.mxu0
    %v231 = vpop.f32.mrf.mxu0
    %v232 = vadd.f32 %v177, %v231
    %v233 = vpop.f32.mrf.mxu0
    %234 = vdwg.mxu0
    %v235 = vmul.f32 %v229, 0.5
    %v236 = vmul.f32 %v232, 0.5
    %v237 = vmul.f32 %v229, 0.70710677
    %v238 = vmul.f32 %v232, 0.70710677
    %v239 = verf.f32.pop %v237
    %v240 = verf.f32.pop %v238
    %v241 = vadd.f32 %v239, 1.0
    %v242 = vadd.f32 %v240, 1.0
    %v243 = vmul.f32 %v235, %v241
    %v244 = vmul.f32 %v236, %v242
    %v245 = vpack.c.bf16 %v244, %v243
    %v246 = vld [vmem:[%s8] sm:$0xf]
    %v247 = vld [vmem:[%s8 + $0x4] sm:$0xf]
    %v248 = vld [vmem:[%s8 + $0x8] sm:$0xf]
    %v249 = vld [vmem:[%s8 + $0xc] sm:$0xf]
    %v250 = vld [vmem:[%s8 + $0x10] sm:$0xf]
    %v251 = vld [vmem:[%s8 + $0x14] sm:$0xf]
    %v252 = vld [vmem:[%s8 + $0x18] sm:$0xf]
    %v253 = vld [vmem:[%s8 + $0x1c] sm:$0xf]
    %v254 = vld [vmem:[%s8 + $0x20] sm:$0xf]
    %v255 = vld [vmem:[%s8 + $0x24] sm:$0xf]
    %v256 = vld [vmem:[%s8 + $0x28] sm:$0xf]
    %v257 = vld [vmem:[%s8 + $0x2c] sm:$0xf]
    %v258 = vld [vmem:[%s8 + $0x30] sm:$0xf]
    %v259 = vld [vmem:[%s8 + $0x34] sm:$0xf]
    %v260 = vld [vmem:[%s8 + $0x38] sm:$0xf]
    %v261 = vld [vmem:[%s8 + $0x3c] sm:$0xf]
    %v262 = vld [vmem:[%s9] sm:$0x1]
    %v264 = vlaneseq
    %v265 = vshrl.u32 %v264, 7
    %v266 = vsub.s32 0, %v265
    %v267 = vrot.slane %v262, %v266
    %v285 = vunpack.c.l.b16 %v246
    %v286 = vunpack.c.l.b16 %v247
    %v287 = vunpack.c.l.b16 %v248
    %v288 = vunpack.c.l.b16 %v249
    %v289 = vunpack.c.l.b16 %v250
    %v290 = vunpack.c.l.b16 %v251
    %v291 = vunpack.c.l.b16 %v252
    %v292 = vunpack.c.l.b16 %v253
    %v293 = vunpack.c.l.b16 %v254
    %v294 = vunpack.c.l.b16 %v255
    %v295 = vunpack.c.l.b16 %v256
    %v296 = vunpack.c.l.b16 %v257
    %v297 = vunpack.c.l.b16 %v258
    %v298 = vunpack.c.l.b16 %v259
    %v299 = vunpack.c.l.b16 %v260
    %v300 = vunpack.c.l.b16 %v261
    %v301 = vpack.c.b16 %v286, %v285
    %v302 = vpack.c.b16 %v288, %v287
    %v303 = vpack.c.b16 %v290, %v289
    %v304 = vpack.c.b16 %v292, %v291
    %v305 = vpack.c.b16 %v294, %v293
    %v306 = vpack.c.b16 %v296, %v295
    %v307 = vpack.c.b16 %v298, %v297
    %v308 = vpack.c.b16 %v300, %v299
    %317 = vmatprep.subr.bf16.mxu0 0
    %318 = vmatpush1.bf16.msra.mxu0 %v308
    %319 = vmatprep.subr.bf16.mxu0 0
    %320 = vmatpush1.bf16.msra.mxu0 %v307
    %321 = vmatprep.subr.bf16.mxu0 0
    %322 = vmatpush1.bf16.msra.mxu0 %v306
    %323 = vmatprep.subr.bf16.mxu0 0
    %324 = vmatpush1.bf16.msra.mxu0 %v305
    %325 = vmatprep.subr.bf16.mxu0 0
    %326 = vmatpush1.bf16.msra.mxu0 %v304
    %327 = vmatprep.subr.bf16.mxu0 0
    %328 = vmatpush1.bf16.msra.mxu0 %v303
    %329 = vmatprep.subr.bf16.mxu0 0
    %330 = vmatpush1.bf16.msra.mxu0 %v302
    %331 = vmatprep.subr.bf16.mxu0 0
    %332 = vmatpush1.bf16.msra.mxu0 %v301
    %333 = vmatprep.subr.bf16.mxu0 0
    %334 = vmatpush2.bf16.msra.mxu0 0
    %335 = vmatprep.subr.bf16.mxu0 0
    %336 = vmatpush2.bf16.msra.mxu0 0
    %337 = vmatprep.subr.bf16.mxu0 0
    %338 = vmatpush2.bf16.msra.mxu0 0
    %339 = vmatprep.subr.bf16.mxu0 0
    %340 = vmatpush2.bf16.msra.mxu0 0
    %341 = vmatprep.subr.bf16.mxu0 0
    %342 = vmatpush2.bf16.msra.mxu0 0
    %343 = vmatprep.subr.bf16.mxu0 0
    %344 = vmatpush2.bf16.msra.mxu0 0
    %345 = vmatprep.subr.bf16.mxu0 0
    %346 = vmatpush2.bf16.msra.mxu0 0
    %347 = vmatprep.subr.bf16.mxu0 0
    %348 = vmatpush2.bf16.msra.mxu0 0
    %349 = vmatprep.mubr.bf16.mxu0 0
    %350 = vmatmul.mubr.bf16.gmra.mxu0 %v245
    %v351 = vpop.f32.mrf.mxu0
    %v352 = vadd.f32 %v267, %v351
    %v353 = vpop.f32.mrf.mxu0
    %v354 = vpop.f32.mrf.mxu0
    %v355 = vadd.f32 %v267, %v354
    %v356 = vpop.f32.mrf.mxu0
    %357 = vdwg.mxu0
    %v358 = vsel %vm75, %v352, 0.0
    %359 = vadd.xlane.f32.xlu0 %v358
    %v360 = vpop.xlane.xlu0 %359
    %v361 = vsel %vm75, %v355, 0.0
    %362 = vadd.xlane.f32.xlu0 %v361
    %v363 = vpop.xlane.xlu0 %362
    %v364 = vmul.f32 %v360, %v126
    %v365 = vmul.f32 %v363, %v126
    %v366 = vsub.f32 %v352, %v364
    %v367 = vsub.f32 %v355, %v365
    %v368 = vmul.f32 %v366, %v366
    %v369 = vmul.f32 %v367, %v367
    %v370 = vsel %vm75, %v368, 0.0
    %371 = vadd.xlane.f32.xlu0 %v370
    %v372 = vpop.xlane.xlu0 %371
    %v373 = vsel %vm75, %v369, 0.0
    %374 = vadd.xlane.f32.xlu0 %v373
    %v375 = vpop.xlane.xlu0 %374
    %v376 = vmul.f32 %v372, %v126
    %v377 = vmul.f32 %v375, %v126
    %v378 = vadd.f32 %v376, 1e-05
    %v379 = vadd.f32 %v377, 1e-05
    %v380 = vrsqrt.pop %v378
    %v381 = vrsqrt.pop %v379
    %v382 = vmul.f32 %v366, %v380
    %v383 = vmul.f32 %v367, %v381
    %v384 = vld [vmem:[%s10] sm:$0x1]
    %v386 = vlaneseq
    %v387 = vshrl.u32 %v386, 7
    %v388 = vsub.s32 0, %v387
    %v389 = vrot.slane %v384, %v388
    %v391 = vmul.f32 %v382, %v389
    %v392 = vmul.f32 %v383, %v389
    %v393 = vadd.f32 %v165, %v391
    %v394 = vadd.f32 %v166, %v392
    %v395 = vld [vmem:[%s11] sm:$0x1]
    %v397 = vlaneseq
    %v398 = vshrl.u32 %v397, 7
    %v399 = vsub.s32 0, %v398
    %v400 = vrot.slane %v395, %v399
    %v402 = vadd.f32 %v393, %v400
    %v403 = vadd.f32 %v394, %v400
    %404 = vst.msk [vmem:[#allocation2] sm:$0xff] %vm75, %v402
    %405 = vst.msk [vmem:[#allocation2 + $0x8] sm:$0xff] %vm75, %v403
    // Predicated region
    $region50: #{dca_transformer_forward.11} parent=1 // pred_check
      _
    $region51: #{dca_transformer_forward.11} parent=1 // pred_check_branch
      %407 = sbr.rel (0) target = $region53
    $region52: #{dca_transformer_forward.11} parent=1 // pred_region
      %s409 = ssub.s32 256, 256
      %410 = vsyncadd [#allocation3], %s409
      %s411 = sshll.u32 [#allocation2], 4
      %s412 = int_to_ptr.vmem [resolvable:$true] %s411
      %417 = dma.vmem_to_hbm [thread:$0]  %s412, 256, %s12, [#allocation3], 128, 128, 8
    $region53: #{dca_transformer_forward.11} parent=1 // pred_fallthru
      _
    // Predicated region
    $region54: #{dca_transformer_forward.11} parent=1 // pred_check
      _
    $region55: #{dca_transformer_forward.11} parent=1 // pred_check_branch
      %419 = sbr.rel (0) target = $region57
    $region56: #{dca_transformer_forward.11} parent=1 // pred_region
      %420 = dma.done [#allocation3], 256
    $region57: #{dca_transformer_forward.11} parent=1 // pred_fallthru
      _
    %421 = vsyncpa [#allocation3], 1

</llo_original>
